<compile_context>
chip_gen: v7x
topology: tpu7x:2x2x1
jax: 0.10.0
libtpu: 0.0.40
codegen_flags: <defaults>
</compile_context>

<pallas_src>
import math
import functools

import jax
import jax.numpy as jnp
from jax.experimental import pallas as pl
from jax.experimental.pallas import tpu as pltpu


# ----------------------------------------------------------------------------
# helpers
# ----------------------------------------------------------------------------
def _layernorm(x, g, b, eps=1e-5):
    mu = jnp.mean(x, axis=-1, keepdims=True)
    var = jnp.mean((x - mu) ** 2, axis=-1, keepdims=True)
    return (x - mu) * jax.lax.rsqrt(var + eps) * g + b


def _tile_padded_bytes(shape, dtype):
    """(8,128)-tile padded VMEM footprint of one block."""
    item = jnp.dtype(dtype).itemsize
    sublane = {4: 8, 2: 16, 1: 32}.get(item, 8)
    dims = [int(d) for d in shape]
    if len(dims) == 1:
        dims = [1] + dims
    lead = 1
    for d in dims[:-2]:
        lead *= d
    rows = -(-dims[-2] // sublane) * sublane
    cols = -(-dims[-1] // 128) * 128
    return lead * rows * cols * item


# ----------------------------------------------------------------------------
# fused kernel body — one (batch block, layer) grid step
# ----------------------------------------------------------------------------
def _encoder_kernel(
    src_ref, wproj_ref, bproj_ref,
    wq_ref, bq_ref, wk_ref, bk_ref, wv_ref, bv_ref,
    wo_ref, bo_ref,
    ln1g_ref, ln1b_ref, ln2g_ref, ln2b_ref,
    w1_ref, b1_ref, w2_ref, b2_ref,
    out_ref,
    x_sc,
    *, nhead, mxu_dtype,
):
    l = pl.program_id(1)
    last = pl.num_programs(1) - 1

    # Input projection (StandardScaler + sqrt(d_model) pre-folded): only on the
    # first layer-step of each batch block.
    @pl.when(l == 0)
    def _():
        src = src_ref[0].astype(mxu_dtype)                            # (S, F)
        x_sc[...] = (jnp.dot(src, wproj_ref[...],
                             preferred_element_type=jnp.float32)
                     + bproj_ref[...])

    x = x_sc[...]                                                     # (S, D) f32
    xm = x.astype(mxu_dtype)

    # ---- multi-head self-attention ------------------------------------------
    # Per-head weight stacks (split in the wrapper): matmuls emit (S, hd)
    # directly, no lane slicing of activations.  1/sqrt(hd) folded into W_q/b_q.
    ctx_heads = []
    for h in range(nhead):                       # static unroll (nhead small)
        qh = jnp.dot(xm, wq_ref[0, h],
                     preferred_element_type=jnp.float32) + bq_ref[0, h]
        kh = jnp.dot(xm, wk_ref[0, h],
                     preferred_element_type=jnp.float32) + bk_ref[0, h]
        vh = jnp.dot(xm, wv_ref[0, h],
                     preferred_element_type=jnp.float32) + bv_ref[0, h]
        # scores (S, S): contract last dims (q @ k^T) on the MXU
        s = jax.lax.dot_general(
            qh.astype(mxu_dtype), kh.astype(mxu_dtype),
            (((1,), (1,)), ((), ())), preferred_element_type=jnp.float32)
        s = s - jnp.max(s, axis=-1, keepdims=True)
        p = jnp.exp(s)                                                # f32 on EUP
        p = p * pl.reciprocal(jnp.sum(p, axis=-1, keepdims=True), approx=True)
        ctx_heads.append(
            jnp.dot(p.astype(mxu_dtype), vh.astype(mxu_dtype),
                    preferred_element_type=jnp.float32))              # (S, hd)

    # Head merge: one lane-contiguous concat, then ONE full-K output projection.
    ctx = jnp.concatenate(ctx_heads, axis=-1)                         # (S, D)
    attn = (jnp.dot(ctx.astype(mxu_dtype), wo_ref[0],
                    preferred_element_type=jnp.float32) + bo_ref[0])

    # residual + LayerNorm1 (post-norm == nn.TransformerEncoderLayer default)
    y = _layernorm(x + attn, ln1g_ref[0], ln1b_ref[0])

    # ---- feed-forward --------------------------------------------------------
    h1 = jnp.dot(y.astype(mxu_dtype), w1_ref[0],
                 preferred_element_type=jnp.float32) + b1_ref[0]
    h1 = jnp.maximum(h1, 0.0)                                         # ReLU, f32
    h2 = jnp.dot(h1.astype(mxu_dtype), w2_ref[0],
                 preferred_element_type=jnp.float32) + b2_ref[0]

    # residual + LayerNorm2; carry to next layer-step via VMEM scratch
    x_new = _layernorm(y + h2, ln2g_ref[0], ln2b_ref[0])
    x_sc[...] = x_new

    @pl.when(l == last)
    def _():
        out_ref[0] = x_new


# ----------------------------------------------------------------------------
# wrapper: parameter folding + stacking + single pallas_call with grid (B, L)
# ----------------------------------------------------------------------------
def context_encoder_forward(src, scaler_mean, scaler_scale, proj, layers,
                            nhead, d_model, mxu_dtype=jnp.bfloat16):
    B, S, F = src.shape
    assert d_model % nhead == 0, "d_model must be divisible by nhead"
    L = len(layers)
    hd = d_model // nhead
    ff = layers[0]["w1_t"].shape[1]
    sqrt_d = math.sqrt(d_model)
    inv_sqrt_hd = 1.0 / math.sqrt(hd)

    # --- fold StandardScaler and sqrt(d_model) into the input projection -----
    #   ((x - mean)/scale) @ W + b  ==  x @ (W / scale^T) + (b - (mean/scale) @ W)
    scale = jnp.maximum(scaler_scale, 1e-6)            # guard near-zero scales
    w_eff = ((proj["w_t"] / scale.reshape(F, 1)) * sqrt_d).astype(mxu_dtype)
    b_eff = ((proj["b"] - (scaler_mean / scale) @ proj["w_t"]) * sqrt_d
             ).astype(jnp.float32)

    # --- split W_qkv into per-head Q/K/V stacks (free wrapper-side preprocessing)
    def split_w(w_full):        # (D, D) -> (nhead, D, hd)
        return jnp.stack(
            [w_full[:, h * hd:(h + 1) * hd] for h in range(nhead)], 0)

    def split_b(b_full):        # (1, D) -> (nhead, 1, hd)
        return jnp.stack(
            [b_full[:, h * hd:(h + 1) * hd] for h in range(nhead)], 0)

    wq, bq, wk, bk, wv, bv = [], [], [], [], [], []
    for lp in layers:
        wqkv, bqkv = lp["wqkv_t"], lp["bqkv"]
        wq.append(split_w(wqkv[:, 0 * d_model:1 * d_model]) * inv_sqrt_hd)
        bq.append(split_b(bqkv[:, 0 * d_model:1 * d_model]) * inv_sqrt_hd)
        wk.append(split_w(wqkv[:, 1 * d_model:2 * d_model]))
        bk.append(split_b(bqkv[:, 1 * d_model:2 * d_model]))
        wv.append(split_w(wqkv[:, 2 * d_model:3 * d_model]))
        bv.append(split_b(bqkv[:, 2 * d_model:3 * d_model]))

    stackf = lambda xs: jnp.stack(xs, 0).astype(jnp.float32)
    stackm = lambda xs: jnp.stack(xs, 0).astype(mxu_dtype)
    name_m = lambda n: jnp.stack([lp[n] for lp in layers], 0).astype(mxu_dtype)
    name_f = lambda n: jnp.stack([lp[n] for lp in layers], 0).astype(jnp.float32)

    wq_s, wk_s, wv_s = stackm(wq), stackm(wk), stackm(wv)     # (L, H, D, hd) bf16
    bq_s, bk_s, bv_s = stackf(bq), stackf(bk), stackf(bv)     # (L, H, 1, hd) f32
    wo_s, bo_s = name_m("wo_t"), name_f("bo")                 # (L, D, D) / (L,1,D)
    ln1g, ln1b = name_f("ln1_g"), name_f("ln1_b")
    ln2g, ln2b = name_f("ln2_g"), name_f("ln2_b")
    w1_s, b1_s = name_m("w1_t"), name_f("b1")                 # (L, D, FF)
    w2_s, b2_s = name_m("w2_t"), name_f("b2")                 # (L, FF, D)

    # --- BlockSpecs: batch-indexed src/out, layer-indexed weight streams ------
    wmap4 = lambda b, l: (l, 0, 0, 0)
    wmap3 = lambda b, l: (l, 0, 0)
    in_specs = [
        pl.BlockSpec((1, S, F), lambda b, l: (b, 0, 0)),              # src
        pl.BlockSpec((F, d_model), lambda b, l: (0, 0)),              # w_eff
        pl.BlockSpec((1, d_model), lambda b, l: (0, 0)),              # b_eff
        pl.BlockSpec((1, nhead, d_model, hd), wmap4),                 # wq
        pl.BlockSpec((1, nhead, 1, hd), wmap4),                       # bq
        pl.BlockSpec((1, nhead, d_model, hd), wmap4),                 # wk
        pl.BlockSpec((1, nhead, 1, hd), wmap4),                       # bk
        pl.BlockSpec((1, nhead, d_model, hd), wmap4),                 # wv
        pl.BlockSpec((1, nhead, 1, hd), wmap4),                       # bv
        pl.BlockSpec((1, d_model, d_model), wmap3),                   # wo
        pl.BlockSpec((1, 1, d_model), wmap3),                         # bo
        pl.BlockSpec((1, 1, d_model), wmap3),                         # ln1g
        pl.BlockSpec((1, 1, d_model), wmap3),                         # ln1b
        pl.BlockSpec((1, 1, d_model), wmap3),                         # ln2g
        pl.BlockSpec((1, 1, d_model), wmap3),                         # ln2b
        pl.BlockSpec((1, d_model, ff), wmap3),                        # w1
        pl.BlockSpec((1, 1, ff), wmap3),                              # b1
        pl.BlockSpec((1, ff, d_model), wmap3),                        # w2
        pl.BlockSpec((1, 1, d_model), wmap3),                         # b2
    ]
    # D=32 output -> masked stores (negligible at this size); at scale keep
    # d_model a multiple of 128 so the output stays lane-dense.
    out_spec = pl.BlockSpec((1, S, d_model), lambda b, l: (b, 0, 0))

    # --- VMEM budget: double-buffered padded blocks + activation scratch ------
    blocks = [
        ((1, S, F), jnp.float32),
        ((F, d_model), mxu_dtype), ((1, d_model), jnp.float32),
        ((1, nhead, d_model, hd), mxu_dtype), ((1, nhead, 1, hd), jnp.float32),
        ((1, nhead, d_model, hd), mxu_dtype), ((1, nhead, 1, hd), jnp.float32),
        ((1, nhead, d_model, hd), mxu_dtype), ((1, nhead, 1, hd), jnp.float32),
        ((1, d_model, d_model), mxu_dtype), ((1, 1, d_model), jnp.float32),
        ((1, 1, d_model), jnp.float32), ((1, 1, d_model), jnp.float32),
        ((1, 1, d_model), jnp.float32), ((1, 1, d_model), jnp.float32),
        ((1, d_model, ff), mxu_dtype), ((1, 1, ff), jnp.float32),
        ((1, ff, d_model), mxu_dtype), ((1, 1, d_model), jnp.float32),
        ((1, S, d_model), jnp.float32),
    ]
    est = 2 * sum(_tile_padded_bytes(s, d) for s, d in blocks)
    est += _tile_padded_bytes((S, d_model), jnp.float32)
    vmem_limit = int(min(max(4 * est, 16 << 20), 48 << 20))

    # --- advisory cost estimate ------------------------------------------------
    N = B * S
    weight_arrays = (w_eff, b_eff, wq_s, bq_s, wk_s, bk_s, wv_s, bv_s,
                     wo_s, bo_s, ln1g, ln1b, ln2g, ln2b, w1_s, b1_s, w2_s, b2_s)
    weight_bytes = sum(int(a.size) * a.dtype.itemsize for a in weight_arrays)
    cost = pl.CostEstimate(
        flops=(2 * N * F * d_model
               + L * (8 * N * d_model * d_model
                      + 4 * B * nhead * S * S * hd
                      + 4 * N * d_model * ff)),
        transcendentals=L * B * nhead * S * S,
        bytes_accessed=int(src.size) * 4 + N * d_model * 4 + B * weight_bytes)

    kern = functools.partial(_encoder_kernel, nhead=nhead, mxu_dtype=mxu_dtype)

    out = pl.pallas_call(
        kern,
        out_shape=jax.ShapeDtypeStruct((B, S, d_model), jnp.float32),
        grid_spec=pltpu.PrefetchScalarGridSpec(
            num_scalar_prefetch=0,
            grid=(B, L),
            in_specs=in_specs,
            out_specs=out_spec,
            scratch_shapes=[pltpu.VMEM((S, d_model), jnp.float32)]),
        compiler_params=pltpu.CompilerParams(
            dimension_semantics=("parallel", "arbitrary"),
            vmem_limit_bytes=vmem_limit),
        cost_estimate=cost,
    )(
        src, w_eff, b_eff,
        wq_s, bq_s, wk_s, bk_s, wv_s, bv_s,
        wo_s, bo_s, ln1g, ln1b, ln2g, ln2b,
        w1_s, b1_s, w2_s, b2_s,
    )
    return out


# ----------------------------------------------------------------------------
# pure-JAX f32 reference (mirrors the PyTorch module; for correctness check)
# ----------------------------------------------------------------------------
def reference_forward(src, scaler_mean, scaler_scale, proj, layers, nhead, d_model):
    B, S, F = src.shape
    x = (src - scaler_mean) / scaler_scale
    x = (x @ proj["w_t"] + proj["b"]) * math.sqrt(d_model)
    hd = d_model // nhead
    for lp in layers:
        qkv = x @ lp["wqkv_t"] + lp["bqkv"]
        q, k, v = jnp.split(qkv, 3, axis=-1)
        q = q.reshape(B, S, nhead, hd).transpose(0, 2, 1, 3)
        k = k.reshape(B, S, nhead, hd).transpose(0, 2, 1, 3)
        v = v.reshape(B, S, nhead, hd).transpose(0, 2, 1, 3)
        s = jnp.einsum("bhqd,bhkd->bhqk", q, k) / math.sqrt(hd)
        p = jax.nn.softmax(s, axis=-1)
        a = jnp.einsum("bhqk,bhkd->bhqd", p, v).transpose(0, 2, 1, 3).reshape(B, S, d_model)
        a = a @ lp["wo_t"] + lp["bo"]
        y = x + a
        mu = y.mean(-1, keepdims=True)
        var = ((y - mu) ** 2).mean(-1, keepdims=True)
        y = (y - mu) / jnp.sqrt(var + 1e-5) * lp["ln1_g"] + lp["ln1_b"]
        h = jnp.maximum(y @ lp["w1_t"] + lp["b1"], 0.0)
        h = h @ lp["w2_t"] + lp["b2"]
        z = y + h
        mu = z.mean(-1, keepdims=True)
        var = ((z - mu) ** 2).mean(-1, keepdims=True)
        x = (z - mu) / jnp.sqrt(var + 1e-5) * lp["ln2_g"] + lp["ln2_b"]
    return x


# ----------------------------------------------------------------------------
# deterministic parameter construction
# ----------------------------------------------------------------------------
def make_params(key, coord_dim, d_model, nhead, num_layers, dim_feedforward):
    keys = iter(jax.random.split(key, 8 + 16 * num_layers))

    def rnd(shape, scale=0.1):
        return (scale * jax.random.normal(next(keys), shape)).astype(jnp.float32)

    scaler_mean = rnd((1, coord_dim), 1.0)
    scaler_scale = (0.5 + jax.random.uniform(next(keys), (1, coord_dim))).astype(jnp.float32)

    proj = {"w_t": rnd((coord_dim, d_model)), "b": rnd((1, d_model))}

    layers = []
    for _ in range(num_layers):
        layers.append({
            "wqkv_t": rnd((d_model, 3 * d_model)),
            "bqkv":   rnd((1, 3 * d_model)),
            "wo_t":   rnd((d_model, d_model)),
            "bo":     rnd((1, d_model)),
            "ln1_g":  jnp.ones((1, d_model), jnp.float32) + rnd((1, d_model), 0.01),
            "ln1_b":  rnd((1, d_model), 0.01),
            "ln2_g":  jnp.ones((1, d_model), jnp.float32) + rnd((1, d_model), 0.01),
            "ln2_b":  rnd((1, d_model), 0.01),
            "w1_t":   rnd((d_model, dim_feedforward)),
            "b1":     rnd((1, dim_feedforward)),
            "w2_t":   rnd((dim_feedforward, d_model)),
            "b2":     rnd((1, d_model)),
        })
    return scaler_mean, scaler_scale, proj, layers


if __name__ == "__main__":
    # Small shapes consistent with the module's forward.
    coord_dim, d_model, nhead, num_layers, dim_feedforward = 4, 32, 4, 2, 64
    batch, seq = 2, 8

    key = jax.random.PRNGKey(0)
    kp, kx = jax.random.split(key)
    scaler_mean, scaler_scale, proj, layers = make_params(
        kp, coord_dim, d_model, nhead, num_layers, dim_feedforward)

    src = jax.random.normal(kx, (batch, seq, coord_dim), dtype=jnp.float32)

    out = context_encoder_forward(src, scaler_mean, scaler_scale, proj, layers,
                                  nhead, d_model)
    out = jax.block_until_ready(out)

    ref = reference_forward(src, scaler_mean, scaler_scale, proj, layers,
                            nhead, d_model)
    assert out.shape == (batch, seq, d_model)
    # Tolerance accounts for bf16 MXU operands (f32 accumulation) and the
    # approx EUP reciprocal in the softmax denominator; reference is full f32.
    # Values are O(1) after LayerNorm, observed error is a few 1e-3.
    assert jnp.allclose(out, ref, atol=3e-2, rtol=3e-2), "mismatch vs reference"

    print("KERNEL_OK")
</pallas_src>

<mosaic_0001>
module attributes {stable_mosaic.version = 11 : i64} {
  func.func @_encoder_kernel(%arg0: i32, %arg1: i32, %arg2: memref<1x8x4xf32, #tpu.memory_space<vmem>>, %arg3: memref<4x32xbf16, #tpu.memory_space<vmem>>, %arg4: memref<1x32xf32, #tpu.memory_space<vmem>>, %arg5: memref<1x4x32x8xbf16, #tpu.memory_space<vmem>>, %arg6: memref<1x4x1x8xf32, #tpu.memory_space<vmem>>, %arg7: memref<1x4x32x8xbf16, #tpu.memory_space<vmem>>, %arg8: memref<1x4x1x8xf32, #tpu.memory_space<vmem>>, %arg9: memref<1x4x32x8xbf16, #tpu.memory_space<vmem>>, %arg10: memref<1x4x1x8xf32, #tpu.memory_space<vmem>>, %arg11: memref<1x32x32xbf16, #tpu.memory_space<vmem>>, %arg12: memref<1x1x32xf32, #tpu.memory_space<vmem>>, %arg13: memref<1x1x32xf32, #tpu.memory_space<vmem>>, %arg14: memref<1x1x32xf32, #tpu.memory_space<vmem>>, %arg15: memref<1x1x32xf32, #tpu.memory_space<vmem>>, %arg16: memref<1x1x32xf32, #tpu.memory_space<vmem>>, %arg17: memref<1x32x64xbf16, #tpu.memory_space<vmem>>, %arg18: memref<1x1x64xf32, #tpu.memory_space<vmem>>, %arg19: memref<1x64x32xbf16, #tpu.memory_space<vmem>>, %arg20: memref<1x1x32xf32, #tpu.memory_space<vmem>>, %arg21: memref<1x8x32xf32, #tpu.memory_space<vmem>>, %arg22: memref<8x32xf32, #tpu.memory_space<vmem>>) attributes {dimension_semantics = [#tpu.dimension_semantics<parallel>, #tpu.dimension_semantics<arbitrary>], iteration_bounds = array<i64: 2, 2>, scalar_prefetch = 0 : i64, scratch_operands = 1 : i64, tpu.core_type = #tpu.core_type<tc>, window_params = [{transform_indices = @transform_0, window_bounds = array<i64: 1, 8, 4>}, {pipeline_mode = #tpu.pipeline_mode<synchronous>, transform_indices = @transform_1, window_bounds = array<i64: 4, 32>}, {pipeline_mode = #tpu.pipeline_mode<synchronous>, transform_indices = @transform_2, window_bounds = array<i64: 1, 32>}, {transform_indices = @transform_3, window_bounds = array<i64: 1, 4, 32, 8>}, {transform_indices = @transform_4, window_bounds = array<i64: 1, 4, 1, 8>}, {transform_indices = @transform_5, window_bounds = array<i64: 1, 4, 32, 8>}, {transform_indices = @transform_6, window_bounds = array<i64: 1, 4, 1, 8>}, {transform_indices = @transform_7, window_bounds = array<i64: 1, 4, 32, 8>}, {transform_indices = @transform_8, window_bounds = array<i64: 1, 4, 1, 8>}, {transform_indices = @transform_9, window_bounds = array<i64: 1, 32, 32>}, {transform_indices = @transform_10, window_bounds = array<i64: 1, 1, 32>}, {transform_indices = @transform_11, window_bounds = array<i64: 1, 1, 32>}, {transform_indices = @transform_12, window_bounds = array<i64: 1, 1, 32>}, {transform_indices = @transform_13, window_bounds = array<i64: 1, 1, 32>}, {transform_indices = @transform_14, window_bounds = array<i64: 1, 1, 32>}, {transform_indices = @transform_15, window_bounds = array<i64: 1, 32, 64>}, {transform_indices = @transform_16, window_bounds = array<i64: 1, 1, 64>}, {transform_indices = @transform_17, window_bounds = array<i64: 1, 64, 32>}, {transform_indices = @transform_18, window_bounds = array<i64: 1, 1, 32>}, {transform_indices = @transform_19, window_bounds = array<i64: 1, 8, 32>}]} {
    %c0_i32 = arith.constant 0 : i32
    %0 = arith.cmpi eq, %arg1, %c0_i32 : i32
    %1 = arith.extui %0 : i1 to i32
    %c0_i32_0 = arith.constant 0 : i32
    %2 = arith.cmpi ne, %1, %c0_i32_0 : i32
    scf.if %2 {
      %c0_169 = arith.constant 0 : index
      %c0_170 = arith.constant 0 : index
      %c0_171 = arith.constant 0 : index
      %238 = vector.load %arg2[%c0_169, %c0_170, %c0_171] : memref<1x8x4xf32, #tpu.memory_space<vmem>>, vector<1x8x4xf32>
      %239 = vector.shape_cast %238 : vector<1x8x4xf32> to vector<8x4xf32>
      %240 = arith.truncf %239 : vector<8x4xf32> to vector<8x4xbf16>
      %c0_172 = arith.constant 0 : index
      %c0_173 = arith.constant 0 : index
      %241 = vector.load %arg3[%c0_172, %c0_173] : memref<4x32xbf16, #tpu.memory_space<vmem>>, vector<4x32xbf16>
      %cst_174 = arith.constant dense<0.000000e+00> : vector<8x32xf32>
      %242 = tpu.matmul %240, %241, %cst_174 {dimension_numbers = #tpu.dot_dimension_numbers<[1], [0], [0], [1], [0, 0, 1, 1], [], []>} : vector<8x4xbf16>, vector<4x32xbf16>, vector<8x32xf32> -> vector<8x32xf32>
      %c0_175 = arith.constant 0 : index
      %c0_176 = arith.constant 0 : index
      %243 = vector.load %arg4[%c0_175, %c0_176] : memref<1x32xf32, #tpu.memory_space<vmem>>, vector<1x32xf32>
      %244 = vector.broadcast %243 : vector<1x32xf32> to vector<8x32xf32>
      %245 = arith.addf %242, %244 : vector<8x32xf32>
      %c0_177 = arith.constant 0 : index
      %c0_178 = arith.constant 0 : index
      %246 = vector.load %arg22[%c0_177, %c0_178] : memref<8x32xf32, #tpu.memory_space<vmem>>, vector<8x32xf32>
      tpu.vector_store %arg22[%c0_177, %c0_178], %245 {strides = array<i32>} : memref<8x32xf32, #tpu.memory_space<vmem>>, vector<8x32xf32>,
    } else {
    }
    %c0 = arith.constant 0 : index
    %c0_1 = arith.constant 0 : index
    %3 = vector.load %arg22[%c0, %c0_1] : memref<8x32xf32, #tpu.memory_space<vmem>>, vector<8x32xf32>
    %4 = arith.truncf %3 : vector<8x32xf32> to vector<8x32xbf16>
    %c0_2 = arith.constant 0 : index
    %c0_3 = arith.constant 0 : index
    %c0_4 = arith.constant 0 : index
    %c0_5 = arith.constant 0 : index
    %5 = vector.load %arg5[%c0_2, %c0_3, %c0_4, %c0_5] : memref<1x4x32x8xbf16, #tpu.memory_space<vmem>>, vector<1x1x32x8xbf16>
    %6 = vector.shape_cast %5 : vector<1x1x32x8xbf16> to vector<32x8xbf16>
    %cst = arith.constant dense<0.000000e+00> : vector<8x8xf32>
    %7 = tpu.matmul %4, %6, %cst {dimension_numbers = #tpu.dot_dimension_numbers<[1], [0], [0], [1], [0, 0, 1, 1], [], []>} : vector<8x32xbf16>, vector<32x8xbf16>, vector<8x8xf32> -> vector<8x8xf32>
    %c0_6 = arith.constant 0 : index
    %c0_7 = arith.constant 0 : index
    %c0_8 = arith.constant 0 : index
    %c0_9 = arith.constant 0 : index
    %8 = vector.load %arg6[%c0_6, %c0_7, %c0_8, %c0_9] : memref<1x4x1x8xf32, #tpu.memory_space<vmem>>, vector<1x1x1x8xf32>
    %9 = vector.shape_cast %8 : vector<1x1x1x8xf32> to vector<1x8xf32>
    %10 = vector.broadcast %9 : vector<1x8xf32> to vector<8x8xf32>
    %11 = arith.addf %7, %10 : vector<8x8xf32>
    %c0_10 = arith.constant 0 : index
    %c0_11 = arith.constant 0 : index
    %c0_12 = arith.constant 0 : index
    %c0_13 = arith.constant 0 : index
    %12 = vector.load %arg7[%c0_10, %c0_11, %c0_12, %c0_13] : memref<1x4x32x8xbf16, #tpu.memory_space<vmem>>, vector<1x1x32x8xbf16>
    %13 = vector.shape_cast %12 : vector<1x1x32x8xbf16> to vector<32x8xbf16>
    %cst_14 = arith.constant dense<0.000000e+00> : vector<8x8xf32>
    %14 = tpu.matmul %4, %13, %cst_14 {dimension_numbers = #tpu.dot_dimension_numbers<[1], [0], [0], [1], [0, 0, 1, 1], [], []>} : vector<8x32xbf16>, vector<32x8xbf16>, vector<8x8xf32> -> vector<8x8xf32>
    %c0_15 = arith.constant 0 : index
    %c0_16 = arith.constant 0 : index
    %c0_17 = arith.constant 0 : index
    %c0_18 = arith.constant 0 : index
    %15 = vector.load %arg8[%c0_15, %c0_16, %c0_17, %c0_18] : memref<1x4x1x8xf32, #tpu.memory_space<vmem>>, vector<1x1x1x8xf32>
    %16 = vector.shape_cast %15 : vector<1x1x1x8xf32> to vector<1x8xf32>
    %17 = vector.broadcast %16 : vector<1x8xf32> to vector<8x8xf32>
    %18 = arith.addf %14, %17 : vector<8x8xf32>
    %c0_19 = arith.constant 0 : index
    %c0_20 = arith.constant 0 : index
    %c0_21 = arith.constant 0 : index
    %c0_22 = arith.constant 0 : index
    %19 = vector.load %arg9[%c0_19, %c0_20, %c0_21, %c0_22] : memref<1x4x32x8xbf16, #tpu.memory_space<vmem>>, vector<1x1x32x8xbf16>
    %20 = vector.shape_cast %19 : vector<1x1x32x8xbf16> to vector<32x8xbf16>
    %cst_23 = arith.constant dense<0.000000e+00> : vector<8x8xf32>
    %21 = tpu.matmul %4, %20, %cst_23 {dimension_numbers = #tpu.dot_dimension_numbers<[1], [0], [0], [1], [0, 0, 1, 1], [], []>} : vector<8x32xbf16>, vector<32x8xbf16>, vector<8x8xf32> -> vector<8x8xf32>
    %c0_24 = arith.constant 0 : index
    %c0_25 = arith.constant 0 : index
    %c0_26 = arith.constant 0 : index
    %c0_27 = arith.constant 0 : index
    %22 = vector.load %arg10[%c0_24, %c0_25, %c0_26, %c0_27] : memref<1x4x1x8xf32, #tpu.memory_space<vmem>>, vector<1x1x1x8xf32>
    %23 = vector.shape_cast %22 : vector<1x1x1x8xf32> to vector<1x8xf32>
    %24 = vector.broadcast %23 : vector<1x8xf32> to vector<8x8xf32>
    %25 = arith.addf %21, %24 : vector<8x8xf32>
    %26 = arith.truncf %11 : vector<8x8xf32> to vector<8x8xbf16>
    %27 = arith.truncf %18 : vector<8x8xf32> to vector<8x8xbf16>
    %cst_28 = arith.constant dense<0.000000e+00> : vector<8x8xf32>
    %28 = tpu.matmul %26, %27, %cst_28 {dimension_numbers = #tpu.dot_dimension_numbers<[1], [1], [0], [0], [0, 0, 1, 0], [], []>} : vector<8x8xbf16>, vector<8x8xbf16>, vector<8x8xf32> -> vector<8x8xf32>
    %cst_29 = arith.constant dense<0xFF800000> : vector<8xf32>
    %29 = vector.multi_reduction <maximumf>, %28, %cst_29 [1] : vector<8x8xf32> to vector<8xf32>
    %30 = vector.shape_cast %29 : vector<8xf32> to vector<8x1xf32>
    %31 = vector.broadcast %30 : vector<8x1xf32> to vector<8x8xf32>
    %32 = arith.subf %28, %31 : vector<8x8xf32>
    %33 = math.exp %32 : vector<8x8xf32>
    %cst_30 = arith.constant dense<0.000000e+00> : vector<8xf32>
    %34 = vector.multi_reduction <add>, %33, %cst_30 [1] : vector<8x8xf32> to vector<8xf32>
    %35 = vector.shape_cast %34 : vector<8xf32> to vector<8x1xf32>
    %36 = tpu.reciprocal %35 {approx = true} : vector<8x1xf32> -> vector<8x1xf32>
    %37 = vector.broadcast %36 : vector<8x1xf32> to vector<8x8xf32>
    %38 = arith.mulf %33, %37 : vector<8x8xf32>
    %39 = arith.truncf %38 : vector<8x8xf32> to vector<8x8xbf16>
    %40 = arith.truncf %25 : vector<8x8xf32> to vector<8x8xbf16>
    %cst_31 = arith.constant dense<0.000000e+00> : vector<8x8xf32>
    %41 = tpu.matmul %39, %40, %cst_31 {dimension_numbers = #tpu.dot_dimension_numbers<[1], [0], [0], [1], [0, 0, 1, 1], [], []>} : vector<8x8xbf16>, vector<8x8xbf16>, vector<8x8xf32> -> vector<8x8xf32>
    %c0_32 = arith.constant 0 : index
    %c1 = arith.constant 1 : index
    %c0_33 = arith.constant 0 : index
    %c0_34 = arith.constant 0 : index
    %42 = vector.load %arg5[%c0_32, %c1, %c0_33, %c0_34] : memref<1x4x32x8xbf16, #tpu.memory_space<vmem>>, vector<1x1x32x8xbf16>
    %43 = vector.shape_cast %42 : vector<1x1x32x8xbf16> to vector<32x8xbf16>
    %cst_35 = arith.constant dense<0.000000e+00> : vector<8x8xf32>
    %44 = tpu.matmul %4, %43, %cst_35 {dimension_numbers = #tpu.dot_dimension_numbers<[1], [0], [0], [1], [0, 0, 1, 1], [], []>} : vector<8x32xbf16>, vector<32x8xbf16>, vector<8x8xf32> -> vector<8x8xf32>
    %c0_36 = arith.constant 0 : index
    %c1_37 = arith.constant 1 : index
    %c0_38 = arith.constant 0 : index
    %c0_39 = arith.constant 0 : index
    %45 = vector.load %arg6[%c0_36, %c1_37, %c0_38, %c0_39] : memref<1x4x1x8xf32, #tpu.memory_space<vmem>>, vector<1x1x1x8xf32>
    %46 = vector.shape_cast %45 : vector<1x1x1x8xf32> to vector<1x8xf32>
    %47 = vector.broadcast %46 : vector<1x8xf32> to vector<8x8xf32>
    %48 = arith.addf %44, %47 : vector<8x8xf32>
    %c0_40 = arith.constant 0 : index
    %c1_41 = arith.constant 1 : index
    %c0_42 = arith.constant 0 : index
    %c0_43 = arith.constant 0 : index
    %49 = vector.load %arg7[%c0_40, %c1_41, %c0_42, %c0_43] : memref<1x4x32x8xbf16, #tpu.memory_space<vmem>>, vector<1x1x32x8xbf16>
    %50 = vector.shape_cast %49 : vector<1x1x32x8xbf16> to vector<32x8xbf16>
    %cst_44 = arith.constant dense<0.000000e+00> : vector<8x8xf32>
    %51 = tpu.matmul %4, %50, %cst_44 {dimension_numbers = #tpu.dot_dimension_numbers<[1], [0], [0], [1], [0, 0, 1, 1], [], []>} : vector<8x32xbf16>, vector<32x8xbf16>, vector<8x8xf32> -> vector<8x8xf32>
    %c0_45 = arith.constant 0 : index
    %c1_46 = arith.constant 1 : index
    %c0_47 = arith.constant 0 : index
    %c0_48 = arith.constant 0 : index
    %52 = vector.load %arg8[%c0_45, %c1_46, %c0_47, %c0_48] : memref<1x4x1x8xf32, #tpu.memory_space<vmem>>, vector<1x1x1x8xf32>
    %53 = vector.shape_cast %52 : vector<1x1x1x8xf32> to vector<1x8xf32>
    %54 = vector.broadcast %53 : vector<1x8xf32> to vector<8x8xf32>
    %55 = arith.addf %51, %54 : vector<8x8xf32>
    %c0_49 = arith.constant 0 : index
    %c1_50 = arith.constant 1 : index
    %c0_51 = arith.constant 0 : index
    %c0_52 = arith.constant 0 : index
    %56 = vector.load %arg9[%c0_49, %c1_50, %c0_51, %c0_52] : memref<1x4x32x8xbf16, #tpu.memory_space<vmem>>, vector<1x1x32x8xbf16>
    %57 = vector.shape_cast %56 : vector<1x1x32x8xbf16> to vector<32x8xbf16>
    %cst_53 = arith.constant dense<0.000000e+00> : vector<8x8xf32>
    %58 = tpu.matmul %4, %57, %cst_53 {dimension_numbers = #tpu.dot_dimension_numbers<[1], [0], [0], [1], [0, 0, 1, 1], [], []>} : vector<8x32xbf16>, vector<32x8xbf16>, vector<8x8xf32> -> vector<8x8xf32>
    %c0_54 = arith.constant 0 : index
    %c1_55 = arith.constant 1 : index
    %c0_56 = arith.constant 0 : index
    %c0_57 = arith.constant 0 : index
    %59 = vector.load %arg10[%c0_54, %c1_55, %c0_56, %c0_57] : memref<1x4x1x8xf32, #tpu.memory_space<vmem>>, vector<1x1x1x8xf32>
    %60 = vector.shape_cast %59 : vector<1x1x1x8xf32> to vector<1x8xf32>
    %61 = vector.broadcast %60 : vector<1x8xf32> to vector<8x8xf32>
    %62 = arith.addf %58, %61 : vector<8x8xf32>
    %63 = arith.truncf %48 : vector<8x8xf32> to vector<8x8xbf16>
    %64 = arith.truncf %55 : vector<8x8xf32> to vector<8x8xbf16>
    %cst_58 = arith.constant dense<0.000000e+00> : vector<8x8xf32>
    %65 = tpu.matmul %63, %64, %cst_58 {dimension_numbers = #tpu.dot_dimension_numbers<[1], [1], [0], [0], [0, 0, 1, 0], [], []>} : vector<8x8xbf16>, vector<8x8xbf16>, vector<8x8xf32> -> vector<8x8xf32>
    %cst_59 = arith.constant dense<0xFF800000> : vector<8xf32>
    %66 = vector.multi_reduction <maximumf>, %65, %cst_59 [1] : vector<8x8xf32> to vector<8xf32>
    %67 = vector.shape_cast %66 : vector<8xf32> to vector<8x1xf32>
    %68 = vector.broadcast %67 : vector<8x1xf32> to vector<8x8xf32>
    %69 = arith.subf %65, %68 : vector<8x8xf32>
    %70 = math.exp %69 : vector<8x8xf32>
    %cst_60 = arith.constant dense<0.000000e+00> : vector<8xf32>
    %71 = vector.multi_reduction <add>, %70, %cst_60 [1] : vector<8x8xf32> to vector<8xf32>
    %72 = vector.shape_cast %71 : vector<8xf32> to vector<8x1xf32>
    %73 = tpu.reciprocal %72 {approx = true} : vector<8x1xf32> -> vector<8x1xf32>
    %74 = vector.broadcast %73 : vector<8x1xf32> to vector<8x8xf32>
    %75 = arith.mulf %70, %74 : vector<8x8xf32>
    %76 = arith.truncf %75 : vector<8x8xf32> to vector<8x8xbf16>
    %77 = arith.truncf %62 : vector<8x8xf32> to vector<8x8xbf16>
    %cst_61 = arith.constant dense<0.000000e+00> : vector<8x8xf32>
    %78 = tpu.matmul %76, %77, %cst_61 {dimension_numbers = #tpu.dot_dimension_numbers<[1], [0], [0], [1], [0, 0, 1, 1], [], []>} : vector<8x8xbf16>, vector<8x8xbf16>, vector<8x8xf32> -> vector<8x8xf32>
    %c0_62 = arith.constant 0 : index
    %c2 = arith.constant 2 : index
    %c0_63 = arith.constant 0 : index
    %c0_64 = arith.constant 0 : index
    %79 = vector.load %arg5[%c0_62, %c2, %c0_63, %c0_64] : memref<1x4x32x8xbf16, #tpu.memory_space<vmem>>, vector<1x1x32x8xbf16>
    %80 = vector.shape_cast %79 : vector<1x1x32x8xbf16> to vector<32x8xbf16>
    %cst_65 = arith.constant dense<0.000000e+00> : vector<8x8xf32>
    %81 = tpu.matmul %4, %80, %cst_65 {dimension_numbers = #tpu.dot_dimension_numbers<[1], [0], [0], [1], [0, 0, 1, 1], [], []>} : vector<8x32xbf16>, vector<32x8xbf16>, vector<8x8xf32> -> vector<8x8xf32>
    %c0_66 = arith.constant 0 : index
    %c2_67 = arith.constant 2 : index
    %c0_68 = arith.constant 0 : index
    %c0_69 = arith.constant 0 : index
    %82 = vector.load %arg6[%c0_66, %c2_67, %c0_68, %c0_69] : memref<1x4x1x8xf32, #tpu.memory_space<vmem>>, vector<1x1x1x8xf32>
    %83 = vector.shape_cast %82 : vector<1x1x1x8xf32> to vector<1x8xf32>
    %84 = vector.broadcast %83 : vector<1x8xf32> to vector<8x8xf32>
    %85 = arith.addf %81, %84 : vector<8x8xf32>
    %c0_70 = arith.constant 0 : index
    %c2_71 = arith.constant 2 : index
    %c0_72 = arith.constant 0 : index
    %c0_73 = arith.constant 0 : index
    %86 = vector.load %arg7[%c0_70, %c2_71, %c0_72, %c0_73] : memref<1x4x32x8xbf16, #tpu.memory_space<vmem>>, vector<1x1x32x8xbf16>
    %87 = vector.shape_cast %86 : vector<1x1x32x8xbf16> to vector<32x8xbf16>
    %cst_74 = arith.constant dense<0.000000e+00> : vector<8x8xf32>
    %88 = tpu.matmul %4, %87, %cst_74 {dimension_numbers = #tpu.dot_dimension_numbers<[1], [0], [0], [1], [0, 0, 1, 1], [], []>} : vector<8x32xbf16>, vector<32x8xbf16>, vector<8x8xf32> -> vector<8x8xf32>
    %c0_75 = arith.constant 0 : index
    %c2_76 = arith.constant 2 : index
    %c0_77 = arith.constant 0 : index
    %c0_78 = arith.constant 0 : index
    %89 = vector.load %arg8[%c0_75, %c2_76, %c0_77, %c0_78] : memref<1x4x1x8xf32, #tpu.memory_space<vmem>>, vector<1x1x1x8xf32>
    %90 = vector.shape_cast %89 : vector<1x1x1x8xf32> to vector<1x8xf32>
    %91 = vector.broadcast %90 : vector<1x8xf32> to vector<8x8xf32>
    %92 = arith.addf %88, %91 : vector<8x8xf32>
    %c0_79 = arith.constant 0 : index
    %c2_80 = arith.constant 2 : index
    %c0_81 = arith.constant 0 : index
    %c0_82 = arith.constant 0 : index
    %93 = vector.load %arg9[%c0_79, %c2_80, %c0_81, %c0_82] : memref<1x4x32x8xbf16, #tpu.memory_space<vmem>>, vector<1x1x32x8xbf16>
    %94 = vector.shape_cast %93 : vector<1x1x32x8xbf16> to vector<32x8xbf16>
    %cst_83 = arith.constant dense<0.000000e+00> : vector<8x8xf32>
    %95 = tpu.matmul %4, %94, %cst_83 {dimension_numbers = #tpu.dot_dimension_numbers<[1], [0], [0], [1], [0, 0, 1, 1], [], []>} : vector<8x32xbf16>, vector<32x8xbf16>, vector<8x8xf32> -> vector<8x8xf32>
    %c0_84 = arith.constant 0 : index
    %c2_85 = arith.constant 2 : index
    %c0_86 = arith.constant 0 : index
    %c0_87 = arith.constant 0 : index
    %96 = vector.load %arg10[%c0_84, %c2_85, %c0_86, %c0_87] : memref<1x4x1x8xf32, #tpu.memory_space<vmem>>, vector<1x1x1x8xf32>
    %97 = vector.shape_cast %96 : vector<1x1x1x8xf32> to vector<1x8xf32>
    %98 = vector.broadcast %97 : vector<1x8xf32> to vector<8x8xf32>
    %99 = arith.addf %95, %98 : vector<8x8xf32>
    %100 = arith.truncf %85 : vector<8x8xf32> to vector<8x8xbf16>
    %101 = arith.truncf %92 : vector<8x8xf32> to vector<8x8xbf16>
    %cst_88 = arith.constant dense<0.000000e+00> : vector<8x8xf32>
    %102 = tpu.matmul %100, %101, %cst_88 {dimension_numbers = #tpu.dot_dimension_numbers<[1], [1], [0], [0], [0, 0, 1, 0], [], []>} : vector<8x8xbf16>, vector<8x8xbf16>, vector<8x8xf32> -> vector<8x8xf32>
    %cst_89 = arith.constant dense<0xFF800000> : vector<8xf32>
    %103 = vector.multi_reduction <maximumf>, %102, %cst_89 [1] : vector<8x8xf32> to vector<8xf32>
    %104 = vector.shape_cast %103 : vector<8xf32> to vector<8x1xf32>
    %105 = vector.broadcast %104 : vector<8x1xf32> to vector<8x8xf32>
    %106 = arith.subf %102, %105 : vector<8x8xf32>
    %107 = math.exp %106 : vector<8x8xf32>
    %cst_90 = arith.constant dense<0.000000e+00> : vector<8xf32>
    %108 = vector.multi_reduction <add>, %107, %cst_90 [1] : vector<8x8xf32> to vector<8xf32>
    %109 = vector.shape_cast %108 : vector<8xf32> to vector<8x1xf32>
    %110 = tpu.reciprocal %109 {approx = true} : vector<8x1xf32> -> vector<8x1xf32>
    %111 = vector.broadcast %110 : vector<8x1xf32> to vector<8x8xf32>
    %112 = arith.mulf %107, %111 : vector<8x8xf32>
    %113 = arith.truncf %112 : vector<8x8xf32> to vector<8x8xbf16>
    %114 = arith.truncf %99 : vector<8x8xf32> to vector<8x8xbf16>
    %cst_91 = arith.constant dense<0.000000e+00> : vector<8x8xf32>
    %115 = tpu.matmul %113, %114, %cst_91 {dimension_numbers = #tpu.dot_dimension_numbers<[1], [0], [0], [1], [0, 0, 1, 1], [], []>} : vector<8x8xbf16>, vector<8x8xbf16>, vector<8x8xf32> -> vector<8x8xf32>
    %c0_92 = arith.constant 0 : index
    %c3 = arith.constant 3 : index
    %c0_93 = arith.constant 0 : index
    %c0_94 = arith.constant 0 : index
    %116 = vector.load %arg5[%c0_92, %c3, %c0_93, %c0_94] : memref<1x4x32x8xbf16, #tpu.memory_space<vmem>>, vector<1x1x32x8xbf16>
    %117 = vector.shape_cast %116 : vector<1x1x32x8xbf16> to vector<32x8xbf16>
    %cst_95 = arith.constant dense<0.000000e+00> : vector<8x8xf32>
    %118 = tpu.matmul %4, %117, %cst_95 {dimension_numbers = #tpu.dot_dimension_numbers<[1], [0], [0], [1], [0, 0, 1, 1], [], []>} : vector<8x32xbf16>, vector<32x8xbf16>, vector<8x8xf32> -> vector<8x8xf32>
    %c0_96 = arith.constant 0 : index
    %c3_97 = arith.constant 3 : index
    %c0_98 = arith.constant 0 : index
    %c0_99 = arith.constant 0 : index
    %119 = vector.load %arg6[%c0_96, %c3_97, %c0_98, %c0_99] : memref<1x4x1x8xf32, #tpu.memory_space<vmem>>, vector<1x1x1x8xf32>
    %120 = vector.shape_cast %119 : vector<1x1x1x8xf32> to vector<1x8xf32>
    %121 = vector.broadcast %120 : vector<1x8xf32> to vector<8x8xf32>
    %122 = arith.addf %118, %121 : vector<8x8xf32>
    %c0_100 = arith.constant 0 : index
    %c3_101 = arith.constant 3 : index
    %c0_102 = arith.constant 0 : index
    %c0_103 = arith.constant 0 : index
    %123 = vector.load %arg7[%c0_100, %c3_101, %c0_102, %c0_103] : memref<1x4x32x8xbf16, #tpu.memory_space<vmem>>, vector<1x1x32x8xbf16>
    %124 = vector.shape_cast %123 : vector<1x1x32x8xbf16> to vector<32x8xbf16>
    %cst_104 = arith.constant dense<0.000000e+00> : vector<8x8xf32>
    %125 = tpu.matmul %4, %124, %cst_104 {dimension_numbers = #tpu.dot_dimension_numbers<[1], [0], [0], [1], [0, 0, 1, 1], [], []>} : vector<8x32xbf16>, vector<32x8xbf16>, vector<8x8xf32> -> vector<8x8xf32>
    %c0_105 = arith.constant 0 : index
    %c3_106 = arith.constant 3 : index
    %c0_107 = arith.constant 0 : index
    %c0_108 = arith.constant 0 : index
    %126 = vector.load %arg8[%c0_105, %c3_106, %c0_107, %c0_108] : memref<1x4x1x8xf32, #tpu.memory_space<vmem>>, vector<1x1x1x8xf32>
    %127 = vector.shape_cast %126 : vector<1x1x1x8xf32> to vector<1x8xf32>
    %128 = vector.broadcast %127 : vector<1x8xf32> to vector<8x8xf32>
    %129 = arith.addf %125, %128 : vector<8x8xf32>
    %c0_109 = arith.constant 0 : index
    %c3_110 = arith.constant 3 : index
    %c0_111 = arith.constant 0 : index
    %c0_112 = arith.constant 0 : index
    %130 = vector.load %arg9[%c0_109, %c3_110, %c0_111, %c0_112] : memref<1x4x32x8xbf16, #tpu.memory_space<vmem>>, vector<1x1x32x8xbf16>
    %131 = vector.shape_cast %130 : vector<1x1x32x8xbf16> to vector<32x8xbf16>
    %cst_113 = arith.constant dense<0.000000e+00> : vector<8x8xf32>
    %132 = tpu.matmul %4, %131, %cst_113 {dimension_numbers = #tpu.dot_dimension_numbers<[1], [0], [0], [1], [0, 0, 1, 1], [], []>} : vector<8x32xbf16>, vector<32x8xbf16>, vector<8x8xf32> -> vector<8x8xf32>
    %c0_114 = arith.constant 0 : index
    %c3_115 = arith.constant 3 : index
    %c0_116 = arith.constant 0 : index
    %c0_117 = arith.constant 0 : index
    %133 = vector.load %arg10[%c0_114, %c3_115, %c0_116, %c0_117] : memref<1x4x1x8xf32, #tpu.memory_space<vmem>>, vector<1x1x1x8xf32>
    %134 = vector.shape_cast %133 : vector<1x1x1x8xf32> to vector<1x8xf32>
    %135 = vector.broadcast %134 : vector<1x8xf32> to vector<8x8xf32>
    %136 = arith.addf %132, %135 : vector<8x8xf32>
    %137 = arith.truncf %122 : vector<8x8xf32> to vector<8x8xbf16>
    %138 = arith.truncf %129 : vector<8x8xf32> to vector<8x8xbf16>
    %cst_118 = arith.constant dense<0.000000e+00> : vector<8x8xf32>
    %139 = tpu.matmul %137, %138, %cst_118 {dimension_numbers = #tpu.dot_dimension_numbers<[1], [1], [0], [0], [0, 0, 1, 0], [], []>} : vector<8x8xbf16>, vector<8x8xbf16>, vector<8x8xf32> -> vector<8x8xf32>
    %cst_119 = arith.constant dense<0xFF800000> : vector<8xf32>
    %140 = vector.multi_reduction <maximumf>, %139, %cst_119 [1] : vector<8x8xf32> to vector<8xf32>
    %141 = vector.shape_cast %140 : vector<8xf32> to vector<8x1xf32>
    %142 = vector.broadcast %141 : vector<8x1xf32> to vector<8x8xf32>
    %143 = arith.subf %139, %142 : vector<8x8xf32>
    %144 = math.exp %143 : vector<8x8xf32>
    %cst_120 = arith.constant dense<0.000000e+00> : vector<8xf32>
    %145 = vector.multi_reduction <add>, %144, %cst_120 [1] : vector<8x8xf32> to vector<8xf32>
    %146 = vector.shape_cast %145 : vector<8xf32> to vector<8x1xf32>
    %147 = tpu.reciprocal %146 {approx = true} : vector<8x1xf32> -> vector<8x1xf32>
    %148 = vector.broadcast %147 : vector<8x1xf32> to vector<8x8xf32>
    %149 = arith.mulf %144, %148 : vector<8x8xf32>
    %150 = arith.truncf %149 : vector<8x8xf32> to vector<8x8xbf16>
    %151 = arith.truncf %136 : vector<8x8xf32> to vector<8x8xbf16>
    %cst_121 = arith.constant dense<0.000000e+00> : vector<8x8xf32>
    %152 = tpu.matmul %150, %151, %cst_121 {dimension_numbers = #tpu.dot_dimension_numbers<[1], [0], [0], [1], [0, 0, 1, 1], [], []>} : vector<8x8xbf16>, vector<8x8xbf16>, vector<8x8xf32> -> vector<8x8xf32>
    %153 = tpu.concatenate %41, %78, %115, %152 in 1 : vector<8x8xf32>, vector<8x8xf32>, vector<8x8xf32>, vector<8x8xf32> -> vector<8x32xf32>
    %154 = arith.truncf %153 : vector<8x32xf32> to vector<8x32xbf16>
    %c0_122 = arith.constant 0 : index
    %c0_123 = arith.constant 0 : index
    %c0_124 = arith.constant 0 : index
    %155 = vector.load %arg11[%c0_122, %c0_123, %c0_124] : memref<1x32x32xbf16, #tpu.memory_space<vmem>>, vector<1x32x32xbf16>
    %156 = vector.shape_cast %155 : vector<1x32x32xbf16> to vector<32x32xbf16>
    %cst_125 = arith.constant dense<0.000000e+00> : vector<8x32xf32>
    %157 = tpu.matmul %154, %156, %cst_125 {dimension_numbers = #tpu.dot_dimension_numbers<[1], [0], [0], [1], [0, 0, 1, 1], [], []>} : vector<8x32xbf16>, vector<32x32xbf16>, vector<8x32xf32> -> vector<8x32xf32>
    %c0_126 = arith.constant 0 : index
    %c0_127 = arith.constant 0 : index
    %c0_128 = arith.constant 0 : index
    %158 = vector.load %arg12[%c0_126, %c0_127, %c0_128] : memref<1x1x32xf32, #tpu.memory_space<vmem>>, vector<1x1x32xf32>
    %159 = vector.shape_cast %158 : vector<1x1x32xf32> to vector<1x32xf32>
    %160 = vector.broadcast %159 : vector<1x32xf32> to vector<8x32xf32>
    %161 = arith.addf %157, %160 : vector<8x32xf32>
    %162 = arith.addf %3, %161 : vector<8x32xf32>
    %c0_129 = arith.constant 0 : index
    %c0_130 = arith.constant 0 : index
    %c0_131 = arith.constant 0 : index
    %163 = vector.load %arg13[%c0_129, %c0_130, %c0_131] : memref<1x1x32xf32, #tpu.memory_space<vmem>>, vector<1x1x32xf32>
    %164 = vector.shape_cast %163 : vector<1x1x32xf32> to vector<1x32xf32>
    %c0_132 = arith.constant 0 : index
    %c0_133 = arith.constant 0 : index
    %c0_134 = arith.constant 0 : index
    %165 = vector.load %arg14[%c0_132, %c0_133, %c0_134] : memref<1x1x32xf32, #tpu.memory_space<vmem>>, vector<1x1x32xf32>
    %166 = vector.shape_cast %165 : vector<1x1x32xf32> to vector<1x32xf32>
    %cst_135 = arith.constant dense<0.000000e+00> : vector<8xf32>
    %167 = vector.multi_reduction <add>, %162, %cst_135 [1] : vector<8x32xf32> to vector<8xf32>
    %168 = vector.shape_cast %167 : vector<8xf32> to vector<8x1xf32>
    %cst_136 = arith.constant 3.200000e+01 : f32
    %169 = vector.broadcast %cst_136 : f32 to vector<8x1xf32>
    %170 = arith.divf %168, %169 : vector<8x1xf32>
    %171 = vector.broadcast %170 : vector<8x1xf32> to vector<8x32xf32>
    %172 = arith.subf %162, %171 : vector<8x32xf32>
    %173 = arith.mulf %172, %172 : vector<8x32xf32>
    %cst_137 = arith.constant dense<0.000000e+00> : vector<8xf32>
    %174 = vector.multi_reduction <add>, %173, %cst_137 [1] : vector<8x32xf32> to vector<8xf32>
    %175 = vector.shape_cast %174 : vector<8xf32> to vector<8x1xf32>
    %cst_138 = arith.constant 3.200000e+01 : f32
    %176 = vector.broadcast %cst_138 : f32 to vector<8x1xf32>
    %177 = arith.divf %175, %176 : vector<8x1xf32>
    %178 = vector.broadcast %170 : vector<8x1xf32> to vector<8x32xf32>
    %179 = arith.subf %162, %178 : vector<8x32xf32>
    %cst_139 = arith.constant 9.99999974E-6 : f32
    %180 = vector.broadcast %cst_139 : f32 to vector<8x1xf32>
    %181 = arith.addf %177, %180 : vector<8x1xf32>
    %182 = math.rsqrt %181 : vector<8x1xf32>
    %183 = vector.broadcast %182 : vector<8x1xf32> to vector<8x32xf32>
    %184 = arith.mulf %179, %183 : vector<8x32xf32>
    %185 = vector.broadcast %164 : vector<1x32xf32> to vector<8x32xf32>
    %186 = arith.mulf %184, %185 : vector<8x32xf32>
    %187 = vector.broadcast %166 : vector<1x32xf32> to vector<8x32xf32>
    %188 = arith.addf %186, %187 : vector<8x32xf32>
    %189 = arith.truncf %188 : vector<8x32xf32> to vector<8x32xbf16>
    %c0_140 = arith.constant 0 : index
    %c0_141 = arith.constant 0 : index
    %c0_142 = arith.constant 0 : index
    %190 = vector.load %arg17[%c0_140, %c0_141, %c0_142] : memref<1x32x64xbf16, #tpu.memory_space<vmem>>, vector<1x32x64xbf16>
    %191 = vector.shape_cast %190 : vector<1x32x64xbf16> to vector<32x64xbf16>
    %cst_143 = arith.constant dense<0.000000e+00> : vector<8x64xf32>
    %192 = tpu.matmul %189, %191, %cst_143 {dimension_numbers = #tpu.dot_dimension_numbers<[1], [0], [0], [1], [0, 0, 1, 1], [], []>} : vector<8x32xbf16>, vector<32x64xbf16>, vector<8x64xf32> -> vector<8x64xf32>
    %c0_144 = arith.constant 0 : index
    %c0_145 = arith.constant 0 : index
    %c0_146 = arith.constant 0 : index
    %193 = vector.load %arg18[%c0_144, %c0_145, %c0_146] : memref<1x1x64xf32, #tpu.memory_space<vmem>>, vector<1x1x64xf32>
    %194 = vector.shape_cast %193 : vector<1x1x64xf32> to vector<1x64xf32>
    %195 = vector.broadcast %194 : vector<1x64xf32> to vector<8x64xf32>
    %196 = arith.addf %192, %195 : vector<8x64xf32>
    %cst_147 = arith.constant 0.000000e+00 : f32
    %197 = vector.broadcast %cst_147 : f32 to vector<8x64xf32>
    %198 = arith.maximumf %196, %197 : vector<8x64xf32>
    %199 = arith.truncf %198 : vector<8x64xf32> to vector<8x64xbf16>
    %c0_148 = arith.constant 0 : index
    %c0_149 = arith.constant 0 : index
    %c0_150 = arith.constant 0 : index
    %200 = vector.load %arg19[%c0_148, %c0_149, %c0_150] : memref<1x64x32xbf16, #tpu.memory_space<vmem>>, vector<1x64x32xbf16>
    %201 = vector.shape_cast %200 : vector<1x64x32xbf16> to vector<64x32xbf16>
    %cst_151 = arith.constant dense<0.000000e+00> : vector<8x32xf32>
    %202 = tpu.matmul %199, %201, %cst_151 {dimension_numbers = #tpu.dot_dimension_numbers<[1], [0], [0], [1], [0, 0, 1, 1], [], []>} : vector<8x64xbf16>, vector<64x32xbf16>, vector<8x32xf32> -> vector<8x32xf32>
    %c0_152 = arith.constant 0 : index
    %c0_153 = arith.constant 0 : index
    %c0_154 = arith.constant 0 : index
    %203 = vector.load %arg20[%c0_152, %c0_153, %c0_154] : memref<1x1x32xf32, #tpu.memory_space<vmem>>, vector<1x1x32xf32>
    %204 = vector.shape_cast %203 : vector<1x1x32xf32> to vector<1x32xf32>
    %205 = vector.broadcast %204 : vector<1x32xf32> to vector<8x32xf32>
    %206 = arith.addf %202, %205 : vector<8x32xf32>
    %207 = arith.addf %188, %206 : vector<8x32xf32>
    %c0_155 = arith.constant 0 : index
    %c0_156 = arith.constant 0 : index
    %c0_157 = arith.constant 0 : index
    %208 = vector.load %arg15[%c0_155, %c0_156, %c0_157] : memref<1x1x32xf32, #tpu.memory_space<vmem>>, vector<1x1x32xf32>
    %209 = vector.shape_cast %208 : vector<1x1x32xf32> to vector<1x32xf32>
    %c0_158 = arith.constant 0 : index
    %c0_159 = arith.constant 0 : index
    %c0_160 = arith.constant 0 : index
    %210 = vector.load %arg16[%c0_158, %c0_159, %c0_160] : memref<1x1x32xf32, #tpu.memory_space<vmem>>, vector<1x1x32xf32>
    %211 = vector.shape_cast %210 : vector<1x1x32xf32> to vector<1x32xf32>
    %cst_161 = arith.constant dense<0.000000e+00> : vector<8xf32>
    %212 = vector.multi_reduction <add>, %207, %cst_161 [1] : vector<8x32xf32> to vector<8xf32>
    %213 = vector.shape_cast %212 : vector<8xf32> to vector<8x1xf32>
    %cst_162 = arith.constant 3.200000e+01 : f32
    %214 = vector.broadcast %cst_162 : f32 to vector<8x1xf32>
    %215 = arith.divf %213, %214 : vector<8x1xf32>
    %216 = vector.broadcast %215 : vector<8x1xf32> to vector<8x32xf32>
    %217 = arith.subf %207, %216 : vector<8x32xf32>
    %218 = arith.mulf %217, %217 : vector<8x32xf32>
    %cst_163 = arith.constant dense<0.000000e+00> : vector<8xf32>
    %219 = vector.multi_reduction <add>, %218, %cst_163 [1] : vector<8x32xf32> to vector<8xf32>
    %220 = vector.shape_cast %219 : vector<8xf32> to vector<8x1xf32>
    %cst_164 = arith.constant 3.200000e+01 : f32
    %221 = vector.broadcast %cst_164 : f32 to vector<8x1xf32>
    %222 = arith.divf %220, %221 : vector<8x1xf32>
    %223 = vector.broadcast %215 : vector<8x1xf32> to vector<8x32xf32>
    %224 = arith.subf %207, %223 : vector<8x32xf32>
    %cst_165 = arith.constant 9.99999974E-6 : f32
    %225 = vector.broadcast %cst_165 : f32 to vector<8x1xf32>
    %226 = arith.addf %222, %225 : vector<8x1xf32>
    %227 = math.rsqrt %226 : vector<8x1xf32>
    %228 = vector.broadcast %227 : vector<8x1xf32> to vector<8x32xf32>
    %229 = arith.mulf %224, %228 : vector<8x32xf32>
    %230 = vector.broadcast %209 : vector<1x32xf32> to vector<8x32xf32>
    %231 = arith.mulf %229, %230 : vector<8x32xf32>
    %232 = vector.broadcast %211 : vector<1x32xf32> to vector<8x32xf32>
    %233 = arith.addf %231, %232 : vector<8x32xf32>
    %c0_166 = arith.constant 0 : index
    %c0_167 = arith.constant 0 : index
    %234 = vector.load %arg22[%c0_166, %c0_167] : memref<8x32xf32, #tpu.memory_space<vmem>>, vector<8x32xf32>
    tpu.vector_store %arg22[%c0_166, %c0_167], %233 {strides = array<i32>} : memref<8x32xf32, #tpu.memory_space<vmem>>, vector<8x32xf32>,
    %c1_i32 = arith.constant 1 : i32
    %235 = arith.cmpi eq, %arg1, %c1_i32 : i32
    %236 = arith.extui %235 : i1 to i32
    %c0_i32_168 = arith.constant 0 : i32
    %237 = arith.cmpi ne, %236, %c0_i32_168 : i32
    scf.if %237 {
      %c0_169 = arith.constant 0 : index
      %c0_170 = arith.constant 0 : index
      %c0_171 = arith.constant 0 : index
      %238 = vector.load %arg21[%c0_169, %c0_170, %c0_171] : memref<1x8x32xf32, #tpu.memory_space<vmem>>, vector<1x8x32xf32>
      %239 = vector.shape_cast %238 : vector<1x8x32xf32> to vector<8x32xf32>
      %240 = vector.shape_cast %233 : vector<8x32xf32> to vector<1x8x32xf32>
      tpu.vector_store %arg21[%c0_169, %c0_170, %c0_171], %240 {strides = array<i32>} : memref<1x8x32xf32, #tpu.memory_space<vmem>>, vector<1x8x32xf32>,
    } else {
    }
    return
  }
  func.func @transform_0(%arg0: i32, %arg1: i32) -> (i32, i32, i32) {
    %c0_i32 = arith.constant 0 : i32
    %c0_i32_0 = arith.constant 0 : i32
    %c0_i32_1 = arith.constant 0 : i32
    return %arg0, %c0_i32, %c0_i32_0 : i32, i32, i32
  }
  func.func @transform_1(%arg0: i32, %arg1: i32) -> (i32, i32) {
    %c0_i32 = arith.constant 0 : i32
    %c0_i32_0 = arith.constant 0 : i32
    %c0_i32_1 = arith.constant 0 : i32
    return %c0_i32, %c0_i32_0 : i32, i32
  }
  func.func @transform_2(%arg0: i32, %arg1: i32) -> (i32, i32) {
    %c0_i32 = arith.constant 0 : i32
    %c0_i32_0 = arith.constant 0 : i32
    %c0_i32_1 = arith.constant 0 : i32
    return %c0_i32, %c0_i32_0 : i32, i32
  }
  func.func @transform_3(%arg0: i32, %arg1: i32) -> (i32, i32, i32, i32) {
    %c0_i32 = arith.constant 0 : i32
    %c0_i32_0 = arith.constant 0 : i32
    %c0_i32_1 = arith.constant 0 : i32
    %c0_i32_2 = arith.constant 0 : i32
    return %arg1, %c0_i32, %c0_i32_0, %c0_i32_1 : i32, i32, i32, i32
  }
  func.func @transform_4(%arg0: i32, %arg1: i32) -> (i32, i32, i32, i32) {
    %c0_i32 = arith.constant 0 : i32
    %c0_i32_0 = arith.constant 0 : i32
    %c0_i32_1 = arith.constant 0 : i32
    %c0_i32_2 = arith.constant 0 : i32
    return %arg1, %c0_i32, %c0_i32_0, %c0_i32_1 : i32, i32, i32, i32
  }
  func.func @transform_5(%arg0: i32, %arg1: i32) -> (i32, i32, i32, i32) {
    %c0_i32 = arith.constant 0 : i32
    %c0_i32_0 = arith.constant 0 : i32
    %c0_i32_1 = arith.constant 0 : i32
    %c0_i32_2 = arith.constant 0 : i32
    return %arg1, %c0_i32, %c0_i32_0, %c0_i32_1 : i32, i32, i32, i32
  }
  func.func @transform_6(%arg0: i32, %arg1: i32) -> (i32, i32, i32, i32) {
    %c0_i32 = arith.constant 0 : i32
    %c0_i32_0 = arith.constant 0 : i32
    %c0_i32_1 = arith.constant 0 : i32
    %c0_i32_2 = arith.constant 0 : i32
    return %arg1, %c0_i32, %c0_i32_0, %c0_i32_1 : i32, i32, i32, i32
  }
  func.func @transform_7(%arg0: i32, %arg1: i32) -> (i32, i32, i32, i32) {
    %c0_i32 = arith.constant 0 : i32
    %c0_i32_0 = arith.constant 0 : i32
    %c0_i32_1 = arith.constant 0 : i32
    %c0_i32_2 = arith.constant 0 : i32
    return %arg1, %c0_i32, %c0_i32_0, %c0_i32_1 : i32, i32, i32, i32
  }
  func.func @transform_8(%arg0: i32, %arg1: i32) -> (i32, i32, i32, i32) {
    %c0_i32 = arith.constant 0 : i32
    %c0_i32_0 = arith.constant 0 : i32
    %c0_i32_1 = arith.constant 0 : i32
    %c0_i32_2 = arith.constant 0 : i32
    return %arg1, %c0_i32, %c0_i32_0, %c0_i32_1 : i32, i32, i32, i32
  }
  func.func @transform_9(%arg0: i32, %arg1: i32) -> (i32, i32, i32) {
    %c0_i32 = arith.constant 0 : i32
    %c0_i32_0 = arith.constant 0 : i32
    %c0_i32_1 = arith.constant 0 : i32
    return %arg1, %c0_i32, %c0_i32_0 : i32, i32, i32
  }
  func.func @transform_10(%arg0: i32, %arg1: i32) -> (i32, i32, i32) {
    %c0_i32 = arith.constant 0 : i32
    %c0_i32_0 = arith.constant 0 : i32
    %c0_i32_1 = arith.constant 0 : i32
    return %arg1, %c0_i32, %c0_i32_0 : i32, i32, i32
  }
  func.func @transform_11(%arg0: i32, %arg1: i32) -> (i32, i32, i32) {
    %c0_i32 = arith.constant 0 : i32
    %c0_i32_0 = arith.constant 0 : i32
    %c0_i32_1 = arith.constant 0 : i32
    return %arg1, %c0_i32, %c0_i32_0 : i32, i32, i32
  }
  func.func @transform_12(%arg0: i32, %arg1: i32) -> (i32, i32, i32) {
    %c0_i32 = arith.constant 0 : i32
    %c0_i32_0 = arith.constant 0 : i32
    %c0_i32_1 = arith.constant 0 : i32
    return %arg1, %c0_i32, %c0_i32_0 : i32, i32, i32
  }
  func.func @transform_13(%arg0: i32, %arg1: i32) -> (i32, i32, i32) {
    %c0_i32 = arith.constant 0 : i32
    %c0_i32_0 = arith.constant 0 : i32
    %c0_i32_1 = arith.constant 0 : i32
    return %arg1, %c0_i32, %c0_i32_0 : i32, i32, i32
  }
  func.func @transform_14(%arg0: i32, %arg1: i32) -> (i32, i32, i32) {
    %c0_i32 = arith.constant 0 : i32
    %c0_i32_0 = arith.constant 0 : i32
    %c0_i32_1 = arith.constant 0 : i32
    return %arg1, %c0_i32, %c0_i32_0 : i32, i32, i32
  }
  func.func @transform_15(%arg0: i32, %arg1: i32) -> (i32, i32, i32) {
    %c0_i32 = arith.constant 0 : i32
    %c0_i32_0 = arith.constant 0 : i32
    %c0_i32_1 = arith.constant 0 : i32
    return %arg1, %c0_i32, %c0_i32_0 : i32, i32, i32
  }
  func.func @transform_16(%arg0: i32, %arg1: i32) -> (i32, i32, i32) {
    %c0_i32 = arith.constant 0 : i32
    %c0_i32_0 = arith.constant 0 : i32
    %c0_i32_1 = arith.constant 0 : i32
    return %arg1, %c0_i32, %c0_i32_0 : i32, i32, i32
  }
  func.func @transform_17(%arg0: i32, %arg1: i32) -> (i32, i32, i32) {
    %c0_i32 = arith.constant 0 : i32
    %c0_i32_0 = arith.constant 0 : i32
    %c0_i32_1 = arith.constant 0 : i32
    return %arg1, %c0_i32, %c0_i32_0 : i32, i32, i32
  }
  func.func @transform_18(%arg0: i32, %arg1: i32) -> (i32, i32, i32) {
    %c0_i32 = arith.constant 0 : i32
    %c0_i32_0 = arith.constant 0 : i32
    %c0_i32_1 = arith.constant 0 : i32
    return %arg1, %c0_i32, %c0_i32_0 : i32, i32, i32
  }
  func.func @transform_19(%arg0: i32, %arg1: i32) -> (i32, i32, i32) {
    %c0_i32 = arith.constant 0 : i32
    %c0_i32_0 = arith.constant 0 : i32
    %c0_i32_1 = arith.constant 0 : i32
    return %arg0, %c0_i32, %c0_i32_0 : i32, i32, i32
  }
}

</mosaic_0001>

<llo_original>
// kernel: tpu_custom_call.1
$region0: #{tpu_custom_call.1}
  #allocation0 [shape = 'u32[]', space=smem, size = 0x4, offset = 0x4, fixed_abs, tag = 'smem constant byte address 0x4 - core index']
  #allocation1 [shape = 'u32[144,128]{1,0:T(1,128)}', space=vmem, size = 0x12000, scoped, tag = 'internal scratch']
  #allocation2 [shape = 'f32[8,32]{1,0:T(8,128)}', space=vmem, size = 0x1000, scoped, tag = 'scratch operand']
  %s0 = inlined_call_operand.vmem [shape: f32[2,8,4], index: 0, kind: input, shape index: {}]
  %s1 = inlined_call_operand.vmem [shape: bf16[4,32], index: 1, kind: input, shape index: {}]
  %s2 = inlined_call_operand.vmem [shape: f32[1,32], index: 2, kind: input, shape index: {}]
  %s3 = inlined_call_operand.vmem [shape: bf16[2,4,32,8], index: 3, kind: input, shape index: {}]
  %s4 = inlined_call_operand.vmem [shape: f32[2,4,1,8], index: 4, kind: input, shape index: {}]
  %s5 = inlined_call_operand.vmem [shape: bf16[2,4,32,8], index: 5, kind: input, shape index: {}]
  %s6 = inlined_call_operand.vmem [shape: f32[2,4,1,8], index: 6, kind: input, shape index: {}]
  %s7 = inlined_call_operand.vmem [shape: bf16[2,4,32,8], index: 7, kind: input, shape index: {}]
  %s8 = inlined_call_operand.vmem [shape: f32[2,4,1,8], index: 8, kind: input, shape index: {}]
  %s9 = inlined_call_operand.vmem [shape: bf16[2,32,32], index: 9, kind: input, shape index: {}]
  %s10 = inlined_call_operand.vmem [shape: f32[2,1,32], index: 10, kind: input, shape index: {}]
  %s11 = inlined_call_operand.vmem [shape: f32[2,1,32], index: 11, kind: input, shape index: {}]
  %s12 = inlined_call_operand.vmem [shape: f32[2,1,32], index: 12, kind: input, shape index: {}]
  %s13 = inlined_call_operand.vmem [shape: f32[2,1,32], index: 13, kind: input, shape index: {}]
  %s14 = inlined_call_operand.vmem [shape: f32[2,1,32], index: 14, kind: input, shape index: {}]
  %s15 = inlined_call_operand.vmem [shape: bf16[2,32,64], index: 15, kind: input, shape index: {}]
  %s16 = inlined_call_operand.vmem [shape: f32[2,1,64], index: 16, kind: input, shape index: {}]
  %s17 = inlined_call_operand.vmem [shape: bf16[2,64,32], index: 17, kind: input, shape index: {}]
  %s18 = inlined_call_operand.vmem [shape: f32[2,1,32], index: 18, kind: input, shape index: {}]
  %s19 = inlined_call_operand.hbm [shape: f32[2,8,32], index: 19, kind: output, shape index: {}]
  %s20 = sld [smem:[#allocation0]]
  $region117: #{tpu_custom_call.1} parent=0
    _
  %s22 = ssub.s32 1, %s20
  %s23 = scalar_select 0, %s22, %s20
  $region1: #{tpu_custom_call.1} parent=0
    #allocation3 [shape = 'u8[8192]{0}', space=vmem, size = 0x2000, scoped, tag = 'output window, operand 0']
    #allocation4 [shape = 's32[2]{0}', space=sflag, size = 0x8, scoped, tag = 'scoped memory for tpu_custom_call.1']
    %24 = vsyncpa [#allocation4], 0
    %s25 = scalar_lea.sflag [#allocation4], 1
    %26 = vsyncpa %s25, 0
    loop: start=0, step=1, limit=6
    $region2: #{tpu_custom_call.1} parent=1 // loop_pre_header
      _
    $region3: #{tpu_custom_call.1} parent=1 // loop_header
      %s28 = sphi 0, %s32
      %p29 = scmp.ge.s32.totalorder %s28, 6
      %s35 = sphi 0, %s47
      %s36 = sphi 0, %s43
      %s37 = sphi 0, %s35
      %s38 = sphi 0, %s36
      %s39 = sphi 0, %s37
      %s40 = sphi 0, %s38
      %s50 = sphi 0, %s52
      %s53 = sphi 0, %s50
      %s54 = sphi 0, %s53
      %s70 = sphi 0, %s54
      %s74 = sphi 0, %s74
      %s76 = sphi 0, %s74
      %s77 = sphi 0, %s76
      %s91 = sphi 0, %s77
      %s95 = sphi 0, %s95
      %s97 = sphi 0, %s95
      %s98 = sphi 0, %s97
      %s112 = sphi 0, %s98
      %s118 = sphi 0, %s120
      %s121 = sphi 0, %s118
      %s122 = sphi 0, %s121
      %s138 = sphi 0, %s122
      %s144 = sphi 0, %s146
      %s147 = sphi 0, %s144
      %s148 = sphi 0, %s147
      %s164 = sphi 0, %s148
      %s170 = sphi 0, %s172
      %s173 = sphi 0, %s170
      %s174 = sphi 0, %s173
      %s190 = sphi 0, %s174
      %s196 = sphi 0, %s198
      %s199 = sphi 0, %s196
      %s200 = sphi 0, %s199
      %s216 = sphi 0, %s200
      %s222 = sphi 0, %s224
      %s225 = sphi 0, %s222
      %s226 = sphi 0, %s225
      %s242 = sphi 0, %s226
      %s248 = sphi 0, %s250
      %s251 = sphi 0, %s248
      %s252 = sphi 0, %s251
      %s268 = sphi 0, %s252
      %s274 = sphi 0, %s276
      %s277 = sphi 0, %s274
      %s278 = sphi 0, %s277
      %s294 = sphi 0, %s278
      %s300 = sphi 0, %s302
      %s303 = sphi 0, %s300
      %s304 = sphi 0, %s303
      %s320 = sphi 0, %s304
      %s326 = sphi 0, %s328
      %s329 = sphi 0, %s326
      %s330 = sphi 0, %s329
      %s346 = sphi 0, %s330
      %s352 = sphi 0, %s354
      %s355 = sphi 0, %s352
      %s356 = sphi 0, %s355
      %s372 = sphi 0, %s356
      %s378 = sphi 0, %s380
      %s381 = sphi 0, %s378
      %s382 = sphi 0, %s381
      %s398 = sphi 0, %s382
      %s404 = sphi 0, %s406
      %s407 = sphi 0, %s404
      %s408 = sphi 0, %s407
      %s424 = sphi 0, %s408
      %s430 = sphi 0, %s432
      %s433 = sphi 0, %s430
      %s434 = sphi 0, %s433
      %s450 = sphi 0, %s434
      %s456 = sphi 0, %s458
      %s459 = sphi 0, %s456
      %s460 = sphi 0, %s459
      %s476 = sphi 0, %s460
      %s482 = sphi 0, %s484
      %s485 = sphi 0, %s482
      %s486 = sphi 0, %s485
      %s502 = sphi 0, %s486
      %s508 = sphi 0, %s510
      %s511 = sphi 0, %s508
      %s512 = sphi 0, %s511
      %s528 = sphi 0, %s512
      %s534 = sphi 0, %s536
      %s537 = sphi 0, %s534
      %s538 = sphi 0, %s537
      %s554 = sphi 0, %s538
    $region4: #{tpu_custom_call.1} parent=1 // loop_header_branch
      %31 = sbr.rel (%p29) target = $region8
    $region5: #{tpu_custom_call.1} parent=1 // loop_body
      %s33 = ssub.s32 %s28, 1
      %s34 = ssub.s32 %s28, 2
      %s41 = sadd.s32 1, %s36
      %p42 = scmp.ge.s32.totalorder %s41, 2
      %s43 = scalar_select %p42, 0, %s41
      %s44 = sadd.s32 1, %s35
      %s45 = scalar_select %p42, %s44, %s35
      %p46 = scmp.ge.s32.totalorder %s45, 2
      %s47 = scalar_select %p46, 0, %s45
      %s48 = ssub.s32 %s35, %s47
      %p49 = scmp.eq.s32.totalorder %s48, 0
      %s51 = sadd.s32 %s50, 1
      %s52 = scalar_select %p49, %s50, %s51
      %p55 = pneg %p49
      %p56 = scmp.eq.s32.totalorder %s28, 3
      %p57 = por %p55, %p56
      %p58 = scmp.ne.s32.totalorder %s50, %s53
      %p59 = scmp.eq.s32.totalorder %s28, 0
      %p60 = por %p58, %p59
      %p61 = scmp.ne.s32.totalorder %s50, %s53
      %p62 = scmp.eq.s32.totalorder %s33, 3
      %p63 = por %p61, %p62
      %p64 = scmp.ne.s32.totalorder %s53, %s54
      %p65 = scmp.eq.s32.totalorder %s33, 0
      %p66 = por %p64, %p65
      %p67 = scmp.ne.s32.totalorder %s53, %s54
      %p68 = scmp.eq.s32.totalorder %s34, 3
      %p69 = por %p67, %p68
      %p71 = scmp.ne.s32.totalorder %s54, %s70
      %p72 = scmp.eq.s32.totalorder %s34, 0
      %p73 = por %p71, %p72
      %s75 = sadd.s32 %s74, 1
      %p78 = scmp.eq.s32.totalorder %s28, 3
      %p79 = scmp.ne.s32.totalorder %s74, %s76
      %p80 = scmp.eq.s32.totalorder %s28, 0
      %p81 = por %p79, %p80
      %p82 = scmp.ne.s32.totalorder %s74, %s76
      %p83 = scmp.eq.s32.totalorder %s33, 3
      %p84 = por %p82, %p83
      %p85 = scmp.ne.s32.totalorder %s76, %s77
      %p86 = scmp.eq.s32.totalorder %s33, 0
      %p87 = por %p85, %p86
      %p88 = scmp.ne.s32.totalorder %s76, %s77
      %p89 = scmp.eq.s32.totalorder %s34, 3
      %p90 = por %p88, %p89
      %p92 = scmp.ne.s32.totalorder %s77, %s91
      %p93 = scmp.eq.s32.totalorder %s34, 0
      %p94 = por %p92, %p93
      %s96 = sadd.s32 %s95, 1
      %p99 = scmp.eq.s32.totalorder %s28, 3
      %p100 = scmp.ne.s32.totalorder %s95, %s97
      %p101 = scmp.eq.s32.totalorder %s28, 0
      %p102 = por %p100, %p101
      %p103 = scmp.ne.s32.totalorder %s95, %s97
      %p104 = scmp.eq.s32.totalorder %s33, 3
      %p105 = por %p103, %p104
      %p106 = scmp.ne.s32.totalorder %s97, %s98
      %p107 = scmp.eq.s32.totalorder %s33, 0
      %p108 = por %p106, %p107
      %p109 = scmp.ne.s32.totalorder %s97, %s98
      %p110 = scmp.eq.s32.totalorder %s34, 3
      %p111 = por %p109, %p110
      %p113 = scmp.ne.s32.totalorder %s98, %s112
      %p114 = scmp.eq.s32.totalorder %s34, 0
      %p115 = por %p113, %p114
      %s116 = ssub.s32 %s36, %s43
      %p117 = scmp.eq.s32.totalorder %s116, 0
      %s119 = sadd.s32 %s118, 1
      %s120 = scalar_select %p117, %s118, %s119
      %p123 = pneg %p117
      %p124 = scmp.eq.s32.totalorder %s28, 3
      %p125 = por %p123, %p124
      %p126 = scmp.ne.s32.totalorder %s118, %s121
      %p127 = scmp.eq.s32.totalorder %s28, 0
      %p128 = por %p126, %p127
      %p129 = scmp.ne.s32.totalorder %s118, %s121
      %p130 = scmp.eq.s32.totalorder %s33, 3
      %p131 = por %p129, %p130
      %p132 = scmp.ne.s32.totalorder %s121, %s122
      %p133 = scmp.eq.s32.totalorder %s33, 0
      %p134 = por %p132, %p133
      %p135 = scmp.ne.s32.totalorder %s121, %s122
      %p136 = scmp.eq.s32.totalorder %s34, 3
      %p137 = por %p135, %p136
      %p139 = scmp.ne.s32.totalorder %s122, %s138
      %p140 = scmp.eq.s32.totalorder %s34, 0
      %p141 = por %p139, %p140
      %s142 = ssub.s32 %s36, %s43
      %p143 = scmp.eq.s32.totalorder %s142, 0
      %s145 = sadd.s32 %s144, 1
      %s146 = scalar_select %p143, %s144, %s145
      %p149 = pneg %p143
      %p150 = scmp.eq.s32.totalorder %s28, 3
      %p151 = por %p149, %p150
      %p152 = scmp.ne.s32.totalorder %s144, %s147
      %p153 = scmp.eq.s32.totalorder %s28, 0
      %p154 = por %p152, %p153
      %p155 = scmp.ne.s32.totalorder %s144, %s147
      %p156 = scmp.eq.s32.totalorder %s33, 3
      %p157 = por %p155, %p156
      %p158 = scmp.ne.s32.totalorder %s147, %s148
      %p159 = scmp.eq.s32.totalorder %s33, 0
      %p160 = por %p158, %p159
      %p161 = scmp.ne.s32.totalorder %s147, %s148
      %p162 = scmp.eq.s32.totalorder %s34, 3
      %p163 = por %p161, %p162
      %p165 = scmp.ne.s32.totalorder %s148, %s164
      %p166 = scmp.eq.s32.totalorder %s34, 0
      %p167 = por %p165, %p166
      %s168 = ssub.s32 %s36, %s43
      %p169 = scmp.eq.s32.totalorder %s168, 0
      %s171 = sadd.s32 %s170, 1
      %s172 = scalar_select %p169, %s170, %s171
      %p175 = pneg %p169
      %p176 = scmp.eq.s32.totalorder %s28, 3
      %p177 = por %p175, %p176
      %p178 = scmp.ne.s32.totalorder %s170, %s173
      %p179 = scmp.eq.s32.totalorder %s28, 0
      %p180 = por %p178, %p179
      %p181 = scmp.ne.s32.totalorder %s170, %s173
      %p182 = scmp.eq.s32.totalorder %s33, 3
      %p183 = por %p181, %p182
      %p184 = scmp.ne.s32.totalorder %s173, %s174
      %p185 = scmp.eq.s32.totalorder %s33, 0
      %p186 = por %p184, %p185
      %p187 = scmp.ne.s32.totalorder %s173, %s174
      %p188 = scmp.eq.s32.totalorder %s34, 3
      %p189 = por %p187, %p188
      %p191 = scmp.ne.s32.totalorder %s174, %s190
      %p192 = scmp.eq.s32.totalorder %s34, 0
      %p193 = por %p191, %p192
      %s194 = ssub.s32 %s36, %s43
      %p195 = scmp.eq.s32.totalorder %s194, 0
      %s197 = sadd.s32 %s196, 1
      %s198 = scalar_select %p195, %s196, %s197
      %p201 = pneg %p195
      %p202 = scmp.eq.s32.totalorder %s28, 3
      %p203 = por %p201, %p202
      %p204 = scmp.ne.s32.totalorder %s196, %s199
      %p205 = scmp.eq.s32.totalorder %s28, 0
      %p206 = por %p204, %p205
      %p207 = scmp.ne.s32.totalorder %s196, %s199
      %p208 = scmp.eq.s32.totalorder %s33, 3
      %p209 = por %p207, %p208
      %p210 = scmp.ne.s32.totalorder %s199, %s200
      %p211 = scmp.eq.s32.totalorder %s33, 0
      %p212 = por %p210, %p211
      %p213 = scmp.ne.s32.totalorder %s199, %s200
      %p214 = scmp.eq.s32.totalorder %s34, 3
      %p215 = por %p213, %p214
      %p217 = scmp.ne.s32.totalorder %s200, %s216
      %p218 = scmp.eq.s32.totalorder %s34, 0
      %p219 = por %p217, %p218
      %s220 = ssub.s32 %s36, %s43
      %p221 = scmp.eq.s32.totalorder %s220, 0
      %s223 = sadd.s32 %s222, 1
      %s224 = scalar_select %p221, %s222, %s223
      %p227 = pneg %p221
      %p228 = scmp.eq.s32.totalorder %s28, 3
      %p229 = por %p227, %p228
      %p230 = scmp.ne.s32.totalorder %s222, %s225
      %p231 = scmp.eq.s32.totalorder %s28, 0
      %p232 = por %p230, %p231
      %p233 = scmp.ne.s32.totalorder %s222, %s225
      %p234 = scmp.eq.s32.totalorder %s33, 3
      %p235 = por %p233, %p234
      %p236 = scmp.ne.s32.totalorder %s225, %s226
      %p237 = scmp.eq.s32.totalorder %s33, 0
      %p238 = por %p236, %p237
      %p239 = scmp.ne.s32.totalorder %s225, %s226
      %p240 = scmp.eq.s32.totalorder %s34, 3
      %p241 = por %p239, %p240
      %p243 = scmp.ne.s32.totalorder %s226, %s242
      %p244 = scmp.eq.s32.totalorder %s34, 0
      %p245 = por %p243, %p244
      %s246 = ssub.s32 %s36, %s43
      %p247 = scmp.eq.s32.totalorder %s246, 0
      %s249 = sadd.s32 %s248, 1
      %s250 = scalar_select %p247, %s248, %s249
      %p253 = pneg %p247
      %p254 = scmp.eq.s32.totalorder %s28, 3
      %p255 = por %p253, %p254
      %p256 = scmp.ne.s32.totalorder %s248, %s251
      %p257 = scmp.eq.s32.totalorder %s28, 0
      %p258 = por %p256, %p257
      %p259 = scmp.ne.s32.totalorder %s248, %s251
      %p260 = scmp.eq.s32.totalorder %s33, 3
      %p261 = por %p259, %p260
      %p262 = scmp.ne.s32.totalorder %s251, %s252
      %p263 = scmp.eq.s32.totalorder %s33, 0
      %p264 = por %p262, %p263
      %p265 = scmp.ne.s32.totalorder %s251, %s252
      %p266 = scmp.eq.s32.totalorder %s34, 3
      %p267 = por %p265, %p266
      %p269 = scmp.ne.s32.totalorder %s252, %s268
      %p270 = scmp.eq.s32.totalorder %s34, 0
      %p271 = por %p269, %p270
      %s272 = ssub.s32 %s36, %s43
      %p273 = scmp.eq.s32.totalorder %s272, 0
      %s275 = sadd.s32 %s274, 1
      %s276 = scalar_select %p273, %s274, %s275
      %p279 = pneg %p273
      %p280 = scmp.eq.s32.totalorder %s28, 3
      %p281 = por %p279, %p280
      %p282 = scmp.ne.s32.totalorder %s274, %s277
      %p283 = scmp.eq.s32.totalorder %s28, 0
      %p284 = por %p282, %p283
      %p285 = scmp.ne.s32.totalorder %s274, %s277
      %p286 = scmp.eq.s32.totalorder %s33, 3
      %p287 = por %p285, %p286
      %p288 = scmp.ne.s32.totalorder %s277, %s278
      %p289 = scmp.eq.s32.totalorder %s33, 0
      %p290 = por %p288, %p289
      %p291 = scmp.ne.s32.totalorder %s277, %s278
      %p292 = scmp.eq.s32.totalorder %s34, 3
      %p293 = por %p291, %p292
      %p295 = scmp.ne.s32.totalorder %s278, %s294
      %p296 = scmp.eq.s32.totalorder %s34, 0
      %p297 = por %p295, %p296
      %s298 = ssub.s32 %s36, %s43
      %p299 = scmp.eq.s32.totalorder %s298, 0
      %s301 = sadd.s32 %s300, 1
      %s302 = scalar_select %p299, %s300, %s301
      %p305 = pneg %p299
      %p306 = scmp.eq.s32.totalorder %s28, 3
      %p307 = por %p305, %p306
      %p308 = scmp.ne.s32.totalorder %s300, %s303
      %p309 = scmp.eq.s32.totalorder %s28, 0
      %p310 = por %p308, %p309
      %p311 = scmp.ne.s32.totalorder %s300, %s303
      %p312 = scmp.eq.s32.totalorder %s33, 3
      %p313 = por %p311, %p312
      %p314 = scmp.ne.s32.totalorder %s303, %s304
      %p315 = scmp.eq.s32.totalorder %s33, 0
      %p316 = por %p314, %p315
      %p317 = scmp.ne.s32.totalorder %s303, %s304
      %p318 = scmp.eq.s32.totalorder %s34, 3
      %p319 = por %p317, %p318
      %p321 = scmp.ne.s32.totalorder %s304, %s320
      %p322 = scmp.eq.s32.totalorder %s34, 0
      %p323 = por %p321, %p322
      %s324 = ssub.s32 %s36, %s43
      %p325 = scmp.eq.s32.totalorder %s324, 0
      %s327 = sadd.s32 %s326, 1
      %s328 = scalar_select %p325, %s326, %s327
      %p331 = pneg %p325
      %p332 = scmp.eq.s32.totalorder %s28, 3
      %p333 = por %p331, %p332
      %p334 = scmp.ne.s32.totalorder %s326, %s329
      %p335 = scmp.eq.s32.totalorder %s28, 0
      %p336 = por %p334, %p335
      %p337 = scmp.ne.s32.totalorder %s326, %s329
      %p338 = scmp.eq.s32.totalorder %s33, 3
      %p339 = por %p337, %p338
      %p340 = scmp.ne.s32.totalorder %s329, %s330
      %p341 = scmp.eq.s32.totalorder %s33, 0
      %p342 = por %p340, %p341
      %p343 = scmp.ne.s32.totalorder %s329, %s330
      %p344 = scmp.eq.s32.totalorder %s34, 3
      %p345 = por %p343, %p344
      %p347 = scmp.ne.s32.totalorder %s330, %s346
      %p348 = scmp.eq.s32.totalorder %s34, 0
      %p349 = por %p347, %p348
      %s350 = ssub.s32 %s36, %s43
      %p351 = scmp.eq.s32.totalorder %s350, 0
      %s353 = sadd.s32 %s352, 1
      %s354 = scalar_select %p351, %s352, %s353
      %p357 = pneg %p351
      %p358 = scmp.eq.s32.totalorder %s28, 3
      %p359 = por %p357, %p358
      %p360 = scmp.ne.s32.totalorder %s352, %s355
      %p361 = scmp.eq.s32.totalorder %s28, 0
      %p362 = por %p360, %p361
      %p363 = scmp.ne.s32.totalorder %s352, %s355
      %p364 = scmp.eq.s32.totalorder %s33, 3
      %p365 = por %p363, %p364
      %p366 = scmp.ne.s32.totalorder %s355, %s356
      %p367 = scmp.eq.s32.totalorder %s33, 0
      %p368 = por %p366, %p367
      %p369 = scmp.ne.s32.totalorder %s355, %s356
      %p370 = scmp.eq.s32.totalorder %s34, 3
      %p371 = por %p369, %p370
      %p373 = scmp.ne.s32.totalorder %s356, %s372
      %p374 = scmp.eq.s32.totalorder %s34, 0
      %p375 = por %p373, %p374
      %s376 = ssub.s32 %s36, %s43
      %p377 = scmp.eq.s32.totalorder %s376, 0
      %s379 = sadd.s32 %s378, 1
      %s380 = scalar_select %p377, %s378, %s379
      %p383 = pneg %p377
      %p384 = scmp.eq.s32.totalorder %s28, 3
      %p385 = por %p383, %p384
      %p386 = scmp.ne.s32.totalorder %s378, %s381
      %p387 = scmp.eq.s32.totalorder %s28, 0
      %p388 = por %p386, %p387
      %p389 = scmp.ne.s32.totalorder %s378, %s381
      %p390 = scmp.eq.s32.totalorder %s33, 3
      %p391 = por %p389, %p390
      %p392 = scmp.ne.s32.totalorder %s381, %s382
      %p393 = scmp.eq.s32.totalorder %s33, 0
      %p394 = por %p392, %p393
      %p395 = scmp.ne.s32.totalorder %s381, %s382
      %p396 = scmp.eq.s32.totalorder %s34, 3
      %p397 = por %p395, %p396
      %p399 = scmp.ne.s32.totalorder %s382, %s398
      %p400 = scmp.eq.s32.totalorder %s34, 0
      %p401 = por %p399, %p400
      %s402 = ssub.s32 %s36, %s43
      %p403 = scmp.eq.s32.totalorder %s402, 0
      %s405 = sadd.s32 %s404, 1
      %s406 = scalar_select %p403, %s404, %s405
      %p409 = pneg %p403
      %p410 = scmp.eq.s32.totalorder %s28, 3
      %p411 = por %p409, %p410
      %p412 = scmp.ne.s32.totalorder %s404, %s407
      %p413 = scmp.eq.s32.totalorder %s28, 0
      %p414 = por %p412, %p413
      %p415 = scmp.ne.s32.totalorder %s404, %s407
      %p416 = scmp.eq.s32.totalorder %s33, 3
      %p417 = por %p415, %p416
      %p418 = scmp.ne.s32.totalorder %s407, %s408
      %p419 = scmp.eq.s32.totalorder %s33, 0
      %p420 = por %p418, %p419
      %p421 = scmp.ne.s32.totalorder %s407, %s408
      %p422 = scmp.eq.s32.totalorder %s34, 3
      %p423 = por %p421, %p422
      %p425 = scmp.ne.s32.totalorder %s408, %s424
      %p426 = scmp.eq.s32.totalorder %s34, 0
      %p427 = por %p425, %p426
      %s428 = ssub.s32 %s36, %s43
      %p429 = scmp.eq.s32.totalorder %s428, 0
      %s431 = sadd.s32 %s430, 1
      %s432 = scalar_select %p429, %s430, %s431
      %p435 = pneg %p429
      %p436 = scmp.eq.s32.totalorder %s28, 3
      %p437 = por %p435, %p436
      %p438 = scmp.ne.s32.totalorder %s430, %s433
      %p439 = scmp.eq.s32.totalorder %s28, 0
      %p440 = por %p438, %p439
      %p441 = scmp.ne.s32.totalorder %s430, %s433
      %p442 = scmp.eq.s32.totalorder %s33, 3
      %p443 = por %p441, %p442
      %p444 = scmp.ne.s32.totalorder %s433, %s434
      %p445 = scmp.eq.s32.totalorder %s33, 0
      %p446 = por %p444, %p445
      %p447 = scmp.ne.s32.totalorder %s433, %s434
      %p448 = scmp.eq.s32.totalorder %s34, 3
      %p449 = por %p447, %p448
      %p451 = scmp.ne.s32.totalorder %s434, %s450
      %p452 = scmp.eq.s32.totalorder %s34, 0
      %p453 = por %p451, %p452
      %s454 = ssub.s32 %s36, %s43
      %p455 = scmp.eq.s32.totalorder %s454, 0
      %s457 = sadd.s32 %s456, 1
      %s458 = scalar_select %p455, %s456, %s457
      %p461 = pneg %p455
      %p462 = scmp.eq.s32.totalorder %s28, 3
      %p463 = por %p461, %p462
      %p464 = scmp.ne.s32.totalorder %s456, %s459
      %p465 = scmp.eq.s32.totalorder %s28, 0
      %p466 = por %p464, %p465
      %p467 = scmp.ne.s32.totalorder %s456, %s459
      %p468 = scmp.eq.s32.totalorder %s33, 3
      %p469 = por %p467, %p468
      %p470 = scmp.ne.s32.totalorder %s459, %s460
      %p471 = scmp.eq.s32.totalorder %s33, 0
      %p472 = por %p470, %p471
      %p473 = scmp.ne.s32.totalorder %s459, %s460
      %p474 = scmp.eq.s32.totalorder %s34, 3
      %p475 = por %p473, %p474
      %p477 = scmp.ne.s32.totalorder %s460, %s476
      %p478 = scmp.eq.s32.totalorder %s34, 0
      %p479 = por %p477, %p478
      %s480 = ssub.s32 %s36, %s43
      %p481 = scmp.eq.s32.totalorder %s480, 0
      %s483 = sadd.s32 %s482, 1
      %s484 = scalar_select %p481, %s482, %s483
      %p487 = pneg %p481
      %p488 = scmp.eq.s32.totalorder %s28, 3
      %p489 = por %p487, %p488
      %p490 = scmp.ne.s32.totalorder %s482, %s485
      %p491 = scmp.eq.s32.totalorder %s28, 0
      %p492 = por %p490, %p491
      %p493 = scmp.ne.s32.totalorder %s482, %s485
      %p494 = scmp.eq.s32.totalorder %s33, 3
      %p495 = por %p493, %p494
      %p496 = scmp.ne.s32.totalorder %s485, %s486
      %p497 = scmp.eq.s32.totalorder %s33, 0
      %p498 = por %p496, %p497
      %p499 = scmp.ne.s32.totalorder %s485, %s486
      %p500 = scmp.eq.s32.totalorder %s34, 3
      %p501 = por %p499, %p500
      %p503 = scmp.ne.s32.totalorder %s486, %s502
      %p504 = scmp.eq.s32.totalorder %s34, 0
      %p505 = por %p503, %p504
      %s506 = ssub.s32 %s36, %s43
      %p507 = scmp.eq.s32.totalorder %s506, 0
      %s509 = sadd.s32 %s508, 1
      %s510 = scalar_select %p507, %s508, %s509
      %p513 = pneg %p507
      %p514 = scmp.eq.s32.totalorder %s28, 3
      %p515 = por %p513, %p514
      %p516 = scmp.ne.s32.totalorder %s508, %s511
      %p517 = scmp.eq.s32.totalorder %s28, 0
      %p518 = por %p516, %p517
      %p519 = scmp.ne.s32.totalorder %s508, %s511
      %p520 = scmp.eq.s32.totalorder %s33, 3
      %p521 = por %p519, %p520
      %p522 = scmp.ne.s32.totalorder %s511, %s512
      %p523 = scmp.eq.s32.totalorder %s33, 0
      %p524 = por %p522, %p523
      %p525 = scmp.ne.s32.totalorder %s511, %s512
      %p526 = scmp.eq.s32.totalorder %s34, 3
      %p527 = por %p525, %p526
      %p529 = scmp.ne.s32.totalorder %s512, %s528
      %p530 = scmp.eq.s32.totalorder %s34, 0
      %p531 = por %p529, %p530
      %s532 = ssub.s32 %s35, %s47
      %p533 = scmp.eq.s32.totalorder %s532, 0
      %s535 = sadd.s32 %s534, 1
      %s536 = scalar_select %p533, %s534, %s535
      %p539 = pneg %p533
      %p540 = scmp.eq.s32.totalorder %s28, 3
      %p541 = por %p539, %p540
      %p542 = scmp.ne.s32.totalorder %s534, %s537
      %p543 = scmp.eq.s32.totalorder %s28, 0
      %p544 = por %p542, %p543
      %p545 = scmp.ne.s32.totalorder %s534, %s537
      %p546 = scmp.eq.s32.totalorder %s33, 3
      %p547 = por %p545, %p546
      %p548 = scmp.ne.s32.totalorder %s537, %s538
      %p549 = scmp.eq.s32.totalorder %s33, 0
      %p550 = por %p548, %p549
      %p551 = scmp.ne.s32.totalorder %s537, %s538
      %p552 = scmp.eq.s32.totalorder %s34, 3
      %p553 = por %p551, %p552
      %p555 = scmp.ne.s32.totalorder %s538, %s554
      %p556 = scmp.eq.s32.totalorder %s34, 0
      %p557 = por %p555, %p556
      %p558 = scmp.le.s32.totalorder 1, %s28
      %p559 = scmp.lt.s32.totalorder %s28, 5
      %p560 = pnand %p558, %p559
      %p561 = pneg %p560
      // Predicated region
      $region9: #{tpu_custom_call.1} parent=5 // pred_check
        _
      $region10: #{tpu_custom_call.1} parent=5 // pred_check_branch
        %563 = sbr.rel (%p560) target = $region12
      $region11: #{tpu_custom_call.1} parent=5 // pred_region
        %s564 = ssub.s32 %s28, 1
        // Predicated region
        $region13: #{tpu_custom_call.1} parent=11 // pred_check
          %p565 = pneg %p87
        $region14: #{tpu_custom_call.1} parent=11 // pred_check_branch
          %567 = sbr.rel (%p565) target = $region16
        $region15: #{tpu_custom_call.1} parent=11 // pred_region
          _
        $region16: #{tpu_custom_call.1} parent=11 // pred_fallthru
          _
        // Predicated region
        $region17: #{tpu_custom_call.1} parent=11 // pred_check
          %p568 = pneg %p108
        $region18: #{tpu_custom_call.1} parent=11 // pred_check_branch
          %570 = sbr.rel (%p568) target = $region20
        $region19: #{tpu_custom_call.1} parent=11 // pred_region
          _
        $region20: #{tpu_custom_call.1} parent=11 // pred_fallthru
          _
      $region12: #{tpu_custom_call.1} parent=5 // pred_fallthru
        _
      %p571 = scmp.lt.s32.totalorder %s28, 4
      // Predicated region
      $region21: #{tpu_custom_call.1} parent=5 // pred_check
        %p572 = pneg %p571
      $region22: #{tpu_custom_call.1} parent=5 // pred_check_branch
        %574 = sbr.rel (%p572) target = $region24
      $region23: #{tpu_custom_call.1} parent=5 // pred_region
        // Predicated region
        $region25: #{tpu_custom_call.1} parent=23 // pred_check
          %p575 = pneg %p60
        $region26: #{tpu_custom_call.1} parent=23 // pred_check_branch
          %577 = sbr.rel (%p575) target = $region28
        $region27: #{tpu_custom_call.1} parent=23 // pred_region
          %p578 = scmp.lt.s32.totalorder %s35, 1
          %s579 = scalar_select %p578, %s35, 1
          %s580 = smul.addr %s579, 8
          %s581 = scalar_lea.vmem %s0, %s580
        $region28: #{tpu_custom_call.1} parent=23 // pred_fallthru
          _
        // Predicated region
        $region29: #{tpu_custom_call.1} parent=23 // pred_check
          %p582 = pneg %p128
        $region30: #{tpu_custom_call.1} parent=23 // pred_check_branch
          %584 = sbr.rel (%p582) target = $region32
        $region31: #{tpu_custom_call.1} parent=23 // pred_region
          %p585 = scmp.lt.s32.totalorder %s36, 1
          %s586 = scalar_select %p585, %s36, 1
          %s587 = smul.addr %s586, 16
          %s588 = smul.addr %s587, 4
          %s589 = scalar_lea.vmem %s3, %s588
        $region32: #{tpu_custom_call.1} parent=23 // pred_fallthru
          _
        // Predicated region
        $region33: #{tpu_custom_call.1} parent=23 // pred_check
          %p590 = pneg %p154
        $region34: #{tpu_custom_call.1} parent=23 // pred_check_branch
          %592 = sbr.rel (%p590) target = $region36
        $region35: #{tpu_custom_call.1} parent=23 // pred_region
          %p593 = scmp.lt.s32.totalorder %s36, 1
          %s594 = scalar_select %p593, %s36, 1
          %s595 = smul.addr %s594, 4
          %s596 = scalar_lea.vmem %s4, %s595
        $region36: #{tpu_custom_call.1} parent=23 // pred_fallthru
          _
        // Predicated region
        $region37: #{tpu_custom_call.1} parent=23 // pred_check
          %p597 = pneg %p180
        $region38: #{tpu_custom_call.1} parent=23 // pred_check_branch
          %599 = sbr.rel (%p597) target = $region40
        $region39: #{tpu_custom_call.1} parent=23 // pred_region
          %p600 = scmp.lt.s32.totalorder %s36, 1
          %s601 = scalar_select %p600, %s36, 1
          %s602 = smul.addr %s601, 16
          %s603 = smul.addr %s602, 4
          %s604 = scalar_lea.vmem %s5, %s603
        $region40: #{tpu_custom_call.1} parent=23 // pred_fallthru
          _
        // Predicated region
        $region41: #{tpu_custom_call.1} parent=23 // pred_check
          %p605 = pneg %p206
        $region42: #{tpu_custom_call.1} parent=23 // pred_check_branch
          %607 = sbr.rel (%p605) target = $region44
        $region43: #{tpu_custom_call.1} parent=23 // pred_region
          %p608 = scmp.lt.s32.totalorder %s36, 1
          %s609 = scalar_select %p608, %s36, 1
          %s610 = smul.addr %s609, 4
          %s611 = scalar_lea.vmem %s6, %s610
        $region44: #{tpu_custom_call.1} parent=23 // pred_fallthru
          _
        // Predicated region
        $region45: #{tpu_custom_call.1} parent=23 // pred_check
          %p612 = pneg %p232
        $region46: #{tpu_custom_call.1} parent=23 // pred_check_branch
          %614 = sbr.rel (%p612) target = $region48
        $region47: #{tpu_custom_call.1} parent=23 // pred_region
          %p615 = scmp.lt.s32.totalorder %s36, 1
          %s616 = scalar_select %p615, %s36, 1
          %s617 = smul.addr %s616, 16
          %s618 = smul.addr %s617, 4
          %s619 = scalar_lea.vmem %s7, %s618
        $region48: #{tpu_custom_call.1} parent=23 // pred_fallthru
          _
        // Predicated region
        $region49: #{tpu_custom_call.1} parent=23 // pred_check
          %p620 = pneg %p258
        $region50: #{tpu_custom_call.1} parent=23 // pred_check_branch
          %622 = sbr.rel (%p620) target = $region52
        $region51: #{tpu_custom_call.1} parent=23 // pred_region
          %p623 = scmp.lt.s32.totalorder %s36, 1
          %s624 = scalar_select %p623, %s36, 1
          %s625 = smul.addr %s624, 4
          %s626 = scalar_lea.vmem %s8, %s625
        $region52: #{tpu_custom_call.1} parent=23 // pred_fallthru
          _
        // Predicated region
        $region53: #{tpu_custom_call.1} parent=23 // pred_check
          %p627 = pneg %p284
        $region54: #{tpu_custom_call.1} parent=23 // pred_check_branch
          %629 = sbr.rel (%p627) target = $region56
        $region55: #{tpu_custom_call.1} parent=23 // pred_region
          %p630 = scmp.lt.s32.totalorder %s36, 1
          %s631 = scalar_select %p630, %s36, 1
          %s632 = smul.addr %s631, 4
          %s633 = smul.addr %s632, 4
          %s634 = scalar_lea.vmem %s9, %s633
        $region56: #{tpu_custom_call.1} parent=23 // pred_fallthru
          _
        // Predicated region
        $region57: #{tpu_custom_call.1} parent=23 // pred_check
          %p635 = pneg %p310
        $region58: #{tpu_custom_call.1} parent=23 // pred_check_branch
          %637 = sbr.rel (%p635) target = $region60
        $region59: #{tpu_custom_call.1} parent=23 // pred_region
          %p638 = scmp.lt.s32.totalorder %s36, 1
          %s639 = scalar_select %p638, %s36, 1
          %s640 = scalar_lea.vmem %s10, %s639
        $region60: #{tpu_custom_call.1} parent=23 // pred_fallthru
          _
        // Predicated region
        $region61: #{tpu_custom_call.1} parent=23 // pred_check
          %p641 = pneg %p336
        $region62: #{tpu_custom_call.1} parent=23 // pred_check_branch
          %643 = sbr.rel (%p641) target = $region64
        $region63: #{tpu_custom_call.1} parent=23 // pred_region
          %p644 = scmp.lt.s32.totalorder %s36, 1
          %s645 = scalar_select %p644, %s36, 1
          %s646 = scalar_lea.vmem %s11, %s645
        $region64: #{tpu_custom_call.1} parent=23 // pred_fallthru
          _
        // Predicated region
        $region65: #{tpu_custom_call.1} parent=23 // pred_check
          %p647 = pneg %p362
        $region66: #{tpu_custom_call.1} parent=23 // pred_check_branch
          %649 = sbr.rel (%p647) target = $region68
        $region67: #{tpu_custom_call.1} parent=23 // pred_region
          %p650 = scmp.lt.s32.totalorder %s36, 1
          %s651 = scalar_select %p650, %s36, 1
          %s652 = scalar_lea.vmem %s12, %s651
        $region68: #{tpu_custom_call.1} parent=23 // pred_fallthru
          _
        // Predicated region
        $region69: #{tpu_custom_call.1} parent=23 // pred_check
          %p653 = pneg %p388
        $region70: #{tpu_custom_call.1} parent=23 // pred_check_branch
          %655 = sbr.rel (%p653) target = $region72
        $region71: #{tpu_custom_call.1} parent=23 // pred_region
          %p656 = scmp.lt.s32.totalorder %s36, 1
          %s657 = scalar_select %p656, %s36, 1
          %s658 = scalar_lea.vmem %s13, %s657
        $region72: #{tpu_custom_call.1} parent=23 // pred_fallthru
          _
        // Predicated region
        $region73: #{tpu_custom_call.1} parent=23 // pred_check
          %p659 = pneg %p414
        $region74: #{tpu_custom_call.1} parent=23 // pred_check_branch
          %661 = sbr.rel (%p659) target = $region76
        $region75: #{tpu_custom_call.1} parent=23 // pred_region
          %p662 = scmp.lt.s32.totalorder %s36, 1
          %s663 = scalar_select %p662, %s36, 1
          %s664 = scalar_lea.vmem %s14, %s663
        $region76: #{tpu_custom_call.1} parent=23 // pred_fallthru
          _
        // Predicated region
        $region77: #{tpu_custom_call.1} parent=23 // pred_check
          %p665 = pneg %p440
        $region78: #{tpu_custom_call.1} parent=23 // pred_check_branch
          %667 = sbr.rel (%p665) target = $region80
        $region79: #{tpu_custom_call.1} parent=23 // pred_region
          %p668 = scmp.lt.s32.totalorder %s36, 1
          %s669 = scalar_select %p668, %s36, 1
          %s670 = smul.addr %s669, 4
          %s671 = smul.addr %s670, 4
          %s672 = scalar_lea.vmem %s15, %s671
        $region80: #{tpu_custom_call.1} parent=23 // pred_fallthru
          _
        // Predicated region
        $region81: #{tpu_custom_call.1} parent=23 // pred_check
          %p673 = pneg %p466
        $region82: #{tpu_custom_call.1} parent=23 // pred_check_branch
          %675 = sbr.rel (%p673) target = $region84
        $region83: #{tpu_custom_call.1} parent=23 // pred_region
          %p676 = scmp.lt.s32.totalorder %s36, 1
          %s677 = scalar_select %p676, %s36, 1
          %s678 = scalar_lea.vmem %s16, %s677
        $region84: #{tpu_custom_call.1} parent=23 // pred_fallthru
          _
        // Predicated region
        $region85: #{tpu_custom_call.1} parent=23 // pred_check
          %p679 = pneg %p492
        $region86: #{tpu_custom_call.1} parent=23 // pred_check_branch
          %681 = sbr.rel (%p679) target = $region88
        $region87: #{tpu_custom_call.1} parent=23 // pred_region
          %p682 = scmp.lt.s32.totalorder %s36, 1
          %s683 = scalar_select %p682, %s36, 1
          %s684 = smul.addr %s683, 8
          %s685 = smul.addr %s684, 4
          %s686 = scalar_lea.vmem %s17, %s685
        $region88: #{tpu_custom_call.1} parent=23 // pred_fallthru
          _
        // Predicated region
        $region89: #{tpu_custom_call.1} parent=23 // pred_check
          %p687 = pneg %p518
        $region90: #{tpu_custom_call.1} parent=23 // pred_check_branch
          %689 = sbr.rel (%p687) target = $region92
        $region91: #{tpu_custom_call.1} parent=23 // pred_region
          %p690 = scmp.lt.s32.totalorder %s36, 1
          %s691 = scalar_select %p690, %s36, 1
          %s692 = scalar_lea.vmem %s18, %s691
        $region92: #{tpu_custom_call.1} parent=23 // pred_fallthru
          _
      $region24: #{tpu_custom_call.1} parent=5 // pred_fallthru
        _
      %p693 = scmp.le.s32.totalorder 1, %s28
      %p694 = scmp.lt.s32.totalorder %s28, 5
      %p695 = pnand %p693, %p694
      %p696 = pneg %p695
      // Predicated region
      $region93: #{tpu_custom_call.1} parent=5 // pred_check
        _
      $region94: #{tpu_custom_call.1} parent=5 // pred_check_branch
        %698 = sbr.rel (%p695) target = $region96
      $region95: #{tpu_custom_call.1} parent=5 // pred_region
        %s699 = ssub.s32 %s28, 1
        %p700 = scmp.lt.s32.totalorder %s37, 1
        %s701 = scalar_select %p700, %s37, 1
        %s702 = smul.addr %s701, 8
        %s703 = scalar_lea.vmem %s0, %s702
        %p704 = pneg %p66
        %p705 = pneg %p63
        %p706 = pneg %p87
        %p707 = pneg %p84
        %p708 = pneg %p108
        %p709 = pneg %p105
        %p710 = scmp.lt.s32.totalorder %s38, 1
        %s711 = scalar_select %p710, %s38, 1
        %s712 = smul.addr %s711, 16
        %s713 = smul.addr %s712, 4
        %s714 = scalar_lea.vmem %s3, %s713
        %p715 = pneg %p134
        %p716 = pneg %p131
        %p717 = scmp.lt.s32.totalorder %s38, 1
        %s718 = scalar_select %p717, %s38, 1
        %s719 = smul.addr %s718, 4
        %s720 = scalar_lea.vmem %s4, %s719
        %p721 = pneg %p160
        %p722 = pneg %p157
        %p723 = scmp.lt.s32.totalorder %s38, 1
        %s724 = scalar_select %p723, %s38, 1
        %s725 = smul.addr %s724, 16
        %s726 = smul.addr %s725, 4
        %s727 = scalar_lea.vmem %s5, %s726
        %p728 = pneg %p186
        %p729 = pneg %p183
        %p730 = scmp.lt.s32.totalorder %s38, 1
        %s731 = scalar_select %p730, %s38, 1
        %s732 = smul.addr %s731, 4
        %s733 = scalar_lea.vmem %s6, %s732
        %p734 = pneg %p212
        %p735 = pneg %p209
        %p736 = scmp.lt.s32.totalorder %s38, 1
        %s737 = scalar_select %p736, %s38, 1
        %s738 = smul.addr %s737, 16
        %s739 = smul.addr %s738, 4
        %s740 = scalar_lea.vmem %s7, %s739
        %p741 = pneg %p238
        %p742 = pneg %p235
        %p743 = scmp.lt.s32.totalorder %s38, 1
        %s744 = scalar_select %p743, %s38, 1
        %s745 = smul.addr %s744, 4
        %s746 = scalar_lea.vmem %s8, %s745
        %p747 = pneg %p264
        %p748 = pneg %p261
        %p749 = scmp.lt.s32.totalorder %s38, 1
        %s750 = scalar_select %p749, %s38, 1
        %s751 = smul.addr %s750, 4
        %s752 = smul.addr %s751, 4
        %s753 = scalar_lea.vmem %s9, %s752
        %p754 = pneg %p290
        %p755 = pneg %p287
        %p756 = scmp.lt.s32.totalorder %s38, 1
        %s757 = scalar_select %p756, %s38, 1
        %s758 = scalar_lea.vmem %s10, %s757
        %p759 = pneg %p316
        %p760 = pneg %p313
        %p761 = scmp.lt.s32.totalorder %s38, 1
        %s762 = scalar_select %p761, %s38, 1
        %s763 = scalar_lea.vmem %s11, %s762
        %p764 = pneg %p342
        %p765 = pneg %p339
        %p766 = scmp.lt.s32.totalorder %s38, 1
        %s767 = scalar_select %p766, %s38, 1
        %s768 = scalar_lea.vmem %s12, %s767
        %p769 = pneg %p368
        %p770 = pneg %p365
        %p771 = scmp.lt.s32.totalorder %s38, 1
        %s772 = scalar_select %p771, %s38, 1
        %s773 = scalar_lea.vmem %s13, %s772
        %p774 = pneg %p394
        %p775 = pneg %p391
        %p776 = scmp.lt.s32.totalorder %s38, 1
        %s777 = scalar_select %p776, %s38, 1
        %s778 = scalar_lea.vmem %s14, %s777
        %p779 = pneg %p420
        %p780 = pneg %p417
        %p781 = scmp.lt.s32.totalorder %s38, 1
        %s782 = scalar_select %p781, %s38, 1
        %s783 = smul.addr %s782, 4
        %s784 = smul.addr %s783, 4
        %s785 = scalar_lea.vmem %s15, %s784
        %p786 = pneg %p446
        %p787 = pneg %p443
        %p788 = scmp.lt.s32.totalorder %s38, 1
        %s789 = scalar_select %p788, %s38, 1
        %s790 = scalar_lea.vmem %s16, %s789
        %p791 = pneg %p472
        %p792 = pneg %p469
        %p793 = scmp.lt.s32.totalorder %s38, 1
        %s794 = scalar_select %p793, %s38, 1
        %s795 = smul.addr %s794, 8
        %s796 = smul.addr %s795, 4
        %s797 = scalar_lea.vmem %s17, %s796
        %p798 = pneg %p498
        %p799 = pneg %p495
        %p800 = scmp.lt.s32.totalorder %s38, 1
        %s801 = scalar_select %p800, %s38, 1
        %s802 = scalar_lea.vmem %s18, %s801
        %p803 = pneg %p524
        %p804 = pneg %p521
        %p805 = pneg %p550
        %p806 = pneg %p547
        %s807 = sand.u32 %s537, 1
        %s808 = scalar_lea.sflag [#allocation4], %s807
        %s809 = sand.u32 %s537, 1
        %s810 = smul.addr %s809, 8
        %s811 = scalar_lea.vmem [#allocation3], %s810
        %p812 = scmp.lt.s32.totalorder %s37, 1
        %s813 = scalar_select %p812, %s37, 1
        %s814 = smul.addr %s813, 8
        %s815 = scalar_lea.vmem %s0, %s814
        %p816 = scmp.lt.s32.totalorder %s38, 1
        %s817 = scalar_select %p816, %s38, 1
        %s818 = smul.addr %s817, 16
        %s819 = smul.addr %s818, 4
        %s820 = scalar_lea.vmem %s3, %s819
        %p821 = scmp.lt.s32.totalorder %s38, 1
        %s822 = scalar_select %p821, %s38, 1
        %s823 = smul.addr %s822, 4
        %s824 = scalar_lea.vmem %s4, %s823
        %p825 = scmp.lt.s32.totalorder %s38, 1
        %s826 = scalar_select %p825, %s38, 1
        %s827 = smul.addr %s826, 16
        %s828 = smul.addr %s827, 4
        %s829 = scalar_lea.vmem %s5, %s828
        %p830 = scmp.lt.s32.totalorder %s38, 1
        %s831 = scalar_select %p830, %s38, 1
        %s832 = smul.addr %s831, 4
        %s833 = scalar_lea.vmem %s6, %s832
        %p834 = scmp.lt.s32.totalorder %s38, 1
        %s835 = scalar_select %p834, %s38, 1
        %s836 = smul.addr %s835, 16
        %s837 = smul.addr %s836, 4
        %s838 = scalar_lea.vmem %s7, %s837
        %p839 = scmp.lt.s32.totalorder %s38, 1
        %s840 = scalar_select %p839, %s38, 1
        %s841 = smul.addr %s840, 4
        %s842 = scalar_lea.vmem %s8, %s841
        %p843 = scmp.lt.s32.totalorder %s38, 1
        %s844 = scalar_select %p843, %s38, 1
        %s845 = smul.addr %s844, 4
        %s846 = smul.addr %s845, 4
        %s847 = scalar_lea.vmem %s9, %s846
        %p848 = scmp.lt.s32.totalorder %s38, 1
        %s849 = scalar_select %p848, %s38, 1
        %s850 = scalar_lea.vmem %s10, %s849
        %p851 = scmp.lt.s32.totalorder %s38, 1
        %s852 = scalar_select %p851, %s38, 1
        %s853 = scalar_lea.vmem %s11, %s852
        %p854 = scmp.lt.s32.totalorder %s38, 1
        %s855 = scalar_select %p854, %s38, 1
        %s856 = scalar_lea.vmem %s12, %s855
        %p857 = scmp.lt.s32.totalorder %s38, 1
        %s858 = scalar_select %p857, %s38, 1
        %s859 = scalar_lea.vmem %s13, %s858
        %p860 = scmp.lt.s32.totalorder %s38, 1
        %s861 = scalar_select %p860, %s38, 1
        %s862 = scalar_lea.vmem %s14, %s861
        %p863 = scmp.lt.s32.totalorder %s38, 1
        %s864 = scalar_select %p863, %s38, 1
        %s865 = smul.addr %s864, 4
        %s866 = smul.addr %s865, 4
        %s867 = scalar_lea.vmem %s15, %s866
        %p868 = scmp.lt.s32.totalorder %s38, 1
        %s869 = scalar_select %p868, %s38, 1
        %s870 = scalar_lea.vmem %s16, %s869
        %p871 = scmp.lt.s32.totalorder %s38, 1
        %s872 = scalar_select %p871, %s38, 1
        %s873 = smul.addr %s872, 8
        %s874 = smul.addr %s873, 4
        %s875 = scalar_lea.vmem %s17, %s874
        %p876 = scmp.lt.s32.totalorder %s38, 1
        %s877 = scalar_select %p876, %s38, 1
        %s878 = scalar_lea.vmem %s18, %s877
        %p880 = scmp.eq.s32.totalorder %s38, 0
        // Predicated region
        $region97: #{tpu_custom_call.1} parent=95 // pred_check
          %p881 = pneg %p880
        $region98: #{tpu_custom_call.1} parent=95 // pred_check_branch
          %883 = sbr.rel (%p881) target = $region100
        $region99: #{tpu_custom_call.1} parent=95 // pred_region
          %v884 = vld [vmem:[%s815] sm:$0xff]
          %v885 = vpack.c.bf16 %v884, %v884
          %v886 = vld [vmem:[%s1] sm:$0x3]
          %v887 = vld [vmem:[%s2] sm:$0x1]
          %v889 = vlaneseq
          %v890 = vshrl.u32 %v889, 7
          %v891 = vsub.s32 0, %v890
          %v892 = vrot.slane %v887, %v891
          %vm894 = vcmask 31744
          %v896 = vsel %vm894, %v885, 0
          %vm898 = vcmask 1041408
          %v900 = vsel %vm898, %v886, 0
          %902 = vmatprep.subr.bf16.mxu0 0
          %903 = vmatpush1.bf16.msra.mxu0 %v900
          %904 = vmatprep.subr.bf16.mxu0 0
          %905 = vmatpush1.bf16.msra.mxu0 0
          %906 = vmatprep.subr.bf16.mxu0 0
          %907 = vmatpush1.bf16.msra.mxu0 0
          %908 = vmatprep.subr.bf16.mxu0 0
          %909 = vmatpush1.bf16.msra.mxu0 0
          %910 = vmatprep.subr.bf16.mxu0 0
          %911 = vmatpush1.bf16.msra.mxu0 0
          %912 = vmatprep.subr.bf16.mxu0 0
          %913 = vmatpush1.bf16.msra.mxu0 0
          %914 = vmatprep.subr.bf16.mxu0 0
          %915 = vmatpush1.bf16.msra.mxu0 0
          %916 = vmatprep.subr.bf16.mxu0 0
          %917 = vmatpush1.bf16.msra.mxu0 0
          %918 = vmatprep.subr.bf16.mxu0 0
          %919 = vmatpush1.bf16.msra.mxu0 0
          %920 = vmatprep.subr.bf16.mxu0 0
          %921 = vmatpush1.bf16.msra.mxu0 0
          %922 = vmatprep.subr.bf16.mxu0 0
          %923 = vmatpush1.bf16.msra.mxu0 0
          %924 = vmatprep.subr.bf16.mxu0 0
          %925 = vmatpush1.bf16.msra.mxu0 0
          %926 = vmatprep.subr.bf16.mxu0 0
          %927 = vmatpush1.bf16.msra.mxu0 0
          %928 = vmatprep.subr.bf16.mxu0 0
          %929 = vmatpush1.bf16.msra.mxu0 0
          %930 = vmatprep.subr.bf16.mxu0 0
          %931 = vmatpush1.bf16.msra.mxu0 0
          %932 = vmatprep.subr.bf16.mxu0 0
          %933 = vmatpush1.bf16.msra.mxu0 0
          %934 = vmatprep.mubr.bf16.mxu0 0
          %935 = vmatmul.mubr.bf16.gmra.mrb[0].mxu0 %v896
          %v936 = vpop.f32.mrb[0].mxu0
          %v937 = vadd.f32 %v892, %v936
          %v938 = vpop.f32.mrb[0].mxu0
          %v939 = vpop.f32.mrb[0].mxu0
          %v940 = vpop.f32.mrb[0].mxu0
          %941 = vdwg.mxu0
          %vm942 = vcmask 261120
          %943 = vst.msk [vmem:[#allocation2] sm:$0xff] %vm942, %v937
        $region100: #{tpu_custom_call.1} parent=95 // pred_fallthru
          _
        %v944 = vld [vmem:[#allocation2] sm:$0xff]
        %v945 = vpack.c.bf16 %v944, %v944
        %v946 = vld [vmem:[%s820] sm:$0xf]
        %v947 = vld [vmem:[%s820 + $0x4] sm:$0xf]
        %v948 = vld [vmem:[%s820 + $0x8] sm:$0xf]
        %v949 = vld [vmem:[%s820 + $0xc] sm:$0xf]
        %v950 = vld [vmem:[%s824] sm:$0x1]
        %v952 = vlaneseq
        %v953 = vshrl.u32 %v952, 7
        %v954 = vsub.s32 0, %v953
        %v955 = vrot.slane %v950, %v954
        %v961 = vunpack.c.l.b16 %v946
        %v962 = vunpack.c.l.b16 %v947
        %v963 = vunpack.c.l.b16 %v948
        %v964 = vunpack.c.l.b16 %v949
        %v965 = vpack.c.b16 %v962, %v961
        %v966 = vpack.c.b16 %v964, %v963
        %vm969 = vcmask 261120
        %v971 = vsel %vm969, %v945, 0
        %973 = vmatprep.subr.bf16.mxu0 0
        %974 = vmatpush1.bf16.msra.mxu0 %v965
        %975 = vmatprep.subr.bf16.mxu0 0
        %976 = vmatpush1.bf16.msra.mxu0 %v966
        %977 = vmatprep.subr.bf16.mxu0 0
        %978 = vmatpush1.bf16.msra.mxu0 0
        %979 = vmatprep.subr.bf16.mxu0 0
        %980 = vmatpush1.bf16.msra.mxu0 0
        %981 = vmatprep.subr.bf16.mxu0 0
        %982 = vmatpush1.bf16.msra.mxu0 0
        %983 = vmatprep.subr.bf16.mxu0 0
        %984 = vmatpush1.bf16.msra.mxu0 0
        %985 = vmatprep.subr.bf16.mxu0 0
        %986 = vmatpush1.bf16.msra.mxu0 0
        %987 = vmatprep.subr.bf16.mxu0 0
        %988 = vmatpush1.bf16.msra.mxu0 0
        %989 = vmatprep.subr.bf16.mxu0 0
        %990 = vmatpush1.bf16.msra.mxu0 0
        %991 = vmatprep.subr.bf16.mxu0 0
        %992 = vmatpush1.bf16.msra.mxu0 0
        %993 = vmatprep.subr.bf16.mxu0 0
        %994 = vmatpush1.bf16.msra.mxu0 0
        %995 = vmatprep.subr.bf16.mxu0 0
        %996 = vmatpush1.bf16.msra.mxu0 0
        %997 = vmatprep.subr.bf16.mxu0 0
        %998 = vmatpush1.bf16.msra.mxu0 0
        %999 = vmatprep.subr.bf16.mxu0 0
        %1000 = vmatpush1.bf16.msra.mxu0 0
        %1001 = vmatprep.subr.bf16.mxu0 0
        %1002 = vmatpush1.bf16.msra.mxu0 0
        %1003 = vmatprep.subr.bf16.mxu0 0
        %1004 = vmatpush1.bf16.msra.mxu0 0
        %1005 = vmatprep.mubr.bf16.mxu0 0
        %1006 = vmatmul.mubr.bf16.gmra.mrb[0].mxu0 %v971
        %v1007 = vpop.f32.mrb[0].mxu0
        %v1008 = vadd.f32 %v955, %v1007
        %v1009 = vpop.f32.mrb[0].mxu0
        %v1010 = vpop.f32.mrb[0].mxu0
        %v1011 = vpop.f32.mrb[0].mxu0
        %1012 = vdwg.mxu0
        %v1013 = vld [vmem:[%s829] sm:$0xf]
        %v1014 = vld [vmem:[%s829 + $0x4] sm:$0xf]
        %v1015 = vld [vmem:[%s829 + $0x8] sm:$0xf]
        %v1016 = vld [vmem:[%s829 + $0xc] sm:$0xf]
        %v1017 = vld [vmem:[%s833] sm:$0x1]
        %v1019 = vlaneseq
        %v1020 = vshrl.u32 %v1019, 7
        %v1021 = vsub.s32 0, %v1020
        %v1022 = vrot.slane %v1017, %v1021
        %v1028 = vunpack.c.l.b16 %v1013
        %v1029 = vunpack.c.l.b16 %v1014
        %v1030 = vunpack.c.l.b16 %v1015
        %v1031 = vunpack.c.l.b16 %v1016
        %v1032 = vpack.c.b16 %v1029, %v1028
        %v1033 = vpack.c.b16 %v1031, %v1030
        %1036 = vmatprep.subr.bf16.mxu0 0
        %1037 = vmatpush1.bf16.msra.mxu0 %v1032
        %1038 = vmatprep.subr.bf16.mxu0 0
        %1039 = vmatpush1.bf16.msra.mxu0 %v1033
        %1040 = vmatprep.subr.bf16.mxu0 0
        %1041 = vmatpush1.bf16.msra.mxu0 0
        %1042 = vmatprep.subr.bf16.mxu0 0
        %1043 = vmatpush1.bf16.msra.mxu0 0
        %1044 = vmatprep.subr.bf16.mxu0 0
        %1045 = vmatpush1.bf16.msra.mxu0 0
        %1046 = vmatprep.subr.bf16.mxu0 0
        %1047 = vmatpush1.bf16.msra.mxu0 0
        %1048 = vmatprep.subr.bf16.mxu0 0
        %1049 = vmatpush1.bf16.msra.mxu0 0
        %1050 = vmatprep.subr.bf16.mxu0 0
        %1051 = vmatpush1.bf16.msra.mxu0 0
        %1052 = vmatprep.subr.bf16.mxu0 0
        %1053 = vmatpush1.bf16.msra.mxu0 0
        %1054 = vmatprep.subr.bf16.mxu0 0
        %1055 = vmatpush1.bf16.msra.mxu0 0
        %1056 = vmatprep.subr.bf16.mxu0 0
        %1057 = vmatpush1.bf16.msra.mxu0 0
        %1058 = vmatprep.subr.bf16.mxu0 0
        %1059 = vmatpush1.bf16.msra.mxu0 0
        %1060 = vmatprep.subr.bf16.mxu0 0
        %1061 = vmatpush1.bf16.msra.mxu0 0
        %1062 = vmatprep.subr.bf16.mxu0 0
        %1063 = vmatpush1.bf16.msra.mxu0 0
        %1064 = vmatprep.subr.bf16.mxu0 0
        %1065 = vmatpush1.bf16.msra.mxu0 0
        %1066 = vmatprep.subr.bf16.mxu0 0
        %1067 = vmatpush1.bf16.msra.mxu0 0
        %1068 = vmatprep.mubr.bf16.mxu0 0
        %1069 = vmatmul.mubr.bf16.gmra.mrb[0].mxu0 %v971
        %v1070 = vpop.f32.mrb[0].mxu0
        %v1071 = vadd.f32 %v1022, %v1070
        %v1072 = vpop.f32.mrb[0].mxu0
        %v1073 = vpop.f32.mrb[0].mxu0
        %v1074 = vpop.f32.mrb[0].mxu0
        %1075 = vdwg.mxu0
        %v1076 = vld [vmem:[%s838] sm:$0xf]
        %v1077 = vld [vmem:[%s838 + $0x4] sm:$0xf]
        %v1078 = vld [vmem:[%s838 + $0x8] sm:$0xf]
        %v1079 = vld [vmem:[%s838 + $0xc] sm:$0xf]
        %v1080 = vld [vmem:[%s842] sm:$0x1]
        %v1082 = vlaneseq
        %v1083 = vshrl.u32 %v1082, 7
        %v1084 = vsub.s32 0, %v1083
        %v1085 = vrot.slane %v1080, %v1084
        %v1091 = vunpack.c.l.b16 %v1076
        %v1092 = vunpack.c.l.b16 %v1077
        %v1093 = vunpack.c.l.b16 %v1078
        %v1094 = vunpack.c.l.b16 %v1079
        %v1095 = vpack.c.b16 %v1092, %v1091
        %v1096 = vpack.c.b16 %v1094, %v1093
        %1099 = vmatprep.subr.bf16.mxu0 0
        %1100 = vmatpush1.bf16.msra.mxu0 %v1095
        %1101 = vmatprep.subr.bf16.mxu0 0
        %1102 = vmatpush1.bf16.msra.mxu0 %v1096
        %1103 = vmatprep.subr.bf16.mxu0 0
        %1104 = vmatpush1.bf16.msra.mxu0 0
        %1105 = vmatprep.subr.bf16.mxu0 0
        %1106 = vmatpush1.bf16.msra.mxu0 0
        %1107 = vmatprep.subr.bf16.mxu0 0
        %1108 = vmatpush1.bf16.msra.mxu0 0
        %1109 = vmatprep.subr.bf16.mxu0 0
        %1110 = vmatpush1.bf16.msra.mxu0 0
        %1111 = vmatprep.subr.bf16.mxu0 0
        %1112 = vmatpush1.bf16.msra.mxu0 0
        %1113 = vmatprep.subr.bf16.mxu0 0
        %1114 = vmatpush1.bf16.msra.mxu0 0
        %1115 = vmatprep.subr.bf16.mxu0 0
        %1116 = vmatpush1.bf16.msra.mxu0 0
        %1117 = vmatprep.subr.bf16.mxu0 0
        %1118 = vmatpush1.bf16.msra.mxu0 0
        %1119 = vmatprep.subr.bf16.mxu0 0
        %1120 = vmatpush1.bf16.msra.mxu0 0
        %1121 = vmatprep.subr.bf16.mxu0 0
        %1122 = vmatpush1.bf16.msra.mxu0 0
        %1123 = vmatprep.subr.bf16.mxu0 0
        %1124 = vmatpush1.bf16.msra.mxu0 0
        %1125 = vmatprep.subr.bf16.mxu0 0
        %1126 = vmatpush1.bf16.msra.mxu0 0
        %1127 = vmatprep.subr.bf16.mxu0 0
        %1128 = vmatpush1.bf16.msra.mxu0 0
        %1129 = vmatprep.subr.bf16.mxu0 0
        %1130 = vmatpush1.bf16.msra.mxu0 0
        %1131 = vmatprep.mubr.bf16.mxu0 0
        %1132 = vmatmul.mubr.bf16.gmra.mrb[0].mxu0 %v971
        %v1133 = vpop.f32.mrb[0].mxu0
        %v1134 = vadd.f32 %v1085, %v1133
        %v1135 = vpop.f32.mrb[0].mxu0
        %v1136 = vpop.f32.mrb[0].mxu0
        %v1137 = vpop.f32.mrb[0].mxu0
        %1138 = vdwg.mxu0
        %v1139 = vpack.c.bf16 %v1008, %v1008
        %v1140 = vpack.c.bf16 %v1071, %v1071
        %vm1141 = vcmask 64512
        %v1143 = vsel %vm1141, %v1139, 0
        %v1146 = vsel %vm1141, %v1140, 0
        %1148 = vmatprep.subr.bf16.mxu0 0
        %1149 = vmatpush1.bf16.xpose.msra.mxu0 %v1146
        %1150 = vmatprep.subr.bf16.mxu0 0
        %1151 = vmatpush1.bf16.xpose.msra.mxu0 0
        %1152 = vmatprep.subr.bf16.mxu0 0
        %1153 = vmatpush1.bf16.xpose.msra.mxu0 0
        %1154 = vmatprep.subr.bf16.mxu0 0
        %1155 = vmatpush1.bf16.xpose.msra.mxu0 0
        %1156 = vmatprep.subr.bf16.mxu0 0
        %1157 = vmatpush1.bf16.xpose.msra.mxu0 0
        %1158 = vmatprep.subr.bf16.mxu0 0
        %1159 = vmatpush1.bf16.xpose.msra.mxu0 0
        %1160 = vmatprep.subr.bf16.mxu0 0
        %1161 = vmatpush1.bf16.xpose.msra.mxu0 0
        %1162 = vmatprep.subr.bf16.mxu0 0
        %1163 = vmatpush1.bf16.xpose.msra.mxu0 0
        %1164 = vmatprep.subr.bf16.mxu0 0
        %1165 = vmatpush1.bf16.xpose.msra.mxu0 0
        %1166 = vmatprep.subr.bf16.mxu0 0
        %1167 = vmatpush1.bf16.xpose.msra.mxu0 0
        %1168 = vmatprep.subr.bf16.mxu0 0
        %1169 = vmatpush1.bf16.xpose.msra.mxu0 0
        %1170 = vmatprep.subr.bf16.mxu0 0
        %1171 = vmatpush1.bf16.xpose.msra.mxu0 0
        %1172 = vmatprep.subr.bf16.mxu0 0
        %1173 = vmatpush1.bf16.xpose.msra.mxu0 0
        %1174 = vmatprep.subr.bf16.mxu0 0
        %1175 = vmatpush1.bf16.xpose.msra.mxu0 0
        %1176 = vmatprep.subr.bf16.mxu0 0
        %1177 = vmatpush1.bf16.xpose.msra.mxu0 0
        %1178 = vmatprep.subr.bf16.mxu0 0
        %1179 = vmatpush1.bf16.xpose.msra.mxu0 0
        %1180 = vmatprep.mubr.bf16.mxu0 0
        %1181 = vmatmul.mubr.bf16.gmra.mrb[0].mxu0 %v1143
        %v1182 = vpop.f32.mrb[0].mxu0
        %v1183 = vadd.f32 0.0, %v1182
        %v1184 = vpop.f32.mrb[0].mxu0
        %v1185 = vpop.f32.mrb[0].mxu0
        %v1186 = vpop.f32.mrb[0].mxu0
        %1187 = vdwg.mxu0
        %v1188 = vsel %vm1141, %v1183, -inf
        %1189 = vmax.xlane.f32.xlu0 %v1188
        %v1190 = vpop.xlane.xlu0 %1189
        %v1191 = vsub.f32 %v1183, %v1190
        %v1192 = vmul.f32 %v1191, 1.442695
        %v1193 = vpow.pop %v1192
        %v1194 = vsel %vm1141, %v1193, 0.0
        %1195 = vadd.xlane.f32.xlu0 %v1194
        %v1196 = vpop.xlane.xlu0 %1195
        %v1197 = vrcp.pop %v1196
        %v1198 = vmul.f32 %v1193, %v1197
        %v1199 = vpack.c.bf16 %v1198, %v1198
        %v1200 = vpack.c.bf16 %v1134, %v1134
        %v1202 = vsel %vm1141, %v1199, 0
        %vm1204 = vcmask 1043456
        %v1206 = vsel %vm1204, %v1200, 0
        %1208 = vmatprep.subr.bf16.mxu0 0
        %1209 = vmatpush1.bf16.msra.mxu0 %v1206
        %1210 = vmatprep.subr.bf16.mxu0 0
        %1211 = vmatpush1.bf16.msra.mxu0 0
        %1212 = vmatprep.subr.bf16.mxu0 0
        %1213 = vmatpush1.bf16.msra.mxu0 0
        %1214 = vmatprep.subr.bf16.mxu0 0
        %1215 = vmatpush1.bf16.msra.mxu0 0
        %1216 = vmatprep.subr.bf16.mxu0 0
        %1217 = vmatpush1.bf16.msra.mxu0 0
        %1218 = vmatprep.subr.bf16.mxu0 0
        %1219 = vmatpush1.bf16.msra.mxu0 0
        %1220 = vmatprep.subr.bf16.mxu0 0
        %1221 = vmatpush1.bf16.msra.mxu0 0
        %1222 = vmatprep.subr.bf16.mxu0 0
        %1223 = vmatpush1.bf16.msra.mxu0 0
        %1224 = vmatprep.subr.bf16.mxu0 0
        %1225 = vmatpush1.bf16.msra.mxu0 0
        %1226 = vmatprep.subr.bf16.mxu0 0
        %1227 = vmatpush1.bf16.msra.mxu0 0
        %1228 = vmatprep.subr.bf16.mxu0 0
        %1229 = vmatpush1.bf16.msra.mxu0 0
        %1230 = vmatprep.subr.bf16.mxu0 0
        %1231 = vmatpush1.bf16.msra.mxu0 0
        %1232 = vmatprep.subr.bf16.mxu0 0
        %1233 = vmatpush1.bf16.msra.mxu0 0
        %1234 = vmatprep.subr.bf16.mxu0 0
        %1235 = vmatpush1.bf16.msra.mxu0 0
        %1236 = vmatprep.subr.bf16.mxu0 0
        %1237 = vmatpush1.bf16.msra.mxu0 0
        %1238 = vmatprep.subr.bf16.mxu0 0
        %1239 = vmatpush1.bf16.msra.mxu0 0
        %1240 = vmatprep.mubr.bf16.mxu0 0
        %1241 = vmatmul.mubr.bf16.gmra.mrb[0].mxu0 %v1202
        %v1242 = vpop.f32.mrb[0].mxu0
        %v1243 = vadd.f32 0.0, %v1242
        %v1244 = vpop.f32.mrb[0].mxu0
        %v1245 = vpop.f32.mrb[0].mxu0
        %v1246 = vpop.f32.mrb[0].mxu0
        %1247 = vdwg.mxu0
        %s1248 = scalar_lea.vmem %s820, 16
        %v1249 = vld [vmem:[%s1248] sm:$0xf]
        %v1250 = vld [vmem:[%s1248 + $0x4] sm:$0xf]
        %v1251 = vld [vmem:[%s1248 + $0x8] sm:$0xf]
        %v1252 = vld [vmem:[%s1248 + $0xc] sm:$0xf]
        %s1253 = scalar_lea.vmem %s824, 1
        %v1254 = vld [vmem:[%s1253] sm:$0x1]
        %v1256 = vlaneseq
        %v1257 = vshrl.u32 %v1256, 7
        %v1258 = vsub.s32 0, %v1257
        %v1259 = vrot.slane %v1254, %v1258
        %v1265 = vunpack.c.l.b16 %v1249
        %v1266 = vunpack.c.l.b16 %v1250
        %v1267 = vunpack.c.l.b16 %v1251
        %v1268 = vunpack.c.l.b16 %v1252
        %v1269 = vpack.c.b16 %v1266, %v1265
        %v1270 = vpack.c.b16 %v1268, %v1267
        %1273 = vmatprep.subr.bf16.mxu0 0
        %1274 = vmatpush1.bf16.msra.mxu0 %v1269
        %1275 = vmatprep.subr.bf16.mxu0 0
        %1276 = vmatpush1.bf16.msra.mxu0 %v1270
        %1277 = vmatprep.subr.bf16.mxu0 0
        %1278 = vmatpush1.bf16.msra.mxu0 0
        %1279 = vmatprep.subr.bf16.mxu0 0
        %1280 = vmatpush1.bf16.msra.mxu0 0
        %1281 = vmatprep.subr.bf16.mxu0 0
        %1282 = vmatpush1.bf16.msra.mxu0 0
        %1283 = vmatprep.subr.bf16.mxu0 0
        %1284 = vmatpush1.bf16.msra.mxu0 0
        %1285 = vmatprep.subr.bf16.mxu0 0
        %1286 = vmatpush1.bf16.msra.mxu0 0
        %1287 = vmatprep.subr.bf16.mxu0 0
        %1288 = vmatpush1.bf16.msra.mxu0 0
        %1289 = vmatprep.subr.bf16.mxu0 0
        %1290 = vmatpush1.bf16.msra.mxu0 0
        %1291 = vmatprep.subr.bf16.mxu0 0
        %1292 = vmatpush1.bf16.msra.mxu0 0
        %1293 = vmatprep.subr.bf16.mxu0 0
        %1294 = vmatpush1.bf16.msra.mxu0 0
        %1295 = vmatprep.subr.bf16.mxu0 0
        %1296 = vmatpush1.bf16.msra.mxu0 0
        %1297 = vmatprep.subr.bf16.mxu0 0
        %1298 = vmatpush1.bf16.msra.mxu0 0
        %1299 = vmatprep.subr.bf16.mxu0 0
        %1300 = vmatpush1.bf16.msra.mxu0 0
        %1301 = vmatprep.subr.bf16.mxu0 0
        %1302 = vmatpush1.bf16.msra.mxu0 0
        %1303 = vmatprep.subr.bf16.mxu0 0
        %1304 = vmatpush1.bf16.msra.mxu0 0
        %1305 = vmatprep.mubr.bf16.mxu0 0
        %1306 = vmatmul.mubr.bf16.gmra.mrb[0].mxu0 %v971
        %v1307 = vpop.f32.mrb[0].mxu0
        %v1308 = vadd.f32 %v1259, %v1307
        %v1309 = vpop.f32.mrb[0].mxu0
        %v1310 = vpop.f32.mrb[0].mxu0
        %v1311 = vpop.f32.mrb[0].mxu0
        %1312 = vdwg.mxu0
        %s1313 = scalar_lea.vmem %s829, 16
        %v1314 = vld [vmem:[%s1313] sm:$0xf]
        %v1315 = vld [vmem:[%s1313 + $0x4] sm:$0xf]
        %v1316 = vld [vmem:[%s1313 + $0x8] sm:$0xf]
        %v1317 = vld [vmem:[%s1313 + $0xc] sm:$0xf]
        %s1318 = scalar_lea.vmem %s833, 1
        %v1319 = vld [vmem:[%s1318] sm:$0x1]
        %v1321 = vlaneseq
        %v1322 = vshrl.u32 %v1321, 7
        %v1323 = vsub.s32 0, %v1322
        %v1324 = vrot.slane %v1319, %v1323
        %v1330 = vunpack.c.l.b16 %v1314
        %v1331 = vunpack.c.l.b16 %v1315
        %v1332 = vunpack.c.l.b16 %v1316
        %v1333 = vunpack.c.l.b16 %v1317
        %v1334 = vpack.c.b16 %v1331, %v1330
        %v1335 = vpack.c.b16 %v1333, %v1332
        %1338 = vmatprep.subr.bf16.mxu0 0
        %1339 = vmatpush1.bf16.msra.mxu0 %v1334
        %1340 = vmatprep.subr.bf16.mxu0 0
        %1341 = vmatpush1.bf16.msra.mxu0 %v1335
        %1342 = vmatprep.subr.bf16.mxu0 0
        %1343 = vmatpush1.bf16.msra.mxu0 0
        %1344 = vmatprep.subr.bf16.mxu0 0
        %1345 = vmatpush1.bf16.msra.mxu0 0
        %1346 = vmatprep.subr.bf16.mxu0 0
        %1347 = vmatpush1.bf16.msra.mxu0 0
        %1348 = vmatprep.subr.bf16.mxu0 0
        %1349 = vmatpush1.bf16.msra.mxu0 0
        %1350 = vmatprep.subr.bf16.mxu0 0
        %1351 = vmatpush1.bf16.msra.mxu0 0
        %1352 = vmatprep.subr.bf16.mxu0 0
        %1353 = vmatpush1.bf16.msra.mxu0 0
        %1354 = vmatprep.subr.bf16.mxu0 0
        %1355 = vmatpush1.bf16.msra.mxu0 0
        %1356 = vmatprep.subr.bf16.mxu0 0
        %1357 = vmatpush1.bf16.msra.mxu0 0
        %1358 = vmatprep.subr.bf16.mxu0 0
        %1359 = vmatpush1.bf16.msra.mxu0 0
        %1360 = vmatprep.subr.bf16.mxu0 0
        %1361 = vmatpush1.bf16.msra.mxu0 0
        %1362 = vmatprep.subr.bf16.mxu0 0
        %1363 = vmatpush1.bf16.msra.mxu0 0
        %1364 = vmatprep.subr.bf16.mxu0 0
        %1365 = vmatpush1.bf16.msra.mxu0 0
        %1366 = vmatprep.subr.bf16.mxu0 0
        %1367 = vmatpush1.bf16.msra.mxu0 0
        %1368 = vmatprep.subr.bf16.mxu0 0
        %1369 = vmatpush1.bf16.msra.mxu0 0
        %1370 = vmatprep.mubr.bf16.mxu0 0
        %1371 = vmatmul.mubr.bf16.gmra.mrb[0].mxu0 %v971
        %v1372 = vpop.f32.mrb[0].mxu0
        %v1373 = vadd.f32 %v1324, %v1372
        %v1374 = vpop.f32.mrb[0].mxu0
        %v1375 = vpop.f32.mrb[0].mxu0
        %v1376 = vpop.f32.mrb[0].mxu0
        %1377 = vdwg.mxu0
        %s1378 = scalar_lea.vmem %s838, 16
        %v1379 = vld [vmem:[%s1378] sm:$0xf]
        %v1380 = vld [vmem:[%s1378 + $0x4] sm:$0xf]
        %v1381 = vld [vmem:[%s1378 + $0x8] sm:$0xf]
        %v1382 = vld [vmem:[%s1378 + $0xc] sm:$0xf]
        %s1383 = scalar_lea.vmem %s842, 1
        %v1384 = vld [vmem:[%s1383] sm:$0x1]
        %v1386 = vlaneseq
        %v1387 = vshrl.u32 %v1386, 7
        %v1388 = vsub.s32 0, %v1387
        %v1389 = vrot.slane %v1384, %v1388
        %v1395 = vunpack.c.l.b16 %v1379
        %v1396 = vunpack.c.l.b16 %v1380
        %v1397 = vunpack.c.l.b16 %v1381
        %v1398 = vunpack.c.l.b16 %v1382
        %v1399 = vpack.c.b16 %v1396, %v1395
        %v1400 = vpack.c.b16 %v1398, %v1397
        %1403 = vmatprep.subr.bf16.mxu0 0
        %1404 = vmatpush1.bf16.msra.mxu0 %v1399
        %1405 = vmatprep.subr.bf16.mxu0 0
        %1406 = vmatpush1.bf16.msra.mxu0 %v1400
        %1407 = vmatprep.subr.bf16.mxu0 0
        %1408 = vmatpush1.bf16.msra.mxu0 0
        %1409 = vmatprep.subr.bf16.mxu0 0
        %1410 = vmatpush1.bf16.msra.mxu0 0
        %1411 = vmatprep.subr.bf16.mxu0 0
        %1412 = vmatpush1.bf16.msra.mxu0 0
        %1413 = vmatprep.subr.bf16.mxu0 0
        %1414 = vmatpush1.bf16.msra.mxu0 0
        %1415 = vmatprep.subr.bf16.mxu0 0
        %1416 = vmatpush1.bf16.msra.mxu0 0
        %1417 = vmatprep.subr.bf16.mxu0 0
        %1418 = vmatpush1.bf16.msra.mxu0 0
        %1419 = vmatprep.subr.bf16.mxu0 0
        %1420 = vmatpush1.bf16.msra.mxu0 0
        %1421 = vmatprep.subr.bf16.mxu0 0
        %1422 = vmatpush1.bf16.msra.mxu0 0
        %1423 = vmatprep.subr.bf16.mxu0 0
        %1424 = vmatpush1.bf16.msra.mxu0 0
        %1425 = vmatprep.subr.bf16.mxu0 0
        %1426 = vmatpush1.bf16.msra.mxu0 0
        %1427 = vmatprep.subr.bf16.mxu0 0
        %1428 = vmatpush1.bf16.msra.mxu0 0
        %1429 = vmatprep.subr.bf16.mxu0 0
        %1430 = vmatpush1.bf16.msra.mxu0 0
        %1431 = vmatprep.subr.bf16.mxu0 0
        %1432 = vmatpush1.bf16.msra.mxu0 0
        %1433 = vmatprep.subr.bf16.mxu0 0
        %1434 = vmatpush1.bf16.msra.mxu0 0
        %1435 = vmatprep.mubr.bf16.mxu0 0
        %1436 = vmatmul.mubr.bf16.gmra.mrb[0].mxu0 %v971
        %v1437 = vpop.f32.mrb[0].mxu0
        %v1438 = vadd.f32 %v1389, %v1437
        %v1439 = vpop.f32.mrb[0].mxu0
        %v1440 = vpop.f32.mrb[0].mxu0
        %v1441 = vpop.f32.mrb[0].mxu0
        %1442 = vdwg.mxu0
        %v1443 = vpack.c.bf16 %v1308, %v1308
        %v1444 = vpack.c.bf16 %v1373, %v1373
        %v1446 = vsel %vm1141, %v1443, 0
        %v1449 = vsel %vm1141, %v1444, 0
        %1451 = vmatprep.subr.bf16.mxu0 0
        %1452 = vmatpush1.bf16.xpose.msra.mxu0 %v1449
        %1453 = vmatprep.subr.bf16.mxu0 0
        %1454 = vmatpush1.bf16.xpose.msra.mxu0 0
        %1455 = vmatprep.subr.bf16.mxu0 0
        %1456 = vmatpush1.bf16.xpose.msra.mxu0 0
        %1457 = vmatprep.subr.bf16.mxu0 0
        %1458 = vmatpush1.bf16.xpose.msra.mxu0 0
        %1459 = vmatprep.subr.bf16.mxu0 0
        %1460 = vmatpush1.bf16.xpose.msra.mxu0 0
        %1461 = vmatprep.subr.bf16.mxu0 0
        %1462 = vmatpush1.bf16.xpose.msra.mxu0 0
        %1463 = vmatprep.subr.bf16.mxu0 0
        %1464 = vmatpush1.bf16.xpose.msra.mxu0 0
        %1465 = vmatprep.subr.bf16.mxu0 0
        %1466 = vmatpush1.bf16.xpose.msra.mxu0 0
        %1467 = vmatprep.subr.bf16.mxu0 0
        %1468 = vmatpush1.bf16.xpose.msra.mxu0 0
        %1469 = vmatprep.subr.bf16.mxu0 0
        %1470 = vmatpush1.bf16.xpose.msra.mxu0 0
        %1471 = vmatprep.subr.bf16.mxu0 0
        %1472 = vmatpush1.bf16.xpose.msra.mxu0 0
        %1473 = vmatprep.subr.bf16.mxu0 0
        %1474 = vmatpush1.bf16.xpose.msra.mxu0 0
        %1475 = vmatprep.subr.bf16.mxu0 0
        %1476 = vmatpush1.bf16.xpose.msra.mxu0 0
        %1477 = vmatprep.subr.bf16.mxu0 0
        %1478 = vmatpush1.bf16.xpose.msra.mxu0 0
        %1479 = vmatprep.subr.bf16.mxu0 0
        %1480 = vmatpush1.bf16.xpose.msra.mxu0 0
        %1481 = vmatprep.subr.bf16.mxu0 0
        %1482 = vmatpush1.bf16.xpose.msra.mxu0 0
        %1483 = vmatprep.mubr.bf16.mxu0 0
        %1484 = vmatmul.mubr.bf16.gmra.mrb[0].mxu0 %v1446
        %v1485 = vpop.f32.mrb[0].mxu0
        %v1486 = vadd.f32 0.0, %v1485
        %v1487 = vpop.f32.mrb[0].mxu0
        %v1488 = vpop.f32.mrb[0].mxu0
        %v1489 = vpop.f32.mrb[0].mxu0
        %1490 = vdwg.mxu0
        %v1491 = vsel %vm1141, %v1486, -inf
        %1492 = vmax.xlane.f32.xlu0 %v1491
        %v1493 = vpop.xlane.xlu0 %1492
        %v1494 = vsub.f32 %v1486, %v1493
        %v1495 = vmul.f32 %v1494, 1.442695
        %v1496 = vpow.pop %v1495
        %v1497 = vsel %vm1141, %v1496, 0.0
        %1498 = vadd.xlane.f32.xlu0 %v1497
        %v1499 = vpop.xlane.xlu0 %1498
        %v1500 = vrcp.pop %v1499
        %v1501 = vmul.f32 %v1496, %v1500
        %v1502 = vpack.c.bf16 %v1501, %v1501
        %v1503 = vpack.c.bf16 %v1438, %v1438
        %v1505 = vsel %vm1141, %v1502, 0
        %v1508 = vsel %vm1204, %v1503, 0
        %1510 = vmatprep.subr.bf16.mxu0 0
        %1511 = vmatpush1.bf16.msra.mxu0 %v1508
        %1512 = vmatprep.subr.bf16.mxu0 0
        %1513 = vmatpush1.bf16.msra.mxu0 0
        %1514 = vmatprep.subr.bf16.mxu0 0
        %1515 = vmatpush1.bf16.msra.mxu0 0
        %1516 = vmatprep.subr.bf16.mxu0 0
        %1517 = vmatpush1.bf16.msra.mxu0 0
        %1518 = vmatprep.subr.bf16.mxu0 0
        %1519 = vmatpush1.bf16.msra.mxu0 0
        %1520 = vmatprep.subr.bf16.mxu0 0
        %1521 = vmatpush1.bf16.msra.mxu0 0
        %1522 = vmatprep.subr.bf16.mxu0 0
        %1523 = vmatpush1.bf16.msra.mxu0 0
        %1524 = vmatprep.subr.bf16.mxu0 0
        %1525 = vmatpush1.bf16.msra.mxu0 0
        %1526 = vmatprep.subr.bf16.mxu0 0
        %1527 = vmatpush1.bf16.msra.mxu0 0
        %1528 = vmatprep.subr.bf16.mxu0 0
        %1529 = vmatpush1.bf16.msra.mxu0 0
        %1530 = vmatprep.subr.bf16.mxu0 0
        %1531 = vmatpush1.bf16.msra.mxu0 0
        %1532 = vmatprep.subr.bf16.mxu0 0
        %1533 = vmatpush1.bf16.msra.mxu0 0
        %1534 = vmatprep.subr.bf16.mxu0 0
        %1535 = vmatpush1.bf16.msra.mxu0 0
        %1536 = vmatprep.subr.bf16.mxu0 0
        %1537 = vmatpush1.bf16.msra.mxu0 0
        %1538 = vmatprep.subr.bf16.mxu0 0
        %1539 = vmatpush1.bf16.msra.mxu0 0
        %1540 = vmatprep.subr.bf16.mxu0 0
        %1541 = vmatpush1.bf16.msra.mxu0 0
        %1542 = vmatprep.mubr.bf16.mxu0 0
        %1543 = vmatmul.mubr.bf16.gmra.mrb[0].mxu0 %v1505
        %v1544 = vpop.f32.mrb[0].mxu0
        %v1545 = vadd.f32 0.0, %v1544
        %v1546 = vpop.f32.mrb[0].mxu0
        %v1547 = vpop.f32.mrb[0].mxu0
        %v1548 = vpop.f32.mrb[0].mxu0
        %1549 = vdwg.mxu0
        %s1550 = scalar_lea.vmem %s820, 32
        %v1551 = vld [vmem:[%s1550] sm:$0xf]
        %v1552 = vld [vmem:[%s1550 + $0x4] sm:$0xf]
        %v1553 = vld [vmem:[%s1550 + $0x8] sm:$0xf]
        %v1554 = vld [vmem:[%s1550 + $0xc] sm:$0xf]
        %s1555 = scalar_lea.vmem %s824, 2
        %v1556 = vld [vmem:[%s1555] sm:$0x1]
        %v1558 = vlaneseq
        %v1559 = vshrl.u32 %v1558, 7
        %v1560 = vsub.s32 0, %v1559
        %v1561 = vrot.slane %v1556, %v1560
        %v1567 = vunpack.c.l.b16 %v1551
        %v1568 = vunpack.c.l.b16 %v1552
        %v1569 = vunpack.c.l.b16 %v1553
        %v1570 = vunpack.c.l.b16 %v1554
        %v1571 = vpack.c.b16 %v1568, %v1567
        %v1572 = vpack.c.b16 %v1570, %v1569
        %1575 = vmatprep.subr.bf16.mxu0 0
        %1576 = vmatpush1.bf16.msra.mxu0 %v1571
        %1577 = vmatprep.subr.bf16.mxu0 0
        %1578 = vmatpush1.bf16.msra.mxu0 %v1572
        %1579 = vmatprep.subr.bf16.mxu0 0
        %1580 = vmatpush1.bf16.msra.mxu0 0
        %1581 = vmatprep.subr.bf16.mxu0 0
        %1582 = vmatpush1.bf16.msra.mxu0 0
        %1583 = vmatprep.subr.bf16.mxu0 0
        %1584 = vmatpush1.bf16.msra.mxu0 0
        %1585 = vmatprep.subr.bf16.mxu0 0
        %1586 = vmatpush1.bf16.msra.mxu0 0
        %1587 = vmatprep.subr.bf16.mxu0 0
        %1588 = vmatpush1.bf16.msra.mxu0 0
        %1589 = vmatprep.subr.bf16.mxu0 0
        %1590 = vmatpush1.bf16.msra.mxu0 0
        %1591 = vmatprep.subr.bf16.mxu0 0
        %1592 = vmatpush1.bf16.msra.mxu0 0
        %1593 = vmatprep.subr.bf16.mxu0 0
        %1594 = vmatpush1.bf16.msra.mxu0 0
        %1595 = vmatprep.subr.bf16.mxu0 0
        %1596 = vmatpush1.bf16.msra.mxu0 0
        %1597 = vmatprep.subr.bf16.mxu0 0
        %1598 = vmatpush1.bf16.msra.mxu0 0
        %1599 = vmatprep.subr.bf16.mxu0 0
        %1600 = vmatpush1.bf16.msra.mxu0 0
        %1601 = vmatprep.subr.bf16.mxu0 0
        %1602 = vmatpush1.bf16.msra.mxu0 0
        %1603 = vmatprep.subr.bf16.mxu0 0
        %1604 = vmatpush1.bf16.msra.mxu0 0
        %1605 = vmatprep.subr.bf16.mxu0 0
        %1606 = vmatpush1.bf16.msra.mxu0 0
        %1607 = vmatprep.mubr.bf16.mxu0 0
        %1608 = vmatmul.mubr.bf16.gmra.mrb[0].mxu0 %v971
        %v1609 = vpop.f32.mrb[0].mxu0
        %v1610 = vadd.f32 %v1561, %v1609
        %v1611 = vpop.f32.mrb[0].mxu0
        %v1612 = vpop.f32.mrb[0].mxu0
        %v1613 = vpop.f32.mrb[0].mxu0
        %1614 = vdwg.mxu0
        %s1615 = scalar_lea.vmem %s829, 32
        %v1616 = vld [vmem:[%s1615] sm:$0xf]
        %v1617 = vld [vmem:[%s1615 + $0x4] sm:$0xf]
        %v1618 = vld [vmem:[%s1615 + $0x8] sm:$0xf]
        %v1619 = vld [vmem:[%s1615 + $0xc] sm:$0xf]
        %s1620 = scalar_lea.vmem %s833, 2
        %v1621 = vld [vmem:[%s1620] sm:$0x1]
        %v1623 = vlaneseq
        %v1624 = vshrl.u32 %v1623, 7
        %v1625 = vsub.s32 0, %v1624
        %v1626 = vrot.slane %v1621, %v1625
        %v1632 = vunpack.c.l.b16 %v1616
        %v1633 = vunpack.c.l.b16 %v1617
        %v1634 = vunpack.c.l.b16 %v1618
        %v1635 = vunpack.c.l.b16 %v1619
        %v1636 = vpack.c.b16 %v1633, %v1632
        %v1637 = vpack.c.b16 %v1635, %v1634
        %1640 = vmatprep.subr.bf16.mxu0 0
        %1641 = vmatpush1.bf16.msra.mxu0 %v1636
        %1642 = vmatprep.subr.bf16.mxu0 0
        %1643 = vmatpush1.bf16.msra.mxu0 %v1637
        %1644 = vmatprep.subr.bf16.mxu0 0
        %1645 = vmatpush1.bf16.msra.mxu0 0
        %1646 = vmatprep.subr.bf16.mxu0 0
        %1647 = vmatpush1.bf16.msra.mxu0 0
        %1648 = vmatprep.subr.bf16.mxu0 0
        %1649 = vmatpush1.bf16.msra.mxu0 0
        %1650 = vmatprep.subr.bf16.mxu0 0
        %1651 = vmatpush1.bf16.msra.mxu0 0
        %1652 = vmatprep.subr.bf16.mxu0 0
        %1653 = vmatpush1.bf16.msra.mxu0 0
        %1654 = vmatprep.subr.bf16.mxu0 0
        %1655 = vmatpush1.bf16.msra.mxu0 0
        %1656 = vmatprep.subr.bf16.mxu0 0
        %1657 = vmatpush1.bf16.msra.mxu0 0
        %1658 = vmatprep.subr.bf16.mxu0 0
        %1659 = vmatpush1.bf16.msra.mxu0 0
        %1660 = vmatprep.subr.bf16.mxu0 0
        %1661 = vmatpush1.bf16.msra.mxu0 0
        %1662 = vmatprep.subr.bf16.mxu0 0
        %1663 = vmatpush1.bf16.msra.mxu0 0
        %1664 = vmatprep.subr.bf16.mxu0 0
        %1665 = vmatpush1.bf16.msra.mxu0 0
        %1666 = vmatprep.subr.bf16.mxu0 0
        %1667 = vmatpush1.bf16.msra.mxu0 0
        %1668 = vmatprep.subr.bf16.mxu0 0
        %1669 = vmatpush1.bf16.msra.mxu0 0
        %1670 = vmatprep.subr.bf16.mxu0 0
        %1671 = vmatpush1.bf16.msra.mxu0 0
        %1672 = vmatprep.mubr.bf16.mxu0 0
        %1673 = vmatmul.mubr.bf16.gmra.mrb[0].mxu0 %v971
        %v1674 = vpop.f32.mrb[0].mxu0
        %v1675 = vadd.f32 %v1626, %v1674
        %v1676 = vpop.f32.mrb[0].mxu0
        %v1677 = vpop.f32.mrb[0].mxu0
        %v1678 = vpop.f32.mrb[0].mxu0
        %1679 = vdwg.mxu0
        %s1680 = scalar_lea.vmem %s838, 32
        %v1681 = vld [vmem:[%s1680] sm:$0xf]
        %v1682 = vld [vmem:[%s1680 + $0x4] sm:$0xf]
        %v1683 = vld [vmem:[%s1680 + $0x8] sm:$0xf]
        %v1684 = vld [vmem:[%s1680 + $0xc] sm:$0xf]
        %s1685 = scalar_lea.vmem %s842, 2
        %v1686 = vld [vmem:[%s1685] sm:$0x1]
        %v1688 = vlaneseq
        %v1689 = vshrl.u32 %v1688, 7
        %v1690 = vsub.s32 0, %v1689
        %v1691 = vrot.slane %v1686, %v1690
        %v1697 = vunpack.c.l.b16 %v1681
        %v1698 = vunpack.c.l.b16 %v1682
        %v1699 = vunpack.c.l.b16 %v1683
        %v1700 = vunpack.c.l.b16 %v1684
        %v1701 = vpack.c.b16 %v1698, %v1697
        %v1702 = vpack.c.b16 %v1700, %v1699
        %1705 = vmatprep.subr.bf16.mxu0 0
        %1706 = vmatpush1.bf16.msra.mxu0 %v1701
        %1707 = vmatprep.subr.bf16.mxu0 0
        %1708 = vmatpush1.bf16.msra.mxu0 %v1702
        %1709 = vmatprep.subr.bf16.mxu0 0
        %1710 = vmatpush1.bf16.msra.mxu0 0
        %1711 = vmatprep.subr.bf16.mxu0 0
        %1712 = vmatpush1.bf16.msra.mxu0 0
        %1713 = vmatprep.subr.bf16.mxu0 0
        %1714 = vmatpush1.bf16.msra.mxu0 0
        %1715 = vmatprep.subr.bf16.mxu0 0
        %1716 = vmatpush1.bf16.msra.mxu0 0
        %1717 = vmatprep.subr.bf16.mxu0 0
        %1718 = vmatpush1.bf16.msra.mxu0 0
        %1719 = vmatprep.subr.bf16.mxu0 0
        %1720 = vmatpush1.bf16.msra.mxu0 0
        %1721 = vmatprep.subr.bf16.mxu0 0
        %1722 = vmatpush1.bf16.msra.mxu0 0
        %1723 = vmatprep.subr.bf16.mxu0 0
        %1724 = vmatpush1.bf16.msra.mxu0 0
        %1725 = vmatprep.subr.bf16.mxu0 0
        %1726 = vmatpush1.bf16.msra.mxu0 0
        %1727 = vmatprep.subr.bf16.mxu0 0
        %1728 = vmatpush1.bf16.msra.mxu0 0
        %1729 = vmatprep.subr.bf16.mxu0 0
        %1730 = vmatpush1.bf16.msra.mxu0 0
        %1731 = vmatprep.subr.bf16.mxu0 0
        %1732 = vmatpush1.bf16.msra.mxu0 0
        %1733 = vmatprep.subr.bf16.mxu0 0
        %1734 = vmatpush1.bf16.msra.mxu0 0
        %1735 = vmatprep.subr.bf16.mxu0 0
        %1736 = vmatpush1.bf16.msra.mxu0 0
        %1737 = vmatprep.mubr.bf16.mxu0 0
        %1738 = vmatmul.mubr.bf16.gmra.mrb[0].mxu0 %v971
        %v1739 = vpop.f32.mrb[0].mxu0
        %v1740 = vadd.f32 %v1691, %v1739
        %v1741 = vpop.f32.mrb[0].mxu0
        %v1742 = vpop.f32.mrb[0].mxu0
        %v1743 = vpop.f32.mrb[0].mxu0
        %1744 = vdwg.mxu0
        %v1745 = vpack.c.bf16 %v1610, %v1610
        %v1746 = vpack.c.bf16 %v1675, %v1675
        %v1748 = vsel %vm1141, %v1745, 0
        %v1751 = vsel %vm1141, %v1746, 0
        %1753 = vmatprep.subr.bf16.mxu0 0
        %1754 = vmatpush1.bf16.xpose.msra.mxu0 %v1751
        %1755 = vmatprep.subr.bf16.mxu0 0
        %1756 = vmatpush1.bf16.xpose.msra.mxu0 0
        %1757 = vmatprep.subr.bf16.mxu0 0
        %1758 = vmatpush1.bf16.xpose.msra.mxu0 0
        %1759 = vmatprep.subr.bf16.mxu0 0
        %1760 = vmatpush1.bf16.xpose.msra.mxu0 0
        %1761 = vmatprep.subr.bf16.mxu0 0
        %1762 = vmatpush1.bf16.xpose.msra.mxu0 0
        %1763 = vmatprep.subr.bf16.mxu0 0
        %1764 = vmatpush1.bf16.xpose.msra.mxu0 0
        %1765 = vmatprep.subr.bf16.mxu0 0
        %1766 = vmatpush1.bf16.xpose.msra.mxu0 0
        %1767 = vmatprep.subr.bf16.mxu0 0
        %1768 = vmatpush1.bf16.xpose.msra.mxu0 0
        %1769 = vmatprep.subr.bf16.mxu0 0
        %1770 = vmatpush1.bf16.xpose.msra.mxu0 0
        %1771 = vmatprep.subr.bf16.mxu0 0
        %1772 = vmatpush1.bf16.xpose.msra.mxu0 0
        %1773 = vmatprep.subr.bf16.mxu0 0
        %1774 = vmatpush1.bf16.xpose.msra.mxu0 0
        %1775 = vmatprep.subr.bf16.mxu0 0
        %1776 = vmatpush1.bf16.xpose.msra.mxu0 0
        %1777 = vmatprep.subr.bf16.mxu0 0
        %1778 = vmatpush1.bf16.xpose.msra.mxu0 0
        %1779 = vmatprep.subr.bf16.mxu0 0
        %1780 = vmatpush1.bf16.xpose.msra.mxu0 0
        %1781 = vmatprep.subr.bf16.mxu0 0
        %1782 = vmatpush1.bf16.xpose.msra.mxu0 0
        %1783 = vmatprep.subr.bf16.mxu0 0
        %1784 = vmatpush1.bf16.xpose.msra.mxu0 0
        %1785 = vmatprep.mubr.bf16.mxu0 0
        %1786 = vmatmul.mubr.bf16.gmra.mrb[0].mxu0 %v1748
        %v1787 = vpop.f32.mrb[0].mxu0
        %v1788 = vadd.f32 0.0, %v1787
        %v1789 = vpop.f32.mrb[0].mxu0
        %v1790 = vpop.f32.mrb[0].mxu0
        %v1791 = vpop.f32.mrb[0].mxu0
        %1792 = vdwg.mxu0
        %v1793 = vsel %vm1141, %v1788, -inf
        %1794 = vmax.xlane.f32.xlu0 %v1793
        %v1795 = vpop.xlane.xlu0 %1794
        %v1796 = vsub.f32 %v1788, %v1795
        %v1797 = vmul.f32 %v1796, 1.442695
        %v1798 = vpow.pop %v1797
        %v1799 = vsel %vm1141, %v1798, 0.0
        %1800 = vadd.xlane.f32.xlu0 %v1799
        %v1801 = vpop.xlane.xlu0 %1800
        %v1802 = vrcp.pop %v1801
        %v1803 = vmul.f32 %v1798, %v1802
        %v1804 = vpack.c.bf16 %v1803, %v1803
        %v1805 = vpack.c.bf16 %v1740, %v1740
        %v1807 = vsel %vm1141, %v1804, 0
        %v1810 = vsel %vm1204, %v1805, 0
        %1812 = vmatprep.subr.bf16.mxu0 0
        %1813 = vmatpush1.bf16.msra.mxu0 %v1810
        %1814 = vmatprep.subr.bf16.mxu0 0
        %1815 = vmatpush1.bf16.msra.mxu0 0
        %1816 = vmatprep.subr.bf16.mxu0 0
        %1817 = vmatpush1.bf16.msra.mxu0 0
        %1818 = vmatprep.subr.bf16.mxu0 0
        %1819 = vmatpush1.bf16.msra.mxu0 0
        %1820 = vmatprep.subr.bf16.mxu0 0
        %1821 = vmatpush1.bf16.msra.mxu0 0
        %1822 = vmatprep.subr.bf16.mxu0 0
        %1823 = vmatpush1.bf16.msra.mxu0 0
        %1824 = vmatprep.subr.bf16.mxu0 0
        %1825 = vmatpush1.bf16.msra.mxu0 0
        %1826 = vmatprep.subr.bf16.mxu0 0
        %1827 = vmatpush1.bf16.msra.mxu0 0
        %1828 = vmatprep.subr.bf16.mxu0 0
        %1829 = vmatpush1.bf16.msra.mxu0 0
        %1830 = vmatprep.subr.bf16.mxu0 0
        %1831 = vmatpush1.bf16.msra.mxu0 0
        %1832 = vmatprep.subr.bf16.mxu0 0
        %1833 = vmatpush1.bf16.msra.mxu0 0
        %1834 = vmatprep.subr.bf16.mxu0 0
        %1835 = vmatpush1.bf16.msra.mxu0 0
        %1836 = vmatprep.subr.bf16.mxu0 0
        %1837 = vmatpush1.bf16.msra.mxu0 0
        %1838 = vmatprep.subr.bf16.mxu0 0
        %1839 = vmatpush1.bf16.msra.mxu0 0
        %1840 = vmatprep.subr.bf16.mxu0 0
        %1841 = vmatpush1.bf16.msra.mxu0 0
        %1842 = vmatprep.subr.bf16.mxu0 0
        %1843 = vmatpush1.bf16.msra.mxu0 0
        %1844 = vmatprep.mubr.bf16.mxu0 0
        %1845 = vmatmul.mubr.bf16.gmra.mrb[0].mxu0 %v1807
        %v1846 = vpop.f32.mrb[0].mxu0
        %v1847 = vadd.f32 0.0, %v1846
        %v1848 = vpop.f32.mrb[0].mxu0
        %v1849 = vpop.f32.mrb[0].mxu0
        %v1850 = vpop.f32.mrb[0].mxu0
        %1851 = vdwg.mxu0
        %s1852 = scalar_lea.vmem %s820, 48
        %v1853 = vld [vmem:[%s1852] sm:$0xf]
        %v1854 = vld [vmem:[%s1852 + $0x4] sm:$0xf]
        %v1855 = vld [vmem:[%s1852 + $0x8] sm:$0xf]
        %v1856 = vld [vmem:[%s1852 + $0xc] sm:$0xf]
        %s1857 = scalar_lea.vmem %s824, 3
        %v1858 = vld [vmem:[%s1857] sm:$0x1]
        %v1860 = vlaneseq
        %v1861 = vshrl.u32 %v1860, 7
        %v1862 = vsub.s32 0, %v1861
        %v1863 = vrot.slane %v1858, %v1862
        %v1869 = vunpack.c.l.b16 %v1853
        %v1870 = vunpack.c.l.b16 %v1854
        %v1871 = vunpack.c.l.b16 %v1855
        %v1872 = vunpack.c.l.b16 %v1856
        %v1873 = vpack.c.b16 %v1870, %v1869
        %v1874 = vpack.c.b16 %v1872, %v1871
        %1877 = vmatprep.subr.bf16.mxu0 0
        %1878 = vmatpush1.bf16.msra.mxu0 %v1873
        %1879 = vmatprep.subr.bf16.mxu0 0
        %1880 = vmatpush1.bf16.msra.mxu0 %v1874
        %1881 = vmatprep.subr.bf16.mxu0 0
        %1882 = vmatpush1.bf16.msra.mxu0 0
        %1883 = vmatprep.subr.bf16.mxu0 0
        %1884 = vmatpush1.bf16.msra.mxu0 0
        %1885 = vmatprep.subr.bf16.mxu0 0
        %1886 = vmatpush1.bf16.msra.mxu0 0
        %1887 = vmatprep.subr.bf16.mxu0 0
        %1888 = vmatpush1.bf16.msra.mxu0 0
        %1889 = vmatprep.subr.bf16.mxu0 0
        %1890 = vmatpush1.bf16.msra.mxu0 0
        %1891 = vmatprep.subr.bf16.mxu0 0
        %1892 = vmatpush1.bf16.msra.mxu0 0
        %1893 = vmatprep.subr.bf16.mxu0 0
        %1894 = vmatpush1.bf16.msra.mxu0 0
        %1895 = vmatprep.subr.bf16.mxu0 0
        %1896 = vmatpush1.bf16.msra.mxu0 0
        %1897 = vmatprep.subr.bf16.mxu0 0
        %1898 = vmatpush1.bf16.msra.mxu0 0
        %1899 = vmatprep.subr.bf16.mxu0 0
        %1900 = vmatpush1.bf16.msra.mxu0 0
        %1901 = vmatprep.subr.bf16.mxu0 0
        %1902 = vmatpush1.bf16.msra.mxu0 0
        %1903 = vmatprep.subr.bf16.mxu0 0
        %1904 = vmatpush1.bf16.msra.mxu0 0
        %1905 = vmatprep.subr.bf16.mxu0 0
        %1906 = vmatpush1.bf16.msra.mxu0 0
        %1907 = vmatprep.subr.bf16.mxu0 0
        %1908 = vmatpush1.bf16.msra.mxu0 0
        %1909 = vmatprep.mubr.bf16.mxu0 0
        %1910 = vmatmul.mubr.bf16.gmra.mrb[0].mxu0 %v971
        %v1911 = vpop.f32.mrb[0].mxu0
        %v1912 = vadd.f32 %v1863, %v1911
        %v1913 = vpop.f32.mrb[0].mxu0
        %v1914 = vpop.f32.mrb[0].mxu0
        %v1915 = vpop.f32.mrb[0].mxu0
        %1916 = vdwg.mxu0
        %s1917 = scalar_lea.vmem %s829, 48
        %v1918 = vld [vmem:[%s1917] sm:$0xf]
        %v1919 = vld [vmem:[%s1917 + $0x4] sm:$0xf]
        %v1920 = vld [vmem:[%s1917 + $0x8] sm:$0xf]
        %v1921 = vld [vmem:[%s1917 + $0xc] sm:$0xf]
        %s1922 = scalar_lea.vmem %s833, 3
        %v1923 = vld [vmem:[%s1922] sm:$0x1]
        %v1925 = vlaneseq
        %v1926 = vshrl.u32 %v1925, 7
        %v1927 = vsub.s32 0, %v1926
        %v1928 = vrot.slane %v1923, %v1927
        %v1934 = vunpack.c.l.b16 %v1918
        %v1935 = vunpack.c.l.b16 %v1919
        %v1936 = vunpack.c.l.b16 %v1920
        %v1937 = vunpack.c.l.b16 %v1921
        %v1938 = vpack.c.b16 %v1935, %v1934
        %v1939 = vpack.c.b16 %v1937, %v1936
        %1942 = vmatprep.subr.bf16.mxu0 0
        %1943 = vmatpush1.bf16.msra.mxu0 %v1938
        %1944 = vmatprep.subr.bf16.mxu0 0
        %1945 = vmatpush1.bf16.msra.mxu0 %v1939
        %1946 = vmatprep.subr.bf16.mxu0 0
        %1947 = vmatpush1.bf16.msra.mxu0 0
        %1948 = vmatprep.subr.bf16.mxu0 0
        %1949 = vmatpush1.bf16.msra.mxu0 0
        %1950 = vmatprep.subr.bf16.mxu0 0
        %1951 = vmatpush1.bf16.msra.mxu0 0
        %1952 = vmatprep.subr.bf16.mxu0 0
        %1953 = vmatpush1.bf16.msra.mxu0 0
        %1954 = vmatprep.subr.bf16.mxu0 0
        %1955 = vmatpush1.bf16.msra.mxu0 0
        %1956 = vmatprep.subr.bf16.mxu0 0
        %1957 = vmatpush1.bf16.msra.mxu0 0
        %1958 = vmatprep.subr.bf16.mxu0 0
        %1959 = vmatpush1.bf16.msra.mxu0 0
        %1960 = vmatprep.subr.bf16.mxu0 0
        %1961 = vmatpush1.bf16.msra.mxu0 0
        %1962 = vmatprep.subr.bf16.mxu0 0
        %1963 = vmatpush1.bf16.msra.mxu0 0
        %1964 = vmatprep.subr.bf16.mxu0 0
        %1965 = vmatpush1.bf16.msra.mxu0 0
        %1966 = vmatprep.subr.bf16.mxu0 0
        %1967 = vmatpush1.bf16.msra.mxu0 0
        %1968 = vmatprep.subr.bf16.mxu0 0
        %1969 = vmatpush1.bf16.msra.mxu0 0
        %1970 = vmatprep.subr.bf16.mxu0 0
        %1971 = vmatpush1.bf16.msra.mxu0 0
        %1972 = vmatprep.subr.bf16.mxu0 0
        %1973 = vmatpush1.bf16.msra.mxu0 0
        %1974 = vmatprep.mubr.bf16.mxu0 0
        %1975 = vmatmul.mubr.bf16.gmra.mrb[0].mxu0 %v971
        %v1976 = vpop.f32.mrb[0].mxu0
        %v1977 = vadd.f32 %v1928, %v1976
        %v1978 = vpop.f32.mrb[0].mxu0
        %v1979 = vpop.f32.mrb[0].mxu0
        %v1980 = vpop.f32.mrb[0].mxu0
        %1981 = vdwg.mxu0
        %s1982 = scalar_lea.vmem %s838, 48
        %v1983 = vld [vmem:[%s1982] sm:$0xf]
        %v1984 = vld [vmem:[%s1982 + $0x4] sm:$0xf]
        %v1985 = vld [vmem:[%s1982 + $0x8] sm:$0xf]
        %v1986 = vld [vmem:[%s1982 + $0xc] sm:$0xf]
        %s1987 = scalar_lea.vmem %s842, 3
        %v1988 = vld [vmem:[%s1987] sm:$0x1]
        %v1990 = vlaneseq
        %v1991 = vshrl.u32 %v1990, 7
        %v1992 = vsub.s32 0, %v1991
        %v1993 = vrot.slane %v1988, %v1992
        %v1999 = vunpack.c.l.b16 %v1983
        %v2000 = vunpack.c.l.b16 %v1984
        %v2001 = vunpack.c.l.b16 %v1985
        %v2002 = vunpack.c.l.b16 %v1986
        %v2003 = vpack.c.b16 %v2000, %v1999
        %v2004 = vpack.c.b16 %v2002, %v2001
        %2007 = vmatprep.subr.bf16.mxu0 0
        %2008 = vmatpush1.bf16.msra.mxu0 %v2003
        %2009 = vmatprep.subr.bf16.mxu0 0
        %2010 = vmatpush1.bf16.msra.mxu0 %v2004
        %2011 = vmatprep.subr.bf16.mxu0 0
        %2012 = vmatpush1.bf16.msra.mxu0 0
        %2013 = vmatprep.subr.bf16.mxu0 0
        %2014 = vmatpush1.bf16.msra.mxu0 0
        %2015 = vmatprep.subr.bf16.mxu0 0
        %2016 = vmatpush1.bf16.msra.mxu0 0
        %2017 = vmatprep.subr.bf16.mxu0 0
        %2018 = vmatpush1.bf16.msra.mxu0 0
        %2019 = vmatprep.subr.bf16.mxu0 0
        %2020 = vmatpush1.bf16.msra.mxu0 0
        %2021 = vmatprep.subr.bf16.mxu0 0
        %2022 = vmatpush1.bf16.msra.mxu0 0
        %2023 = vmatprep.subr.bf16.mxu0 0
        %2024 = vmatpush1.bf16.msra.mxu0 0
        %2025 = vmatprep.subr.bf16.mxu0 0
        %2026 = vmatpush1.bf16.msra.mxu0 0
        %2027 = vmatprep.subr.bf16.mxu0 0
        %2028 = vmatpush1.bf16.msra.mxu0 0
        %2029 = vmatprep.subr.bf16.mxu0 0
        %2030 = vmatpush1.bf16.msra.mxu0 0
        %2031 = vmatprep.subr.bf16.mxu0 0
        %2032 = vmatpush1.bf16.msra.mxu0 0
        %2033 = vmatprep.subr.bf16.mxu0 0
        %2034 = vmatpush1.bf16.msra.mxu0 0
        %2035 = vmatprep.subr.bf16.mxu0 0
        %2036 = vmatpush1.bf16.msra.mxu0 0
        %2037 = vmatprep.subr.bf16.mxu0 0
        %2038 = vmatpush1.bf16.msra.mxu0 0
        %2039 = vmatprep.mubr.bf16.mxu0 0
        %2040 = vmatmul.mubr.bf16.gmra.mrb[0].mxu0 %v971
        %v2041 = vpop.f32.mrb[0].mxu0
        %v2042 = vadd.f32 %v1993, %v2041
        %v2043 = vpop.f32.mrb[0].mxu0
        %v2044 = vpop.f32.mrb[0].mxu0
        %v2045 = vpop.f32.mrb[0].mxu0
        %2046 = vdwg.mxu0
        %v2047 = vpack.c.bf16 %v1912, %v1912
        %v2048 = vpack.c.bf16 %v1977, %v1977
        %v2050 = vsel %vm1141, %v2047, 0
        %v2053 = vsel %vm1141, %v2048, 0
        %2055 = vmatprep.subr.bf16.mxu0 0
        %2056 = vmatpush1.bf16.xpose.msra.mxu0 %v2053
        %2057 = vmatprep.subr.bf16.mxu0 0
        %2058 = vmatpush1.bf16.xpose.msra.mxu0 0
        %2059 = vmatprep.subr.bf16.mxu0 0
        %2060 = vmatpush1.bf16.xpose.msra.mxu0 0
        %2061 = vmatprep.subr.bf16.mxu0 0
        %2062 = vmatpush1.bf16.xpose.msra.mxu0 0
        %2063 = vmatprep.subr.bf16.mxu0 0
        %2064 = vmatpush1.bf16.xpose.msra.mxu0 0
        %2065 = vmatprep.subr.bf16.mxu0 0
        %2066 = vmatpush1.bf16.xpose.msra.mxu0 0
        %2067 = vmatprep.subr.bf16.mxu0 0
        %2068 = vmatpush1.bf16.xpose.msra.mxu0 0
        %2069 = vmatprep.subr.bf16.mxu0 0
        %2070 = vmatpush1.bf16.xpose.msra.mxu0 0
        %2071 = vmatprep.subr.bf16.mxu0 0
        %2072 = vmatpush1.bf16.xpose.msra.mxu0 0
        %2073 = vmatprep.subr.bf16.mxu0 0
        %2074 = vmatpush1.bf16.xpose.msra.mxu0 0
        %2075 = vmatprep.subr.bf16.mxu0 0
        %2076 = vmatpush1.bf16.xpose.msra.mxu0 0
        %2077 = vmatprep.subr.bf16.mxu0 0
        %2078 = vmatpush1.bf16.xpose.msra.mxu0 0
        %2079 = vmatprep.subr.bf16.mxu0 0
        %2080 = vmatpush1.bf16.xpose.msra.mxu0 0
        %2081 = vmatprep.subr.bf16.mxu0 0
        %2082 = vmatpush1.bf16.xpose.msra.mxu0 0
        %2083 = vmatprep.subr.bf16.mxu0 0
        %2084 = vmatpush1.bf16.xpose.msra.mxu0 0
        %2085 = vmatprep.subr.bf16.mxu0 0
        %2086 = vmatpush1.bf16.xpose.msra.mxu0 0
        %2087 = vmatprep.mubr.bf16.mxu0 0
        %2088 = vmatmul.mubr.bf16.gmra.mrb[0].mxu0 %v2050
        %v2089 = vpop.f32.mrb[0].mxu0
        %v2090 = vadd.f32 0.0, %v2089
        %v2091 = vpop.f32.mrb[0].mxu0
        %v2092 = vpop.f32.mrb[0].mxu0
        %v2093 = vpop.f32.mrb[0].mxu0
        %2094 = vdwg.mxu0
        %v2095 = vsel %vm1141, %v2090, -inf
        %2096 = vmax.xlane.f32.xlu0 %v2095
        %v2097 = vpop.xlane.xlu0 %2096
        %v2098 = vsub.f32 %v2090, %v2097
        %v2099 = vmul.f32 %v2098, 1.442695
        %v2100 = vpow.pop %v2099
        %v2101 = vsel %vm1141, %v2100, 0.0
        %2102 = vadd.xlane.f32.xlu0 %v2101
        %v2103 = vpop.xlane.xlu0 %2102
        %v2104 = vrcp.pop %v2103
        %v2105 = vmul.f32 %v2100, %v2104
        %v2106 = vpack.c.bf16 %v2105, %v2105
        %v2107 = vpack.c.bf16 %v2042, %v2042
        %v2109 = vsel %vm1141, %v2106, 0
        %v2112 = vsel %vm1204, %v2107, 0
        %2114 = vmatprep.subr.bf16.mxu0 0
        %2115 = vmatpush1.bf16.msra.mxu0 %v2112
        %2116 = vmatprep.subr.bf16.mxu0 0
        %2117 = vmatpush1.bf16.msra.mxu0 0
        %2118 = vmatprep.subr.bf16.mxu0 0
        %2119 = vmatpush1.bf16.msra.mxu0 0
        %2120 = vmatprep.subr.bf16.mxu0 0
        %2121 = vmatpush1.bf16.msra.mxu0 0
        %2122 = vmatprep.subr.bf16.mxu0 0
        %2123 = vmatpush1.bf16.msra.mxu0 0
        %2124 = vmatprep.subr.bf16.mxu0 0
        %2125 = vmatpush1.bf16.msra.mxu0 0
        %2126 = vmatprep.subr.bf16.mxu0 0
        %2127 = vmatpush1.bf16.msra.mxu0 0
        %2128 = vmatprep.subr.bf16.mxu0 0
        %2129 = vmatpush1.bf16.msra.mxu0 0
        %2130 = vmatprep.subr.bf16.mxu0 0
        %2131 = vmatpush1.bf16.msra.mxu0 0
        %2132 = vmatprep.subr.bf16.mxu0 0
        %2133 = vmatpush1.bf16.msra.mxu0 0
        %2134 = vmatprep.subr.bf16.mxu0 0
        %2135 = vmatpush1.bf16.msra.mxu0 0
        %2136 = vmatprep.subr.bf16.mxu0 0
        %2137 = vmatpush1.bf16.msra.mxu0 0
        %2138 = vmatprep.subr.bf16.mxu0 0
        %2139 = vmatpush1.bf16.msra.mxu0 0
        %2140 = vmatprep.subr.bf16.mxu0 0
        %2141 = vmatpush1.bf16.msra.mxu0 0
        %2142 = vmatprep.subr.bf16.mxu0 0
        %2143 = vmatpush1.bf16.msra.mxu0 0
        %2144 = vmatprep.subr.bf16.mxu0 0
        %2145 = vmatpush1.bf16.msra.mxu0 0
        %2146 = vmatprep.mubr.bf16.mxu0 0
        %2147 = vmatmul.mubr.bf16.gmra.mrb[0].mxu0 %v2109
        %v2148 = vpop.f32.mrb[0].mxu0
        %v2149 = vadd.f32 0.0, %v2148
        %v2150 = vpop.f32.mrb[0].mxu0
        %v2151 = vpop.f32.mrb[0].mxu0
        %v2152 = vpop.f32.mrb[0].mxu0
        %2153 = vdwg.mxu0
        %2155 = vrot.lane.b32.xlu0 %v1545, 8
        %v2156 = vpop.permute.xlu0 %2155
        %2159 = vrot.lane.b32.xlu0 %v1847, 16
        %v2160 = vpop.permute.xlu0 %2159
        %2163 = vrot.lane.b32.xlu0 %v2149, 24
        %v2164 = vpop.permute.xlu0 %2163
        %v2166 = vsel %vm1141, %v1243, %v2156
        %vm2167 = vcmask 130048
        %v2168 = vsel %vm2167, %v2166, %v2160
        %vm2169 = vcmask 195584
        %v2170 = vsel %vm2169, %v2168, %v2164
        %v2171 = vpack.c.bf16 %v2170, %v2170
        %v2172 = vld [vmem:[%s847] sm:$0xf]
        %v2173 = vld [vmem:[%s847 + $0x4] sm:$0xf]
        %v2174 = vld [vmem:[%s847 + $0x8] sm:$0xf]
        %v2175 = vld [vmem:[%s847 + $0xc] sm:$0xf]
        %v2176 = vld [vmem:[%s850] sm:$0x1]
        %v2178 = vlaneseq
        %v2179 = vshrl.u32 %v2178, 7
        %v2180 = vsub.s32 0, %v2179
        %v2181 = vrot.slane %v2176, %v2180
        %v2187 = vunpack.c.l.b16 %v2172
        %v2188 = vunpack.c.l.b16 %v2173
        %v2189 = vunpack.c.l.b16 %v2174
        %v2190 = vunpack.c.l.b16 %v2175
        %v2191 = vpack.c.b16 %v2188, %v2187
        %v2192 = vpack.c.b16 %v2190, %v2189
        %v2196 = vsel %vm969, %v2171, 0
        %2198 = vmatprep.subr.bf16.mxu0 0
        %2199 = vmatpush1.bf16.msra.mxu0 %v2191
        %2200 = vmatprep.subr.bf16.mxu0 0
        %2201 = vmatpush1.bf16.msra.mxu0 %v2192
        %2202 = vmatprep.subr.bf16.mxu0 0
        %2203 = vmatpush1.bf16.msra.mxu0 0
        %2204 = vmatprep.subr.bf16.mxu0 0
        %2205 = vmatpush1.bf16.msra.mxu0 0
        %2206 = vmatprep.subr.bf16.mxu0 0
        %2207 = vmatpush1.bf16.msra.mxu0 0
        %2208 = vmatprep.subr.bf16.mxu0 0
        %2209 = vmatpush1.bf16.msra.mxu0 0
        %2210 = vmatprep.subr.bf16.mxu0 0
        %2211 = vmatpush1.bf16.msra.mxu0 0
        %2212 = vmatprep.subr.bf16.mxu0 0
        %2213 = vmatpush1.bf16.msra.mxu0 0
        %2214 = vmatprep.subr.bf16.mxu0 0
        %2215 = vmatpush1.bf16.msra.mxu0 0
        %2216 = vmatprep.subr.bf16.mxu0 0
        %2217 = vmatpush1.bf16.msra.mxu0 0
        %2218 = vmatprep.subr.bf16.mxu0 0
        %2219 = vmatpush1.bf16.msra.mxu0 0
        %2220 = vmatprep.subr.bf16.mxu0 0
        %2221 = vmatpush1.bf16.msra.mxu0 0
        %2222 = vmatprep.subr.bf16.mxu0 0
        %2223 = vmatpush1.bf16.msra.mxu0 0
        %2224 = vmatprep.subr.bf16.mxu0 0
        %2225 = vmatpush1.bf16.msra.mxu0 0
        %2226 = vmatprep.subr.bf16.mxu0 0
        %2227 = vmatpush1.bf16.msra.mxu0 0
        %2228 = vmatprep.subr.bf16.mxu0 0
        %2229 = vmatpush1.bf16.msra.mxu0 0
        %2230 = vmatprep.mubr.bf16.mxu0 0
        %2231 = vmatmul.mubr.bf16.gmra.mrb[0].mxu0 %v2196
        %v2232 = vpop.f32.mrb[0].mxu0
        %v2233 = vadd.f32 %v2181, %v2232
        %v2234 = vpop.f32.mrb[0].mxu0
        %v2235 = vpop.f32.mrb[0].mxu0
        %v2236 = vpop.f32.mrb[0].mxu0
        %2237 = vdwg.mxu0
        %v2238 = vadd.f32 %v944, %v2233
        %v2239 = vld [vmem:[%s853] sm:$0x1]
        %v2240 = vld [vmem:[%s856] sm:$0x1]
        %v2241 = vsel %vm969, %v2238, 0.0
        %2242 = vadd.xlane.f32.xlu0 %v2241
        %v2243 = vpop.xlane.xlu0 %2242
        %v2244 = vrcp.pop 32.0
        %v2245 = vmul.f32 %v2243, %v2244
        %v2246 = vsub.f32 %v2238, %v2245
        %v2247 = vmul.f32 %v2246, %v2246
        %v2248 = vsel %vm969, %v2247, 0.0
        %2249 = vadd.xlane.f32.xlu0 %v2248
        %v2250 = vpop.xlane.xlu0 %2249
        %v2251 = vmul.f32 %v2250, %v2244
        %v2252 = vadd.f32 %v2251, 1e-05
        %v2253 = vrsqrt.pop %v2252
        %v2254 = vmul.f32 %v2246, %v2253
        %v2256 = vlaneseq
        %v2257 = vshrl.u32 %v2256, 7
        %v2258 = vsub.s32 0, %v2257
        %v2259 = vrot.slane %v2239, %v2258
        %v2261 = vmul.f32 %v2254, %v2259
        %v2263 = vlaneseq
        %v2264 = vshrl.u32 %v2263, 7
        %v2265 = vsub.s32 0, %v2264
        %v2266 = vrot.slane %v2240, %v2265
        %v2268 = vadd.f32 %v2261, %v2266
        %v2269 = vpack.c.bf16 %v2268, %v2268
        %v2270 = vld [vmem:[%s867] sm:$0xf]
        %v2271 = vld [vmem:[%s867 + $0x4] sm:$0xf]
        %v2272 = vld [vmem:[%s867 + $0x8] sm:$0xf]
        %v2273 = vld [vmem:[%s867 + $0xc] sm:$0xf]
        %v2274 = vld [vmem:[%s870] sm:$0x1]
        %v2276 = vlaneseq
        %v2277 = vshrl.u32 %v2276, 7
        %v2278 = vsub.s32 0, %v2277
        %v2279 = vrot.slane %v2274, %v2278
        %v2285 = vunpack.c.l.b16 %v2270
        %v2286 = vunpack.c.l.b16 %v2271
        %v2287 = vunpack.c.l.b16 %v2272
        %v2288 = vunpack.c.l.b16 %v2273
        %v2289 = vpack.c.b16 %v2286, %v2285
        %v2290 = vpack.c.b16 %v2288, %v2287
        %v2294 = vsel %vm969, %v2269, 0
        %2296 = vmatprep.subr.bf16.mxu0 0
        %2297 = vmatpush1.bf16.msra.mxu0 %v2289
        %2298 = vmatprep.subr.bf16.mxu0 0
        %2299 = vmatpush1.bf16.msra.mxu0 %v2290
        %2300 = vmatprep.subr.bf16.mxu0 0
        %2301 = vmatpush1.bf16.msra.mxu0 0
        %2302 = vmatprep.subr.bf16.mxu0 0
        %2303 = vmatpush1.bf16.msra.mxu0 0
        %2304 = vmatprep.subr.bf16.mxu0 0
        %2305 = vmatpush1.bf16.msra.mxu0 0
        %2306 = vmatprep.subr.bf16.mxu0 0
        %2307 = vmatpush1.bf16.msra.mxu0 0
        %2308 = vmatprep.subr.bf16.mxu0 0
        %2309 = vmatpush1.bf16.msra.mxu0 0
        %2310 = vmatprep.subr.bf16.mxu0 0
        %2311 = vmatpush1.bf16.msra.mxu0 0
        %2312 = vmatprep.subr.bf16.mxu0 0
        %2313 = vmatpush1.bf16.msra.mxu0 0
        %2314 = vmatprep.subr.bf16.mxu0 0
        %2315 = vmatpush1.bf16.msra.mxu0 0
        %2316 = vmatprep.subr.bf16.mxu0 0
        %2317 = vmatpush1.bf16.msra.mxu0 0
        %2318 = vmatprep.subr.bf16.mxu0 0
        %2319 = vmatpush1.bf16.msra.mxu0 0
        %2320 = vmatprep.subr.bf16.mxu0 0
        %2321 = vmatpush1.bf16.msra.mxu0 0
        %2322 = vmatprep.subr.bf16.mxu0 0
        %2323 = vmatpush1.bf16.msra.mxu0 0
        %2324 = vmatprep.subr.bf16.mxu0 0
        %2325 = vmatpush1.bf16.msra.mxu0 0
        %2326 = vmatprep.subr.bf16.mxu0 0
        %2327 = vmatpush1.bf16.msra.mxu0 0
        %2328 = vmatprep.mubr.bf16.mxu0 0
        %2329 = vmatmul.mubr.bf16.gmra.mrb[0].mxu0 %v2294
        %v2330 = vpop.f32.mrb[0].mxu0
        %v2331 = vadd.f32 %v2279, %v2330
        %v2332 = vpop.f32.mrb[0].mxu0
        %v2333 = vpop.f32.mrb[0].mxu0
        %v2334 = vpop.f32.mrb[0].mxu0
        %2335 = vdwg.mxu0
        %v2336 = vmax.f32 %v2331, 0.0
        %v2337 = vpack.c.bf16 %v2336, %v2336
        %v2338 = vld [vmem:[%s875] sm:$0xf]
        %v2339 = vld [vmem:[%s875 + $0x4] sm:$0xf]
        %v2340 = vld [vmem:[%s875 + $0x8] sm:$0xf]
        %v2341 = vld [vmem:[%s875 + $0xc] sm:$0xf]
        %v2342 = vld [vmem:[%s875 + $0x10] sm:$0xf]
        %v2343 = vld [vmem:[%s875 + $0x14] sm:$0xf]
        %v2344 = vld [vmem:[%s875 + $0x18] sm:$0xf]
        %v2345 = vld [vmem:[%s875 + $0x1c] sm:$0xf]
        %v2346 = vld [vmem:[%s878] sm:$0x1]
        %v2348 = vlaneseq
        %v2349 = vshrl.u32 %v2348, 7
        %v2350 = vsub.s32 0, %v2349
        %v2351 = vrot.slane %v2346, %v2350
        %v2361 = vunpack.c.l.b16 %v2338
        %v2362 = vunpack.c.l.b16 %v2339
        %v2363 = vunpack.c.l.b16 %v2340
        %v2364 = vunpack.c.l.b16 %v2341
        %v2365 = vunpack.c.l.b16 %v2342
        %v2366 = vunpack.c.l.b16 %v2343
        %v2367 = vunpack.c.l.b16 %v2344
        %v2368 = vunpack.c.l.b16 %v2345
        %v2369 = vpack.c.b16 %v2362, %v2361
        %v2370 = vpack.c.b16 %v2364, %v2363
        %v2371 = vpack.c.b16 %v2366, %v2365
        %v2372 = vpack.c.b16 %v2368, %v2367
        %vm2377 = vcmask 523264
        %v2379 = vsel %vm2377, %v2337, 0
        %2381 = vmatprep.subr.bf16.mxu0 0
        %2382 = vmatpush1.bf16.msra.mxu0 %v2369
        %2383 = vmatprep.subr.bf16.mxu0 0
        %2384 = vmatpush1.bf16.msra.mxu0 %v2370
        %2385 = vmatprep.subr.bf16.mxu0 0
        %2386 = vmatpush1.bf16.msra.mxu0 %v2371
        %2387 = vmatprep.subr.bf16.mxu0 0
        %2388 = vmatpush1.bf16.msra.mxu0 %v2372
        %2389 = vmatprep.subr.bf16.mxu0 0
        %2390 = vmatpush1.bf16.msra.mxu0 0
        %2391 = vmatprep.subr.bf16.mxu0 0
        %2392 = vmatpush1.bf16.msra.mxu0 0
        %2393 = vmatprep.subr.bf16.mxu0 0
        %2394 = vmatpush1.bf16.msra.mxu0 0
        %2395 = vmatprep.subr.bf16.mxu0 0
        %2396 = vmatpush1.bf16.msra.mxu0 0
        %2397 = vmatprep.subr.bf16.mxu0 0
        %2398 = vmatpush1.bf16.msra.mxu0 0
        %2399 = vmatprep.subr.bf16.mxu0 0
        %2400 = vmatpush1.bf16.msra.mxu0 0
        %2401 = vmatprep.subr.bf16.mxu0 0
        %2402 = vmatpush1.bf16.msra.mxu0 0
        %2403 = vmatprep.subr.bf16.mxu0 0
        %2404 = vmatpush1.bf16.msra.mxu0 0
        %2405 = vmatprep.subr.bf16.mxu0 0
        %2406 = vmatpush1.bf16.msra.mxu0 0
        %2407 = vmatprep.subr.bf16.mxu0 0
        %2408 = vmatpush1.bf16.msra.mxu0 0
        %2409 = vmatprep.subr.bf16.mxu0 0
        %2410 = vmatpush1.bf16.msra.mxu0 0
        %2411 = vmatprep.subr.bf16.mxu0 0
        %2412 = vmatpush1.bf16.msra.mxu0 0
        %2413 = vmatprep.mubr.bf16.mxu0 0
        %2414 = vmatmul.mubr.bf16.gmra.mrb[0].mxu0 %v2379
        %v2415 = vpop.f32.mrb[0].mxu0
        %v2416 = vadd.f32 %v2351, %v2415
        %v2417 = vpop.f32.mrb[0].mxu0
        %v2418 = vpop.f32.mrb[0].mxu0
        %v2419 = vpop.f32.mrb[0].mxu0
        %2420 = vdwg.mxu0
        %v2421 = vadd.f32 %v2268, %v2416
        %v2422 = vld [vmem:[%s859] sm:$0x1]
        %v2423 = vld [vmem:[%s862] sm:$0x1]
        %v2424 = vsel %vm969, %v2421, 0.0
        %2425 = vadd.xlane.f32.xlu0 %v2424
        %v2426 = vpop.xlane.xlu0 %2425
        %v2427 = vmul.f32 %v2426, %v2244
        %v2428 = vsub.f32 %v2421, %v2427
        %v2429 = vmul.f32 %v2428, %v2428
        %v2430 = vsel %vm969, %v2429, 0.0
        %2431 = vadd.xlane.f32.xlu0 %v2430
        %v2432 = vpop.xlane.xlu0 %2431
        %v2433 = vmul.f32 %v2432, %v2244
        %v2434 = vadd.f32 %v2433, 1e-05
        %v2435 = vrsqrt.pop %v2434
        %v2436 = vmul.f32 %v2428, %v2435
        %v2438 = vlaneseq
        %v2439 = vshrl.u32 %v2438, 7
        %v2440 = vsub.s32 0, %v2439
        %v2441 = vrot.slane %v2422, %v2440
        %v2443 = vmul.f32 %v2436, %v2441
        %v2445 = vlaneseq
        %v2446 = vshrl.u32 %v2445, 7
        %v2447 = vsub.s32 0, %v2446
        %v2448 = vrot.slane %v2423, %v2447
        %v2450 = vadd.f32 %v2443, %v2448
        %2451 = vst.msk [vmem:[#allocation2] sm:$0xff] %vm969, %v2450
        %p2452 = scmp.eq.s32.totalorder %s38, 1
        // Predicated region
        $region101: #{tpu_custom_call.1} parent=95 // pred_check
          %p2453 = pneg %p2452
        $region102: #{tpu_custom_call.1} parent=95 // pred_check_branch
          %2455 = sbr.rel (%p2453) target = $region104
        $region103: #{tpu_custom_call.1} parent=95 // pred_region
          %2456 = vst.msk [vmem:[%s811] sm:$0xff] %vm969, %v2450
        $region104: #{tpu_custom_call.1} parent=95 // pred_fallthru
          _
        %s2457 = sand.u32 %s537, 1
        %s2458 = scalar_lea.sflag [#allocation4], %s2457
        %s2459 = sand.u32 %s537, 1
        %s2460 = smul.addr %s2459, 8
        %s2461 = scalar_lea.vmem [#allocation3], %s2460
        // Predicated region
        $region105: #{tpu_custom_call.1} parent=95 // pred_check
          %p2462 = pneg %p547
        $region106: #{tpu_custom_call.1} parent=95 // pred_check_branch
          %2464 = sbr.rel (%p2462) target = $region108
        $region107: #{tpu_custom_call.1} parent=95 // pred_region
          %s2466 = ssub.s32 128, 128
          %2467 = vsyncadd %s2458, %s2466
          %s2468 = smul.addr %s37, 128
          %s2469 = scalar_lea.hbm %s19, %s2468
          %s2471 = sshll.u32 %s2461, 4
          %s2472 = int_to_ptr.vmem [resolvable:$true] %s2471
          %2474 = dma.vmem_to_hbm [thread:$0]  %s2472, 128, %s2469, %s2458
        $region108: #{tpu_custom_call.1} parent=95 // pred_fallthru
          _
      $region96: #{tpu_custom_call.1} parent=5 // pred_fallthru
        _
      %p2475 = scmp.le.s32.totalorder 2, %s28
      // Predicated region
      $region109: #{tpu_custom_call.1} parent=5 // pred_check
        %p2476 = pneg %p2475
      $region110: #{tpu_custom_call.1} parent=5 // pred_check_branch
        %2478 = sbr.rel (%p2476) target = $region112
      $region111: #{tpu_custom_call.1} parent=5 // pred_region
        %s2479 = ssub.s32 %s28, 2
        // Predicated region
        $region113: #{tpu_custom_call.1} parent=111 // pred_check
          %p2480 = pneg %p553
        $region114: #{tpu_custom_call.1} parent=111 // pred_check_branch
          %2482 = sbr.rel (%p2480) target = $region116
        $region115: #{tpu_custom_call.1} parent=111 // pred_region
          %s2483 = sand.u32 %s538, 1
          %s2484 = scalar_lea.sflag [#allocation4], %s2483
          %s2485 = sand.u32 %s538, 1
          %s2486 = smul.addr %s2485, 8
          %s2487 = scalar_lea.vmem [#allocation3], %s2486
          %2488 = dma.done %s2484, 128
        $region116: #{tpu_custom_call.1} parent=111 // pred_fallthru
          _
      $region112: #{tpu_custom_call.1} parent=5 // pred_fallthru
        _
    $region6: #{tpu_custom_call.1} parent=1 // loop_footer
      %s32 = sadd.s32 1, %s28
    $region7: #{tpu_custom_call.1} parent=1 // loop_footer_branch
      %27 = sbr.rel target = $region3
    $region8: #{tpu_custom_call.1} parent=1 // loop_exit
      _
    %2489 = vsyncpa [#allocation4], 1
    %s2490 = scalar_lea.sflag [#allocation4], 1
    %2491 = vsyncpa %s2490, 1

</llo_original>
